<compile_context>
chip_gen: v6e
topology: v6e:2x2x1
jax: 0.10.0
libtpu: 0.0.40
codegen_flags: <defaults>
</compile_context>

<pallas_src>
import functools

import numpy as np

import jax
import jax.numpy as jnp
from jax.experimental import pallas as pl
from jax.experimental.pallas import tpu as pltpu


# ----------------------------------------------------------------------------
# Fused Pallas kernel: conv1 + BN + ReLU + maxpool + conv2 + leaky_relu
#                      + flatten + fc1 + ReLU + fc2
# ----------------------------------------------------------------------------
def _fused_cnn_kernel(
    x_ref,      # [N*Hp, Wp*C0]    padded NHWC input, row=(n,hp), col=(wp,ci)
    a1_ref,     # [3, N*H, N*Hp]   conv1 H-tap row selectors
    w1_ref,     # [3, Wp*C0, W*C1] conv1 block-Toeplitz weights (W taps + pad)
    b1_ref,     # [1, W*C1]
    gam_ref,    # [1, W*C1]
    bet_ref,    # [1, W*C1]
    p_ref,      # [W*C1, W*C1]     1 iff same channel (BN reduce/broadcast)
    tw_ref,     # [W*C1, W*C1]     lane shift by C1  (maxpool W-pair)
    th_ref,     # [N*H, N*H]       row shift by 1    (maxpool H-pair)
    r2_ref,     # [3, N*H2, N*H]   conv2 H-tap selectors (pool-H compaction + pad)
    w2_ref,     # [3, W*C1, W2*C2] conv2 block-Toeplitz weights (pool-W compaction + pad)
    b2_ref,     # [1, W2*C2]
    sel_ref,    # [H2, N, N*H2]    per-h row selectors for the flatten/fc1 fold
    w3_ref,     # [H2, W2*C2, F1]  fc1 weights with NCHW flatten order folded in
    b3_ref,     # [1, F1]
    w4_ref,     # [F1, F2]
    b4_ref,     # [1, F2]
    out_ref,    # [N, F2]
    *, bn_count, bn_eps, lrelu_slope,
):
    f32 = jnp.float32
    dot = functools.partial(jnp.dot, preferred_element_type=f32)

    x2d = x_ref[...].astype(f32)

    # ---- conv1 (3x3, pad 1): 3 H-tap matmuls; W taps/padding live in w1 ----
    c1 = jnp.zeros((a1_ref.shape[1], w1_ref.shape[2]), f32)
    for kh in range(a1_ref.shape[0]):
        rows = dot(a1_ref[kh], x2d)            # [N*H, Wp*C0]
        c1 = c1 + dot(rows, w1_ref[kh])        # [N*H, W*C1]
    c1 = c1 + b1_ref[...]

    # ---- BatchNorm2d (training-mode batch stats, biased var) + ReLU ----
    s1 = jnp.sum(c1, axis=0, keepdims=True)            # [1, W*C1]
    s2 = jnp.sum(c1 * c1, axis=0, keepdims=True)       # [1, W*C1]
    inv_cnt = 1.0 / bn_count
    mean = dot(s1, p_ref[...]) * inv_cnt               # per-channel, tiled over w
    ex2 = dot(s2, p_ref[...]) * inv_cnt
    var = ex2 - mean * mean
    y1 = (c1 - mean) * (jax.lax.rsqrt(var + bn_eps) * gam_ref[...]) + bet_ref[...]
    y1 = jnp.maximum(y1, 0.0)                          # [N*H, W*C1]

    # ---- MaxPool 2x2 s2: shift-and-max; stride-2 compaction folded into conv2 ----
    m = jnp.maximum(y1, dot(y1, tw_ref[...]))          # pair-max along W
    m = jnp.maximum(m, dot(th_ref[...], m))            # pair-max along H

    # ---- conv2 (3x3, pad 1) + LeakyReLU(slope) ----
    c2 = jnp.zeros((r2_ref.shape[1], w2_ref.shape[2]), f32)
    for kh in range(r2_ref.shape[0]):
        rows = dot(r2_ref[kh], m)                      # [N*H2, W*C1]
        c2 = c2 + dot(rows, w2_ref[kh])                # [N*H2, W2*C2]
    c2 = c2 + b2_ref[...]
    y2 = jnp.where(c2 > 0, c2, lrelu_slope * c2)

    # ---- flatten (PyTorch NCHW order, folded into w3) + fc1 + ReLU ----
    f1 = jnp.zeros((sel_ref.shape[1], w3_ref.shape[2]), f32)
    for h in range(sel_ref.shape[0]):
        rows = dot(sel_ref[h], y2)                     # [N, W2*C2]
        f1 = f1 + dot(rows, w3_ref[h])                 # [N, F1]
    f1 = jnp.maximum(f1 + b3_ref[...], 0.0)

    # ---- fc2 ----
    out = dot(f1, w4_ref[...]) + b4_ref[...]
    out_ref[...] = out.astype(out_ref.dtype)


_VMEM = pl.BlockSpec(memory_space=pltpu.MemorySpace.VMEM)

_PACKED_ORDER = ("a1", "w1k", "b1g", "gammag", "betag", "pmat", "tw", "th",
                 "r2", "w2k", "b2g", "sel", "w3r", "b3r", "w4p", "b4r")


# ----------------------------------------------------------------------------
# Parameter init (PyTorch-style uniform(-1/sqrt(fan_in), +1/sqrt(fan_in)))
# ----------------------------------------------------------------------------
def init_params(key):
    ks = jax.random.split(key, 8)

    def u(k, shape, fan_in):
        b = 1.0 / float(np.sqrt(fan_in))
        return jax.random.uniform(k, shape, jnp.float32, -b, b)

    return {
        "w1": u(ks[0], (8, 4, 3, 3), 4 * 3 * 3),
        "b1": u(ks[1], (8,), 4 * 3 * 3),
        "gamma": jnp.ones((8,), jnp.float32),
        "beta": jnp.zeros((8,), jnp.float32),
        "w2": u(ks[2], (16, 8, 3, 3), 8 * 3 * 3),
        "b2": u(ks[3], (16,), 8 * 3 * 3),
        "w3": u(ks[4], (32, 1024), 1024),
        "b3": u(ks[5], (32,), 1024),
        "w4": u(ks[6], (10, 32), 32),
        "b4": u(ks[7], (10,), 32),
    }


# ----------------------------------------------------------------------------
# One-time packing of weights into the fused-kernel matrices (host / numpy).
# ----------------------------------------------------------------------------
def prepare_packed_params(params, batch):
    n = batch
    H = W = 16
    C0, C1 = 4, 8            # conv1: 4 -> 8 on 16x16
    Hp, Wp = H + 2, W + 2
    H2 = W2 = 8
    C2 = 16                  # conv2: 8 -> 16 on 8x8 (after pool)
    F1, F2 = 32, 10

    w1 = np.asarray(params["w1"], np.float32)      # [C1, C0, 3, 3]
    b1 = np.asarray(params["b1"], np.float32)
    gamma = np.asarray(params["gamma"], np.float32)
    beta = np.asarray(params["beta"], np.float32)
    w2 = np.asarray(params["w2"], np.float32)      # [C2, C1, 3, 3]
    b2 = np.asarray(params["b2"], np.float32)
    w3 = np.asarray(params["w3"], np.float32)      # [F1, C2*H2*W2]
    b3 = np.asarray(params["b3"], np.float32)
    w4 = np.asarray(params["w4"], np.float32)      # [F2, F1]
    b4 = np.asarray(params["b4"], np.float32)

    # conv1 H-tap row selectors: output row (n,h) <- padded input row (n, h+kh)
    a1 = np.zeros((3, n * H, n * Hp), np.float32)
    for kh in range(3):
        for i in range(n):
            for h in range(H):
                a1[kh, i * H + h, i * Hp + h + kh] = 1.0

    # conv1 block-Toeplitz weights over W: [(wp,ci) -> (w,co)]
    w1k = np.zeros((3, Wp * C0, W * C1), np.float32)
    for kh in range(3):
        for kw in range(3):
            wt = w1[:, :, kh, kw].T                 # [C0, C1]
            for w in range(W):
                w1k[kh, (w + kw) * C0:(w + kw + 1) * C0, w * C1:(w + 1) * C1] = wt

    b1g = np.tile(b1, W).reshape(1, W * C1)
    gammag = np.tile(gamma, W).reshape(1, W * C1)
    betag = np.tile(beta, W).reshape(1, W * C1)

    # BN per-channel reduce/broadcast: 1 iff same channel (lane % C1)
    pmat = np.tile(np.eye(C1, dtype=np.float32), (W, W))

    # maxpool shift matrices: (y @ tw)[:, j] = y[:, j + C1]; (th @ y)[i, :] = y[i + 1, :]
    tw = np.eye(W * C1, k=-C1, dtype=np.float32)
    th = np.eye(n * H, k=1, dtype=np.float32)

    # conv2 H-tap selectors: fold H zero-padding + pool H (stride-2) compaction
    r2 = np.zeros((3, n * H2, n * H), np.float32)
    for kh in range(3):
        for i in range(n):
            for h in range(H2):
                hs = h + kh - 1                      # source pooled h
                if 0 <= hs < H2:
                    r2[kh, i * H2 + h, i * H + 2 * hs] = 1.0

    # conv2 block-Toeplitz weights: rows index m2 columns (2*ws*C1 + ci),
    # cols index (w*C2 + co); folds pool W compaction + W zero-padding.
    w2k = np.zeros((3, W * C1, W2 * C2), np.float32)
    for kh in range(3):
        for kw in range(3):
            wt = w2[:, :, kh, kw].T                  # [C1, C2]
            for w in range(W2):
                ws = w + kw - 1                      # source pooled w
                if 0 <= ws < W2:
                    w2k[kh, 2 * ws * C1:(2 * ws + 1) * C1, w * C2:(w + 1) * C2] = wt

    b2g = np.tile(b2, W2).reshape(1, W2 * C2)

    # fc1 with PyTorch NCHW flatten folded in:
    #   w3r[h, w*C2 + c, j] = w3[j, c*H2*W2 + h*W2 + w]
    w3v = w3.reshape(F1, C2, H2, W2)
    w3r = np.zeros((H2, W2 * C2, F1), np.float32)
    for h in range(H2):
        for w in range(W2):
            w3r[h, w * C2:(w + 1) * C2, :] = w3v[:, :, h, w].T   # [C2, F1]

    # per-h row selectors for the flatten/fc1 fold
    sel = np.zeros((H2, n, n * H2), np.float32)
    for h in range(H2):
        for i in range(n):
            sel[h, i, i * H2 + h] = 1.0

    packed = dict(
        a1=a1, w1k=w1k, b1g=b1g, gammag=gammag, betag=betag, pmat=pmat,
        tw=tw, th=th, r2=r2, w2k=w2k, b2g=b2g, sel=sel, w3r=w3r,
        b3r=b3.reshape(1, F1), w4p=w4.T.copy(), b4r=b4.reshape(1, F2),
    )
    return {k: jnp.asarray(v) for k, v in packed.items()}


# ----------------------------------------------------------------------------
# Forward pass: one tiny XLA layout transform of the input + one fused kernel.
# ----------------------------------------------------------------------------
@jax.jit
def forward(packed, x_nchw):
    n, c0, h, w = x_nchw.shape
    xt = jnp.transpose(x_nchw, (0, 2, 3, 1)).astype(jnp.float32)    # NHWC
    xp = jnp.pad(xt, ((0, 0), (1, 1), (1, 1), (0, 0)))
    x2d = xp.reshape(n * (h + 2), (w + 2) * c0)

    kernel = functools.partial(
        _fused_cnn_kernel,
        bn_count=float(n * h * w),
        bn_eps=1e-5,
        lrelu_slope=0.1,
    )
    return pl.pallas_call(
        kernel,
        out_shape=jax.ShapeDtypeStruct((n, packed["b4r"].shape[1]), jnp.float32),
        in_specs=[_VMEM] * (1 + len(_PACKED_ORDER)),
        out_specs=_VMEM,
        cost_estimate=pl.CostEstimate(
            flops=6_000_000, transcendentals=256, bytes_accessed=700_000),
    )(x2d, *[packed[k] for k in _PACKED_ORDER])


# ----------------------------------------------------------------------------
# Plain-XLA reference (same math) used only as a structural self-check.
# ----------------------------------------------------------------------------
def reference_forward(params, x):
    hi = jax.lax.Precision.HIGHEST
    y = jax.lax.conv_general_dilated(
        x, params["w1"], (1, 1), ((1, 1), (1, 1)),
        dimension_numbers=("NCHW", "OIHW", "NCHW"), precision=hi)
    y = y + params["b1"][None, :, None, None]
    mean = jnp.mean(y, axis=(0, 2, 3), keepdims=True)
    var = jnp.mean((y - mean) ** 2, axis=(0, 2, 3), keepdims=True)
    y = (y - mean) * jax.lax.rsqrt(var + 1e-5)
    y = y * params["gamma"][None, :, None, None] + params["beta"][None, :, None, None]
    y = jnp.maximum(y, 0.0)
    y = jnp.maximum(
        jnp.maximum(y[:, :, 0::2, 0::2], y[:, :, 0::2, 1::2]),
        jnp.maximum(y[:, :, 1::2, 0::2], y[:, :, 1::2, 1::2]))
    y = jax.lax.conv_general_dilated(
        y, params["w2"], (1, 1), ((1, 1), (1, 1)),
        dimension_numbers=("NCHW", "OIHW", "NCHW"), precision=hi)
    y = y + params["b2"][None, :, None, None]
    y = jnp.where(y > 0, y, 0.1 * y)
    y = y.reshape(y.shape[0], -1)
    y = jnp.maximum(jnp.dot(y, params["w3"].T, precision=hi) + params["b3"], 0.0)
    y = jnp.dot(y, params["w4"].T, precision=hi) + params["b4"]
    return y


if __name__ == "__main__":
    key = jax.random.PRNGKey(0)
    k_params, k_x = jax.random.split(key)
    params = init_params(k_params)
    packed = prepare_packed_params(params, batch=2)
    x = jax.random.normal(k_x, (2, 4, 16, 16), jnp.float32)   # NCHW input

    out = forward(packed, x)
    out = jax.block_until_ready(out)
    assert out.shape == (2, 10), out.shape
    assert bool(jnp.all(jnp.isfinite(out)))

    # Loose structural self-check (catches packing/index bugs, ignores f32
    # rounding differences between the MXU path and the XLA reference).
    ref = reference_forward(params, x)
    max_err = float(jnp.max(jnp.abs(out - ref)))
    assert max_err < 2e-2, f"mismatch vs reference: {max_err}"

    print("KERNEL_OK")
</pallas_src>

<mosaic_0001>
module attributes {stable_mosaic.version = 11 : i64} {
  func.func @_fused_cnn_kernel(%arg0: memref<36x72xf32, #tpu.memory_space<vmem>>, %arg1: memref<3x32x36xf32, #tpu.memory_space<vmem>>, %arg2: memref<3x72x128xf32, #tpu.memory_space<vmem>>, %arg3: memref<1x128xf32, #tpu.memory_space<vmem>>, %arg4: memref<1x128xf32, #tpu.memory_space<vmem>>, %arg5: memref<1x128xf32, #tpu.memory_space<vmem>>, %arg6: memref<128x128xf32, #tpu.memory_space<vmem>>, %arg7: memref<128x128xf32, #tpu.memory_space<vmem>>, %arg8: memref<32x32xf32, #tpu.memory_space<vmem>>, %arg9: memref<3x16x32xf32, #tpu.memory_space<vmem>>, %arg10: memref<3x128x128xf32, #tpu.memory_space<vmem>>, %arg11: memref<1x128xf32, #tpu.memory_space<vmem>>, %arg12: memref<8x2x16xf32, #tpu.memory_space<vmem>>, %arg13: memref<8x128x32xf32, #tpu.memory_space<vmem>>, %arg14: memref<1x32xf32, #tpu.memory_space<vmem>>, %arg15: memref<32x10xf32, #tpu.memory_space<vmem>>, %arg16: memref<1x10xf32, #tpu.memory_space<vmem>>, %arg17: memref<2x10xf32, #tpu.memory_space<vmem>>) attributes {dimension_semantics = [], scalar_prefetch = 0 : i64, scratch_operands = 0 : i64, tpu.core_type = #tpu.core_type<tc>} {
    %c0 = arith.constant 0 : index
    %c0_0 = arith.constant 0 : index
    %0 = vector.load %arg0[%c0, %c0_0] : memref<36x72xf32, #tpu.memory_space<vmem>>, vector<36x72xf32>
    %cst = arith.constant 0.000000e+00 : f32
    %1 = vector.broadcast %cst : f32 to vector<32x128xf32>
    %c0_1 = arith.constant 0 : index
    %c0_2 = arith.constant 0 : index
    %c0_3 = arith.constant 0 : index
    %2 = vector.load %arg1[%c0_1, %c0_2, %c0_3] : memref<3x32x36xf32, #tpu.memory_space<vmem>>, vector<1x32x36xf32>
    %3 = vector.shape_cast %2 : vector<1x32x36xf32> to vector<32x36xf32>
    %cst_4 = arith.constant dense<0.000000e+00> : vector<32x72xf32>
    %4 = tpu.matmul %3, %0, %cst_4 {dimension_numbers = #tpu.dot_dimension_numbers<[1], [0], [0], [1], [0, 0, 1, 1], [], []>} : vector<32x36xf32>, vector<36x72xf32>, vector<32x72xf32> -> vector<32x72xf32>
    %c0_5 = arith.constant 0 : index
    %c0_6 = arith.constant 0 : index
    %c0_7 = arith.constant 0 : index
    %5 = vector.load %arg2[%c0_5, %c0_6, %c0_7] : memref<3x72x128xf32, #tpu.memory_space<vmem>>, vector<1x72x128xf32>
    %6 = vector.shape_cast %5 : vector<1x72x128xf32> to vector<72x128xf32>
    %cst_8 = arith.constant dense<0.000000e+00> : vector<32x128xf32>
    %7 = tpu.matmul %4, %6, %cst_8 {dimension_numbers = #tpu.dot_dimension_numbers<[1], [0], [0], [1], [0, 0, 1, 1], [], []>} : vector<32x72xf32>, vector<72x128xf32>, vector<32x128xf32> -> vector<32x128xf32>
    %8 = arith.addf %1, %7 : vector<32x128xf32>
    %c1 = arith.constant 1 : index
    %c0_9 = arith.constant 0 : index
    %c0_10 = arith.constant 0 : index
    %9 = vector.load %arg1[%c1, %c0_9, %c0_10] : memref<3x32x36xf32, #tpu.memory_space<vmem>>, vector<1x32x36xf32>
    %10 = vector.shape_cast %9 : vector<1x32x36xf32> to vector<32x36xf32>
    %cst_11 = arith.constant dense<0.000000e+00> : vector<32x72xf32>
    %11 = tpu.matmul %10, %0, %cst_11 {dimension_numbers = #tpu.dot_dimension_numbers<[1], [0], [0], [1], [0, 0, 1, 1], [], []>} : vector<32x36xf32>, vector<36x72xf32>, vector<32x72xf32> -> vector<32x72xf32>
    %c1_12 = arith.constant 1 : index
    %c0_13 = arith.constant 0 : index
    %c0_14 = arith.constant 0 : index
    %12 = vector.load %arg2[%c1_12, %c0_13, %c0_14] : memref<3x72x128xf32, #tpu.memory_space<vmem>>, vector<1x72x128xf32>
    %13 = vector.shape_cast %12 : vector<1x72x128xf32> to vector<72x128xf32>
    %cst_15 = arith.constant dense<0.000000e+00> : vector<32x128xf32>
    %14 = tpu.matmul %11, %13, %cst_15 {dimension_numbers = #tpu.dot_dimension_numbers<[1], [0], [0], [1], [0, 0, 1, 1], [], []>} : vector<32x72xf32>, vector<72x128xf32>, vector<32x128xf32> -> vector<32x128xf32>
    %15 = arith.addf %8, %14 : vector<32x128xf32>
    %c2 = arith.constant 2 : index
    %c0_16 = arith.constant 0 : index
    %c0_17 = arith.constant 0 : index
    %16 = vector.load %arg1[%c2, %c0_16, %c0_17] : memref<3x32x36xf32, #tpu.memory_space<vmem>>, vector<1x32x36xf32>
    %17 = vector.shape_cast %16 : vector<1x32x36xf32> to vector<32x36xf32>
    %cst_18 = arith.constant dense<0.000000e+00> : vector<32x72xf32>
    %18 = tpu.matmul %17, %0, %cst_18 {dimension_numbers = #tpu.dot_dimension_numbers<[1], [0], [0], [1], [0, 0, 1, 1], [], []>} : vector<32x36xf32>, vector<36x72xf32>, vector<32x72xf32> -> vector<32x72xf32>
    %c2_19 = arith.constant 2 : index
    %c0_20 = arith.constant 0 : index
    %c0_21 = arith.constant 0 : index
    %19 = vector.load %arg2[%c2_19, %c0_20, %c0_21] : memref<3x72x128xf32, #tpu.memory_space<vmem>>, vector<1x72x128xf32>
    %20 = vector.shape_cast %19 : vector<1x72x128xf32> to vector<72x128xf32>
    %cst_22 = arith.constant dense<0.000000e+00> : vector<32x128xf32>
    %21 = tpu.matmul %18, %20, %cst_22 {dimension_numbers = #tpu.dot_dimension_numbers<[1], [0], [0], [1], [0, 0, 1, 1], [], []>} : vector<32x72xf32>, vector<72x128xf32>, vector<32x128xf32> -> vector<32x128xf32>
    %22 = arith.addf %15, %21 : vector<32x128xf32>
    %c0_23 = arith.constant 0 : index
    %c0_24 = arith.constant 0 : index
    %23 = vector.load %arg3[%c0_23, %c0_24] : memref<1x128xf32, #tpu.memory_space<vmem>>, vector<1x128xf32>
    %24 = vector.broadcast %23 : vector<1x128xf32> to vector<32x128xf32>
    %25 = arith.addf %22, %24 : vector<32x128xf32>
    %cst_25 = arith.constant dense<0.000000e+00> : vector<128xf32>
    %26 = vector.multi_reduction <add>, %25, %cst_25 [0] : vector<32x128xf32> to vector<128xf32>
    %27 = vector.shape_cast %26 : vector<128xf32> to vector<1x128xf32>
    %28 = arith.mulf %25, %25 : vector<32x128xf32>
    %cst_26 = arith.constant dense<0.000000e+00> : vector<128xf32>
    %29 = vector.multi_reduction <add>, %28, %cst_26 [0] : vector<32x128xf32> to vector<128xf32>
    %30 = vector.shape_cast %29 : vector<128xf32> to vector<1x128xf32>
    %c0_27 = arith.constant 0 : index
    %c0_28 = arith.constant 0 : index
    %31 = vector.load %arg6[%c0_27, %c0_28] : memref<128x128xf32, #tpu.memory_space<vmem>>, vector<128x128xf32>
    %cst_29 = arith.constant dense<0.000000e+00> : vector<1x128xf32>
    %32 = tpu.matmul %27, %31, %cst_29 {dimension_numbers = #tpu.dot_dimension_numbers<[1], [0], [0], [1], [0, 0, 1, 1], [], []>} : vector<1x128xf32>, vector<128x128xf32>, vector<1x128xf32> -> vector<1x128xf32>
    %cst_30 = arith.constant 0.001953125 : f32
    %33 = vector.broadcast %cst_30 : f32 to vector<1x128xf32>
    %34 = arith.mulf %32, %33 : vector<1x128xf32>
    %c0_31 = arith.constant 0 : index
    %c0_32 = arith.constant 0 : index
    %35 = vector.load %arg6[%c0_31, %c0_32] : memref<128x128xf32, #tpu.memory_space<vmem>>, vector<128x128xf32>
    %cst_33 = arith.constant dense<0.000000e+00> : vector<1x128xf32>
    %36 = tpu.matmul %30, %35, %cst_33 {dimension_numbers = #tpu.dot_dimension_numbers<[1], [0], [0], [1], [0, 0, 1, 1], [], []>} : vector<1x128xf32>, vector<128x128xf32>, vector<1x128xf32> -> vector<1x128xf32>
    %cst_34 = arith.constant 0.001953125 : f32
    %37 = vector.broadcast %cst_34 : f32 to vector<1x128xf32>
    %38 = arith.mulf %36, %37 : vector<1x128xf32>
    %39 = arith.mulf %34, %34 : vector<1x128xf32>
    %40 = arith.subf %38, %39 : vector<1x128xf32>
    %41 = vector.broadcast %34 : vector<1x128xf32> to vector<32x128xf32>
    %42 = arith.subf %25, %41 : vector<32x128xf32>
    %cst_35 = arith.constant 9.99999974E-6 : f32
    %43 = vector.broadcast %cst_35 : f32 to vector<1x128xf32>
    %44 = arith.addf %40, %43 : vector<1x128xf32>
    %45 = math.rsqrt %44 : vector<1x128xf32>
    %c0_36 = arith.constant 0 : index
    %c0_37 = arith.constant 0 : index
    %46 = vector.load %arg4[%c0_36, %c0_37] : memref<1x128xf32, #tpu.memory_space<vmem>>, vector<1x128xf32>
    %47 = arith.mulf %45, %46 : vector<1x128xf32>
    %48 = vector.broadcast %47 : vector<1x128xf32> to vector<32x128xf32>
    %49 = arith.mulf %42, %48 : vector<32x128xf32>
    %c0_38 = arith.constant 0 : index
    %c0_39 = arith.constant 0 : index
    %50 = vector.load %arg5[%c0_38, %c0_39] : memref<1x128xf32, #tpu.memory_space<vmem>>, vector<1x128xf32>
    %51 = vector.broadcast %50 : vector<1x128xf32> to vector<32x128xf32>
    %52 = arith.addf %49, %51 : vector<32x128xf32>
    %cst_40 = arith.constant 0.000000e+00 : f32
    %53 = vector.broadcast %cst_40 : f32 to vector<32x128xf32>
    %54 = arith.maximumf %52, %53 : vector<32x128xf32>
    %c0_41 = arith.constant 0 : index
    %c0_42 = arith.constant 0 : index
    %55 = vector.load %arg7[%c0_41, %c0_42] : memref<128x128xf32, #tpu.memory_space<vmem>>, vector<128x128xf32>
    %cst_43 = arith.constant dense<0.000000e+00> : vector<32x128xf32>
    %56 = tpu.matmul %54, %55, %cst_43 {dimension_numbers = #tpu.dot_dimension_numbers<[1], [0], [0], [1], [0, 0, 1, 1], [], []>} : vector<32x128xf32>, vector<128x128xf32>, vector<32x128xf32> -> vector<32x128xf32>
    %57 = arith.maximumf %54, %56 : vector<32x128xf32>
    %c0_44 = arith.constant 0 : index
    %c0_45 = arith.constant 0 : index
    %58 = vector.load %arg8[%c0_44, %c0_45] : memref<32x32xf32, #tpu.memory_space<vmem>>, vector<32x32xf32>
    %cst_46 = arith.constant dense<0.000000e+00> : vector<32x128xf32>
    %59 = tpu.matmul %58, %57, %cst_46 {dimension_numbers = #tpu.dot_dimension_numbers<[1], [0], [0], [1], [0, 0, 1, 1], [], []>} : vector<32x32xf32>, vector<32x128xf32>, vector<32x128xf32> -> vector<32x128xf32>
    %60 = arith.maximumf %57, %59 : vector<32x128xf32>
    %cst_47 = arith.constant 0.000000e+00 : f32
    %61 = vector.broadcast %cst_47 : f32 to vector<16x128xf32>
    %c0_48 = arith.constant 0 : index
    %c0_49 = arith.constant 0 : index
    %c0_50 = arith.constant 0 : index
    %62 = vector.load %arg9[%c0_48, %c0_49, %c0_50] : memref<3x16x32xf32, #tpu.memory_space<vmem>>, vector<1x16x32xf32>
    %63 = vector.shape_cast %62 : vector<1x16x32xf32> to vector<16x32xf32>
    %cst_51 = arith.constant dense<0.000000e+00> : vector<16x128xf32>
    %64 = tpu.matmul %63, %60, %cst_51 {dimension_numbers = #tpu.dot_dimension_numbers<[1], [0], [0], [1], [0, 0, 1, 1], [], []>} : vector<16x32xf32>, vector<32x128xf32>, vector<16x128xf32> -> vector<16x128xf32>
    %c0_52 = arith.constant 0 : index
    %c0_53 = arith.constant 0 : index
    %c0_54 = arith.constant 0 : index
    %65 = vector.load %arg10[%c0_52, %c0_53, %c0_54] : memref<3x128x128xf32, #tpu.memory_space<vmem>>, vector<1x128x128xf32>
    %66 = vector.shape_cast %65 : vector<1x128x128xf32> to vector<128x128xf32>
    %cst_55 = arith.constant dense<0.000000e+00> : vector<16x128xf32>
    %67 = tpu.matmul %64, %66, %cst_55 {dimension_numbers = #tpu.dot_dimension_numbers<[1], [0], [0], [1], [0, 0, 1, 1], [], []>} : vector<16x128xf32>, vector<128x128xf32>, vector<16x128xf32> -> vector<16x128xf32>
    %68 = arith.addf %61, %67 : vector<16x128xf32>
    %c1_56 = arith.constant 1 : index
    %c0_57 = arith.constant 0 : index
    %c0_58 = arith.constant 0 : index
    %69 = vector.load %arg9[%c1_56, %c0_57, %c0_58] : memref<3x16x32xf32, #tpu.memory_space<vmem>>, vector<1x16x32xf32>
    %70 = vector.shape_cast %69 : vector<1x16x32xf32> to vector<16x32xf32>
    %cst_59 = arith.constant dense<0.000000e+00> : vector<16x128xf32>
    %71 = tpu.matmul %70, %60, %cst_59 {dimension_numbers = #tpu.dot_dimension_numbers<[1], [0], [0], [1], [0, 0, 1, 1], [], []>} : vector<16x32xf32>, vector<32x128xf32>, vector<16x128xf32> -> vector<16x128xf32>
    %c1_60 = arith.constant 1 : index
    %c0_61 = arith.constant 0 : index
    %c0_62 = arith.constant 0 : index
    %72 = vector.load %arg10[%c1_60, %c0_61, %c0_62] : memref<3x128x128xf32, #tpu.memory_space<vmem>>, vector<1x128x128xf32>
    %73 = vector.shape_cast %72 : vector<1x128x128xf32> to vector<128x128xf32>
    %cst_63 = arith.constant dense<0.000000e+00> : vector<16x128xf32>
    %74 = tpu.matmul %71, %73, %cst_63 {dimension_numbers = #tpu.dot_dimension_numbers<[1], [0], [0], [1], [0, 0, 1, 1], [], []>} : vector<16x128xf32>, vector<128x128xf32>, vector<16x128xf32> -> vector<16x128xf32>
    %75 = arith.addf %68, %74 : vector<16x128xf32>
    %c2_64 = arith.constant 2 : index
    %c0_65 = arith.constant 0 : index
    %c0_66 = arith.constant 0 : index
    %76 = vector.load %arg9[%c2_64, %c0_65, %c0_66] : memref<3x16x32xf32, #tpu.memory_space<vmem>>, vector<1x16x32xf32>
    %77 = vector.shape_cast %76 : vector<1x16x32xf32> to vector<16x32xf32>
    %cst_67 = arith.constant dense<0.000000e+00> : vector<16x128xf32>
    %78 = tpu.matmul %77, %60, %cst_67 {dimension_numbers = #tpu.dot_dimension_numbers<[1], [0], [0], [1], [0, 0, 1, 1], [], []>} : vector<16x32xf32>, vector<32x128xf32>, vector<16x128xf32> -> vector<16x128xf32>
    %c2_68 = arith.constant 2 : index
    %c0_69 = arith.constant 0 : index
    %c0_70 = arith.constant 0 : index
    %79 = vector.load %arg10[%c2_68, %c0_69, %c0_70] : memref<3x128x128xf32, #tpu.memory_space<vmem>>, vector<1x128x128xf32>
    %80 = vector.shape_cast %79 : vector<1x128x128xf32> to vector<128x128xf32>
    %cst_71 = arith.constant dense<0.000000e+00> : vector<16x128xf32>
    %81 = tpu.matmul %78, %80, %cst_71 {dimension_numbers = #tpu.dot_dimension_numbers<[1], [0], [0], [1], [0, 0, 1, 1], [], []>} : vector<16x128xf32>, vector<128x128xf32>, vector<16x128xf32> -> vector<16x128xf32>
    %82 = arith.addf %75, %81 : vector<16x128xf32>
    %c0_72 = arith.constant 0 : index
    %c0_73 = arith.constant 0 : index
    %83 = vector.load %arg11[%c0_72, %c0_73] : memref<1x128xf32, #tpu.memory_space<vmem>>, vector<1x128xf32>
    %84 = vector.broadcast %83 : vector<1x128xf32> to vector<16x128xf32>
    %85 = arith.addf %82, %84 : vector<16x128xf32>
    %cst_74 = arith.constant 0.000000e+00 : f32
    %86 = vector.broadcast %cst_74 : f32 to vector<16x128xf32>
    %87 = arith.cmpf ogt, %85, %86 : vector<16x128xf32>
    %cst_75 = arith.constant 1.000000e-01 : f32
    %88 = vector.broadcast %cst_75 : f32 to vector<16x128xf32>
    %89 = arith.mulf %88, %85 : vector<16x128xf32>
    %90 = arith.select %87, %85, %89 : vector<16x128xi1>, vector<16x128xf32>
    %cst_76 = arith.constant 0.000000e+00 : f32
    %91 = vector.broadcast %cst_76 : f32 to vector<2x32xf32>
    %c0_77 = arith.constant 0 : index
    %c0_78 = arith.constant 0 : index
    %c0_79 = arith.constant 0 : index
    %92 = vector.load %arg12[%c0_77, %c0_78, %c0_79] : memref<8x2x16xf32, #tpu.memory_space<vmem>>, vector<1x2x16xf32>
    %93 = vector.shape_cast %92 : vector<1x2x16xf32> to vector<2x16xf32>
    %cst_80 = arith.constant dense<0.000000e+00> : vector<2x128xf32>
    %94 = tpu.matmul %93, %90, %cst_80 {dimension_numbers = #tpu.dot_dimension_numbers<[1], [0], [0], [1], [0, 0, 1, 1], [], []>} : vector<2x16xf32>, vector<16x128xf32>, vector<2x128xf32> -> vector<2x128xf32>
    %c0_81 = arith.constant 0 : index
    %c0_82 = arith.constant 0 : index
    %c0_83 = arith.constant 0 : index
    %95 = vector.load %arg13[%c0_81, %c0_82, %c0_83] : memref<8x128x32xf32, #tpu.memory_space<vmem>>, vector<1x128x32xf32>
    %96 = vector.shape_cast %95 : vector<1x128x32xf32> to vector<128x32xf32>
    %cst_84 = arith.constant dense<0.000000e+00> : vector<2x32xf32>
    %97 = tpu.matmul %94, %96, %cst_84 {dimension_numbers = #tpu.dot_dimension_numbers<[1], [0], [0], [1], [0, 0, 1, 1], [], []>} : vector<2x128xf32>, vector<128x32xf32>, vector<2x32xf32> -> vector<2x32xf32>
    %98 = arith.addf %91, %97 : vector<2x32xf32>
    %c1_85 = arith.constant 1 : index
    %c0_86 = arith.constant 0 : index
    %c0_87 = arith.constant 0 : index
    %99 = vector.load %arg12[%c1_85, %c0_86, %c0_87] : memref<8x2x16xf32, #tpu.memory_space<vmem>>, vector<1x2x16xf32>
    %100 = vector.shape_cast %99 : vector<1x2x16xf32> to vector<2x16xf32>
    %cst_88 = arith.constant dense<0.000000e+00> : vector<2x128xf32>
    %101 = tpu.matmul %100, %90, %cst_88 {dimension_numbers = #tpu.dot_dimension_numbers<[1], [0], [0], [1], [0, 0, 1, 1], [], []>} : vector<2x16xf32>, vector<16x128xf32>, vector<2x128xf32> -> vector<2x128xf32>
    %c1_89 = arith.constant 1 : index
    %c0_90 = arith.constant 0 : index
    %c0_91 = arith.constant 0 : index
    %102 = vector.load %arg13[%c1_89, %c0_90, %c0_91] : memref<8x128x32xf32, #tpu.memory_space<vmem>>, vector<1x128x32xf32>
    %103 = vector.shape_cast %102 : vector<1x128x32xf32> to vector<128x32xf32>
    %cst_92 = arith.constant dense<0.000000e+00> : vector<2x32xf32>
    %104 = tpu.matmul %101, %103, %cst_92 {dimension_numbers = #tpu.dot_dimension_numbers<[1], [0], [0], [1], [0, 0, 1, 1], [], []>} : vector<2x128xf32>, vector<128x32xf32>, vector<2x32xf32> -> vector<2x32xf32>
    %105 = arith.addf %98, %104 : vector<2x32xf32>
    %c2_93 = arith.constant 2 : index
    %c0_94 = arith.constant 0 : index
    %c0_95 = arith.constant 0 : index
    %106 = vector.load %arg12[%c2_93, %c0_94, %c0_95] : memref<8x2x16xf32, #tpu.memory_space<vmem>>, vector<1x2x16xf32>
    %107 = vector.shape_cast %106 : vector<1x2x16xf32> to vector<2x16xf32>
    %cst_96 = arith.constant dense<0.000000e+00> : vector<2x128xf32>
    %108 = tpu.matmul %107, %90, %cst_96 {dimension_numbers = #tpu.dot_dimension_numbers<[1], [0], [0], [1], [0, 0, 1, 1], [], []>} : vector<2x16xf32>, vector<16x128xf32>, vector<2x128xf32> -> vector<2x128xf32>
    %c2_97 = arith.constant 2 : index
    %c0_98 = arith.constant 0 : index
    %c0_99 = arith.constant 0 : index
    %109 = vector.load %arg13[%c2_97, %c0_98, %c0_99] : memref<8x128x32xf32, #tpu.memory_space<vmem>>, vector<1x128x32xf32>
    %110 = vector.shape_cast %109 : vector<1x128x32xf32> to vector<128x32xf32>
    %cst_100 = arith.constant dense<0.000000e+00> : vector<2x32xf32>
    %111 = tpu.matmul %108, %110, %cst_100 {dimension_numbers = #tpu.dot_dimension_numbers<[1], [0], [0], [1], [0, 0, 1, 1], [], []>} : vector<2x128xf32>, vector<128x32xf32>, vector<2x32xf32> -> vector<2x32xf32>
    %112 = arith.addf %105, %111 : vector<2x32xf32>
    %c3 = arith.constant 3 : index
    %c0_101 = arith.constant 0 : index
    %c0_102 = arith.constant 0 : index
    %113 = vector.load %arg12[%c3, %c0_101, %c0_102] : memref<8x2x16xf32, #tpu.memory_space<vmem>>, vector<1x2x16xf32>
    %114 = vector.shape_cast %113 : vector<1x2x16xf32> to vector<2x16xf32>
    %cst_103 = arith.constant dense<0.000000e+00> : vector<2x128xf32>
    %115 = tpu.matmul %114, %90, %cst_103 {dimension_numbers = #tpu.dot_dimension_numbers<[1], [0], [0], [1], [0, 0, 1, 1], [], []>} : vector<2x16xf32>, vector<16x128xf32>, vector<2x128xf32> -> vector<2x128xf32>
    %c3_104 = arith.constant 3 : index
    %c0_105 = arith.constant 0 : index
    %c0_106 = arith.constant 0 : index
    %116 = vector.load %arg13[%c3_104, %c0_105, %c0_106] : memref<8x128x32xf32, #tpu.memory_space<vmem>>, vector<1x128x32xf32>
    %117 = vector.shape_cast %116 : vector<1x128x32xf32> to vector<128x32xf32>
    %cst_107 = arith.constant dense<0.000000e+00> : vector<2x32xf32>
    %118 = tpu.matmul %115, %117, %cst_107 {dimension_numbers = #tpu.dot_dimension_numbers<[1], [0], [0], [1], [0, 0, 1, 1], [], []>} : vector<2x128xf32>, vector<128x32xf32>, vector<2x32xf32> -> vector<2x32xf32>
    %119 = arith.addf %112, %118 : vector<2x32xf32>
    %c4 = arith.constant 4 : index
    %c0_108 = arith.constant 0 : index
    %c0_109 = arith.constant 0 : index
    %120 = vector.load %arg12[%c4, %c0_108, %c0_109] : memref<8x2x16xf32, #tpu.memory_space<vmem>>, vector<1x2x16xf32>
    %121 = vector.shape_cast %120 : vector<1x2x16xf32> to vector<2x16xf32>
    %cst_110 = arith.constant dense<0.000000e+00> : vector<2x128xf32>
    %122 = tpu.matmul %121, %90, %cst_110 {dimension_numbers = #tpu.dot_dimension_numbers<[1], [0], [0], [1], [0, 0, 1, 1], [], []>} : vector<2x16xf32>, vector<16x128xf32>, vector<2x128xf32> -> vector<2x128xf32>
    %c4_111 = arith.constant 4 : index
    %c0_112 = arith.constant 0 : index
    %c0_113 = arith.constant 0 : index
    %123 = vector.load %arg13[%c4_111, %c0_112, %c0_113] : memref<8x128x32xf32, #tpu.memory_space<vmem>>, vector<1x128x32xf32>
    %124 = vector.shape_cast %123 : vector<1x128x32xf32> to vector<128x32xf32>
    %cst_114 = arith.constant dense<0.000000e+00> : vector<2x32xf32>
    %125 = tpu.matmul %122, %124, %cst_114 {dimension_numbers = #tpu.dot_dimension_numbers<[1], [0], [0], [1], [0, 0, 1, 1], [], []>} : vector<2x128xf32>, vector<128x32xf32>, vector<2x32xf32> -> vector<2x32xf32>
    %126 = arith.addf %119, %125 : vector<2x32xf32>
    %c5 = arith.constant 5 : index
    %c0_115 = arith.constant 0 : index
    %c0_116 = arith.constant 0 : index
    %127 = vector.load %arg12[%c5, %c0_115, %c0_116] : memref<8x2x16xf32, #tpu.memory_space<vmem>>, vector<1x2x16xf32>
    %128 = vector.shape_cast %127 : vector<1x2x16xf32> to vector<2x16xf32>
    %cst_117 = arith.constant dense<0.000000e+00> : vector<2x128xf32>
    %129 = tpu.matmul %128, %90, %cst_117 {dimension_numbers = #tpu.dot_dimension_numbers<[1], [0], [0], [1], [0, 0, 1, 1], [], []>} : vector<2x16xf32>, vector<16x128xf32>, vector<2x128xf32> -> vector<2x128xf32>
    %c5_118 = arith.constant 5 : index
    %c0_119 = arith.constant 0 : index
    %c0_120 = arith.constant 0 : index
    %130 = vector.load %arg13[%c5_118, %c0_119, %c0_120] : memref<8x128x32xf32, #tpu.memory_space<vmem>>, vector<1x128x32xf32>
    %131 = vector.shape_cast %130 : vector<1x128x32xf32> to vector<128x32xf32>
    %cst_121 = arith.constant dense<0.000000e+00> : vector<2x32xf32>
    %132 = tpu.matmul %129, %131, %cst_121 {dimension_numbers = #tpu.dot_dimension_numbers<[1], [0], [0], [1], [0, 0, 1, 1], [], []>} : vector<2x128xf32>, vector<128x32xf32>, vector<2x32xf32> -> vector<2x32xf32>
    %133 = arith.addf %126, %132 : vector<2x32xf32>
    %c6 = arith.constant 6 : index
    %c0_122 = arith.constant 0 : index
    %c0_123 = arith.constant 0 : index
    %134 = vector.load %arg12[%c6, %c0_122, %c0_123] : memref<8x2x16xf32, #tpu.memory_space<vmem>>, vector<1x2x16xf32>
    %135 = vector.shape_cast %134 : vector<1x2x16xf32> to vector<2x16xf32>
    %cst_124 = arith.constant dense<0.000000e+00> : vector<2x128xf32>
    %136 = tpu.matmul %135, %90, %cst_124 {dimension_numbers = #tpu.dot_dimension_numbers<[1], [0], [0], [1], [0, 0, 1, 1], [], []>} : vector<2x16xf32>, vector<16x128xf32>, vector<2x128xf32> -> vector<2x128xf32>
    %c6_125 = arith.constant 6 : index
    %c0_126 = arith.constant 0 : index
    %c0_127 = arith.constant 0 : index
    %137 = vector.load %arg13[%c6_125, %c0_126, %c0_127] : memref<8x128x32xf32, #tpu.memory_space<vmem>>, vector<1x128x32xf32>
    %138 = vector.shape_cast %137 : vector<1x128x32xf32> to vector<128x32xf32>
    %cst_128 = arith.constant dense<0.000000e+00> : vector<2x32xf32>
    %139 = tpu.matmul %136, %138, %cst_128 {dimension_numbers = #tpu.dot_dimension_numbers<[1], [0], [0], [1], [0, 0, 1, 1], [], []>} : vector<2x128xf32>, vector<128x32xf32>, vector<2x32xf32> -> vector<2x32xf32>
    %140 = arith.addf %133, %139 : vector<2x32xf32>
    %c7 = arith.constant 7 : index
    %c0_129 = arith.constant 0 : index
    %c0_130 = arith.constant 0 : index
    %141 = vector.load %arg12[%c7, %c0_129, %c0_130] : memref<8x2x16xf32, #tpu.memory_space<vmem>>, vector<1x2x16xf32>
    %142 = vector.shape_cast %141 : vector<1x2x16xf32> to vector<2x16xf32>
    %cst_131 = arith.constant dense<0.000000e+00> : vector<2x128xf32>
    %143 = tpu.matmul %142, %90, %cst_131 {dimension_numbers = #tpu.dot_dimension_numbers<[1], [0], [0], [1], [0, 0, 1, 1], [], []>} : vector<2x16xf32>, vector<16x128xf32>, vector<2x128xf32> -> vector<2x128xf32>
    %c7_132 = arith.constant 7 : index
    %c0_133 = arith.constant 0 : index
    %c0_134 = arith.constant 0 : index
    %144 = vector.load %arg13[%c7_132, %c0_133, %c0_134] : memref<8x128x32xf32, #tpu.memory_space<vmem>>, vector<1x128x32xf32>
    %145 = vector.shape_cast %144 : vector<1x128x32xf32> to vector<128x32xf32>
    %cst_135 = arith.constant dense<0.000000e+00> : vector<2x32xf32>
    %146 = tpu.matmul %143, %145, %cst_135 {dimension_numbers = #tpu.dot_dimension_numbers<[1], [0], [0], [1], [0, 0, 1, 1], [], []>} : vector<2x128xf32>, vector<128x32xf32>, vector<2x32xf32> -> vector<2x32xf32>
    %147 = arith.addf %140, %146 : vector<2x32xf32>
    %c0_136 = arith.constant 0 : index
    %c0_137 = arith.constant 0 : index
    %148 = vector.load %arg14[%c0_136, %c0_137] : memref<1x32xf32, #tpu.memory_space<vmem>>, vector<1x32xf32>
    %149 = vector.broadcast %148 : vector<1x32xf32> to vector<2x32xf32>
    %150 = arith.addf %147, %149 : vector<2x32xf32>
    %cst_138 = arith.constant 0.000000e+00 : f32
    %151 = vector.broadcast %cst_138 : f32 to vector<2x32xf32>
    %152 = arith.maximumf %150, %151 : vector<2x32xf32>
    %c0_139 = arith.constant 0 : index
    %c0_140 = arith.constant 0 : index
    %153 = vector.load %arg15[%c0_139, %c0_140] : memref<32x10xf32, #tpu.memory_space<vmem>>, vector<32x10xf32>
    %cst_141 = arith.constant dense<0.000000e+00> : vector<2x10xf32>
    %154 = tpu.matmul %152, %153, %cst_141 {dimension_numbers = #tpu.dot_dimension_numbers<[1], [0], [0], [1], [0, 0, 1, 1], [], []>} : vector<2x32xf32>, vector<32x10xf32>, vector<2x10xf32> -> vector<2x10xf32>
    %c0_142 = arith.constant 0 : index
    %c0_143 = arith.constant 0 : index
    %155 = vector.load %arg16[%c0_142, %c0_143] : memref<1x10xf32, #tpu.memory_space<vmem>>, vector<1x10xf32>
    %156 = vector.broadcast %155 : vector<1x10xf32> to vector<2x10xf32>
    %157 = arith.addf %154, %156 : vector<2x10xf32>
    %c0_144 = arith.constant 0 : index
    %c0_145 = arith.constant 0 : index
    %158 = vector.load %arg17[%c0_144, %c0_145] : memref<2x10xf32, #tpu.memory_space<vmem>>, vector<2x10xf32>
    tpu.vector_store %arg17[%c0_144, %c0_145], %157 {strides = array<i32>} : memref<2x10xf32, #tpu.memory_space<vmem>>, vector<2x10xf32>,
    return
  }
}

</mosaic_0001>

<llo_original>
// kernel: forward.1
$region0: #{forward.1}
  #allocation0 [shape = 'u32[]', space=smem, size = 0x4, offset = 0x4, fixed_abs, tag = 'smem constant byte address 0x4 - core index']
  #allocation1 [shape = 'u32[144,128]{1,0:T(1,128)}', space=vmem, size = 0x12000, scoped, tag = 'internal scratch']
  %s0 = inlined_call_operand.vmem [shape: f32[36,72], index: 0, kind: input, shape index: {}]
  %s1 = inlined_call_operand.vmem [shape: f32[3,32,36], index: 1, kind: input, shape index: {}]
  %s2 = inlined_call_operand.vmem [shape: f32[3,72,128], index: 2, kind: input, shape index: {}]
  %s3 = inlined_call_operand.vmem [shape: f32[1,128], index: 3, kind: input, shape index: {}]
  %s4 = inlined_call_operand.vmem [shape: f32[1,128], index: 4, kind: input, shape index: {}]
  %s5 = inlined_call_operand.vmem [shape: f32[1,128], index: 5, kind: input, shape index: {}]
  %s6 = inlined_call_operand.vmem [shape: f32[128,128], index: 6, kind: input, shape index: {}]
  %s7 = inlined_call_operand.vmem [shape: f32[128,128], index: 7, kind: input, shape index: {}]
  %s8 = inlined_call_operand.vmem [shape: f32[32,32], index: 8, kind: input, shape index: {}]
  %s9 = inlined_call_operand.vmem [shape: f32[3,16,32], index: 9, kind: input, shape index: {}]
  %s10 = inlined_call_operand.vmem [shape: f32[3,128,128], index: 10, kind: input, shape index: {}]
  %s11 = inlined_call_operand.vmem [shape: f32[1,128], index: 11, kind: input, shape index: {}]
  %s12 = inlined_call_operand.vmem [shape: f32[8,2,16], index: 12, kind: input, shape index: {}]
  %s13 = inlined_call_operand.vmem [shape: f32[8,128,32], index: 13, kind: input, shape index: {}]
  %s14 = inlined_call_operand.vmem [shape: f32[1,32], index: 14, kind: input, shape index: {}]
  %s15 = inlined_call_operand.vmem [shape: f32[32,10], index: 15, kind: input, shape index: {}]
  %s16 = inlined_call_operand.vmem [shape: f32[1,10], index: 16, kind: input, shape index: {}]
  %s17 = inlined_call_operand.hbm [shape: f32[2,10], index: 17, kind: output, shape index: {}]
  %s18 = sld [smem:[#allocation0]]
  $region78: #{forward.1} parent=0
    _
  %s20 = ssub.s32 1, %s18
  %s21 = scalar_select 0, %s20, %s18
  $region1: #{forward.1} parent=0
    #allocation2 [shape = 'u8[1024]{0}', space=vmem, size = 0x400, scoped, tag = 'output window, operand 0, single buffered']
    #allocation3 [shape = 's32[1]{0}', space=sflag, size = 0x4, scoped, tag = 'scoped memory for forward.1']
    %22 = vsyncpa [#allocation3], 0
    // Predicated region
    $region2: #{forward.1} parent=1 // pred_check
      _
    $region3: #{forward.1} parent=1 // pred_check_branch
      %24 = sbr.rel (0) target = $region5
    $region4: #{forward.1} parent=1 // pred_region
      _
    $region5: #{forward.1} parent=1 // pred_fallthru
      _
    // Predicated region
    $region6: #{forward.1} parent=1 // pred_check
      _
    $region7: #{forward.1} parent=1 // pred_check_branch
      %26 = sbr.rel (0) target = $region9
    $region8: #{forward.1} parent=1 // pred_region
      _
    $region9: #{forward.1} parent=1 // pred_fallthru
      _
    // Predicated region
    $region10: #{forward.1} parent=1 // pred_check
      _
    $region11: #{forward.1} parent=1 // pred_check_branch
      %28 = sbr.rel (0) target = $region13
    $region12: #{forward.1} parent=1 // pred_region
      _
    $region13: #{forward.1} parent=1 // pred_fallthru
      _
    // Predicated region
    $region14: #{forward.1} parent=1 // pred_check
      _
    $region15: #{forward.1} parent=1 // pred_check_branch
      %30 = sbr.rel (0) target = $region17
    $region16: #{forward.1} parent=1 // pred_region
      _
    $region17: #{forward.1} parent=1 // pred_fallthru
      _
    // Predicated region
    $region18: #{forward.1} parent=1 // pred_check
      _
    $region19: #{forward.1} parent=1 // pred_check_branch
      %32 = sbr.rel (0) target = $region21
    $region20: #{forward.1} parent=1 // pred_region
      _
    $region21: #{forward.1} parent=1 // pred_fallthru
      _
    // Predicated region
    $region22: #{forward.1} parent=1 // pred_check
      _
    $region23: #{forward.1} parent=1 // pred_check_branch
      %34 = sbr.rel (0) target = $region25
    $region24: #{forward.1} parent=1 // pred_region
      _
    $region25: #{forward.1} parent=1 // pred_fallthru
      _
    // Predicated region
    $region26: #{forward.1} parent=1 // pred_check
      _
    $region27: #{forward.1} parent=1 // pred_check_branch
      %36 = sbr.rel (0) target = $region29
    $region28: #{forward.1} parent=1 // pred_region
      _
    $region29: #{forward.1} parent=1 // pred_fallthru
      _
    // Predicated region
    $region30: #{forward.1} parent=1 // pred_check
      _
    $region31: #{forward.1} parent=1 // pred_check_branch
      %38 = sbr.rel (0) target = $region33
    $region32: #{forward.1} parent=1 // pred_region
      _
    $region33: #{forward.1} parent=1 // pred_fallthru
      _
    // Predicated region
    $region34: #{forward.1} parent=1 // pred_check
      _
    $region35: #{forward.1} parent=1 // pred_check_branch
      %40 = sbr.rel (0) target = $region37
    $region36: #{forward.1} parent=1 // pred_region
      _
    $region37: #{forward.1} parent=1 // pred_fallthru
      _
    // Predicated region
    $region38: #{forward.1} parent=1 // pred_check
      _
    $region39: #{forward.1} parent=1 // pred_check_branch
      %42 = sbr.rel (0) target = $region41
    $region40: #{forward.1} parent=1 // pred_region
      _
    $region41: #{forward.1} parent=1 // pred_fallthru
      _
    // Predicated region
    $region42: #{forward.1} parent=1 // pred_check
      _
    $region43: #{forward.1} parent=1 // pred_check_branch
      %44 = sbr.rel (0) target = $region45
    $region44: #{forward.1} parent=1 // pred_region
      _
    $region45: #{forward.1} parent=1 // pred_fallthru
      _
    // Predicated region
    $region46: #{forward.1} parent=1 // pred_check
      _
    $region47: #{forward.1} parent=1 // pred_check_branch
      %46 = sbr.rel (0) target = $region49
    $region48: #{forward.1} parent=1 // pred_region
      _
    $region49: #{forward.1} parent=1 // pred_fallthru
      _
    // Predicated region
    $region50: #{forward.1} parent=1 // pred_check
      _
    $region51: #{forward.1} parent=1 // pred_check_branch
      %48 = sbr.rel (0) target = $region53
    $region52: #{forward.1} parent=1 // pred_region
      _
    $region53: #{forward.1} parent=1 // pred_fallthru
      _
    // Predicated region
    $region54: #{forward.1} parent=1 // pred_check
      _
    $region55: #{forward.1} parent=1 // pred_check_branch
      %50 = sbr.rel (0) target = $region57
    $region56: #{forward.1} parent=1 // pred_region
      _
    $region57: #{forward.1} parent=1 // pred_fallthru
      _
    // Predicated region
    $region58: #{forward.1} parent=1 // pred_check
      _
    $region59: #{forward.1} parent=1 // pred_check_branch
      %52 = sbr.rel (0) target = $region61
    $region60: #{forward.1} parent=1 // pred_region
      _
    $region61: #{forward.1} parent=1 // pred_fallthru
      _
    // Predicated region
    $region62: #{forward.1} parent=1 // pred_check
      _
    $region63: #{forward.1} parent=1 // pred_check_branch
      %54 = sbr.rel (0) target = $region65
    $region64: #{forward.1} parent=1 // pred_region
      _
    $region65: #{forward.1} parent=1 // pred_fallthru
      _
    // Predicated region
    $region66: #{forward.1} parent=1 // pred_check
      _
    $region67: #{forward.1} parent=1 // pred_check_branch
      %56 = sbr.rel (0) target = $region69
    $region68: #{forward.1} parent=1 // pred_region
      _
    $region69: #{forward.1} parent=1 // pred_fallthru
      _
    %v57 = vld [vmem:[%s0] sm:$0xff]
    %v58 = vld [vmem:[%s0 + $0x8] sm:$0xff]
    %v59 = vld [vmem:[%s0 + $0x10] sm:$0xff]
    %v60 = vld [vmem:[%s0 + $0x18] sm:$0xff]
    %v61 = vld [vmem:[%s0 + $0x20] sm:$0xf]
    %v62 = vld [vmem:[%s1] sm:$0xff]
    %v63 = vld [vmem:[%s1 + $0x8] sm:$0xff]
    %v64 = vld [vmem:[%s1 + $0x10] sm:$0xff]
    %v65 = vld [vmem:[%s1 + $0x18] sm:$0xff]
    %vm66 = vcmask 293888
    %v68 = vsel %vm66, %v62, 0
    %v71 = vsel %vm66, %v63, 0
    %v74 = vsel %vm66, %v64, 0
    %v77 = vsel %vm66, %v65, 0
    %vm79 = vcmask 1043456
    %v81 = vsel %vm79, %v61, 0
    %83 = vmatprep.subr.mxu0 0.0
    %84 = vmatpush1.msra.mxu0 0.0
    %85 = vmatprep.subr.mxu0 0.0
    %86 = vmatpush1.msra.mxu0 0.0
    %87 = vmatprep.subr.mxu0 0.0
    %88 = vmatpush1.msra.mxu0 0.0
    %89 = vmatprep.subr.mxu0 0.0
    %90 = vmatpush1.msra.mxu0 0.0
    %91 = vmatprep.subr.mxu0 0.0
    %92 = vmatpush1.msra.mxu0 0.0
    %93 = vmatprep.subr.mxu0 0.0
    %94 = vmatpush1.msra.mxu0 0.0
    %95 = vmatprep.subr.mxu0 0.0
    %96 = vmatpush1.msra.mxu0 0.0
    %97 = vmatprep.subr.mxu0 0.0
    %98 = vmatpush1.msra.mxu0 0.0
    %99 = vmatprep.subr.mxu0 0.0
    %100 = vmatpush1.msra.mxu0 0.0
    %101 = vmatprep.subr.mxu0 0.0
    %102 = vmatpush1.msra.mxu0 0.0
    %103 = vmatprep.subr.mxu0 0.0
    %104 = vmatpush1.msra.mxu0 0.0
    %105 = vmatprep.subr.mxu0 0.0
    %106 = vmatpush1.msra.mxu0 %v81
    %107 = vmatprep.subr.mxu0 0.0
    %108 = vmatpush1.msra.mxu0 %v60
    %109 = vmatprep.subr.mxu0 0.0
    %110 = vmatpush1.msra.mxu0 %v59
    %111 = vmatprep.subr.mxu0 0.0
    %112 = vmatpush1.msra.mxu0 %v58
    %113 = vmatprep.subr.mxu0 0.0
    %114 = vmatpush1.msra.mxu0 %v57
    %115 = vmatprep.subr.mxu0 0.0
    %116 = vmatpush2.msra.mxu0 0.0
    %117 = vmatprep.subr.mxu0 0.0
    %118 = vmatpush2.msra.mxu0 0.0
    %119 = vmatprep.subr.mxu0 0.0
    %120 = vmatpush2.msra.mxu0 0.0
    %121 = vmatprep.subr.mxu0 0.0
    %122 = vmatpush2.msra.mxu0 0.0
    %123 = vmatprep.subr.mxu0 0.0
    %124 = vmatpush2.msra.mxu0 0.0
    %125 = vmatprep.subr.mxu0 0.0
    %126 = vmatpush2.msra.mxu0 0.0
    %127 = vmatprep.subr.mxu0 0.0
    %128 = vmatpush2.msra.mxu0 0.0
    %129 = vmatprep.subr.mxu0 0.0
    %130 = vmatpush2.msra.mxu0 0.0
    %131 = vmatprep.subr.mxu0 0.0
    %132 = vmatpush2.msra.mxu0 0.0
    %133 = vmatprep.subr.mxu0 0.0
    %134 = vmatpush2.msra.mxu0 0.0
    %135 = vmatprep.subr.mxu0 0.0
    %136 = vmatpush2.msra.mxu0 0.0
    %137 = vmatprep.subr.mxu0 0.0
    %138 = vmatpush2.msra.mxu0 0.0
    %139 = vmatprep.subr.mxu0 0.0
    %140 = vmatpush2.msra.mxu0 0.0
    %141 = vmatprep.subr.mxu0 0.0
    %142 = vmatpush2.msra.mxu0 0.0
    %143 = vmatprep.subr.mxu0 0.0
    %144 = vmatpush2.msra.mxu0 0.0
    %145 = vmatprep.subr.mxu0 0.0
    %146 = vmatpush2.msra.mxu0 0.0
    %147 = vmatprep.mubr.f32.mxu0 0.0
    %148 = vmatmul.mubr.f32.gmra.mxu0 %v68
    %v149 = vpop.f32.mrf.mxu0
    %v150 = vadd.f32 0.0, %v149
    %v151 = vpop.f32.mrf.mxu0
    %152 = vmatprep.mubr.f32.mxu0 0.0
    %153 = vmatmul.mubr.f32.gmra.mxu0 %v71
    %v154 = vpop.f32.mrf.mxu0
    %v155 = vadd.f32 0.0, %v154
    %v156 = vpop.f32.mrf.mxu0
    %157 = vmatprep.mubr.f32.mxu0 0.0
    %158 = vmatmul.mubr.f32.gmra.mxu0 %v74
    %v159 = vpop.f32.mrf.mxu0
    %v160 = vadd.f32 0.0, %v159
    %v161 = vpop.f32.mrf.mxu0
    %162 = vmatprep.mubr.f32.mxu0 0.0
    %163 = vmatmul.mubr.f32.gmra.mxu0 %v77
    %v164 = vpop.f32.mrf.mxu0
    %v165 = vadd.f32 0.0, %v164
    %v166 = vpop.f32.mrf.mxu0
    %167 = vdwg.mxu0
    %v168 = vld [vmem:[%s2] sm:$0xff]
    %v169 = vld [vmem:[%s2 + $0x8] sm:$0xff]
    %v170 = vld [vmem:[%s2 + $0x10] sm:$0xff]
    %v171 = vld [vmem:[%s2 + $0x18] sm:$0xff]
    %v172 = vld [vmem:[%s2 + $0x20] sm:$0xff]
    %v173 = vld [vmem:[%s2 + $0x28] sm:$0xff]
    %v174 = vld [vmem:[%s2 + $0x30] sm:$0xff]
    %v175 = vld [vmem:[%s2 + $0x38] sm:$0xff]
    %v176 = vld [vmem:[%s2 + $0x40] sm:$0xff]
    %s177 = scalar_lea.vmem %s1, 32
    %v178 = vld [vmem:[%s177] sm:$0xff]
    %v179 = vld [vmem:[%s177 + $0x8] sm:$0xff]
    %v180 = vld [vmem:[%s177 + $0x10] sm:$0xff]
    %v181 = vld [vmem:[%s177 + $0x18] sm:$0xff]
    %v183 = vsel %vm66, %v178, 0
    %v186 = vsel %vm66, %v179, 0
    %v189 = vsel %vm66, %v180, 0
    %v192 = vsel %vm66, %v181, 0
    %194 = vmatprep.subr.mxu0 0.0
    %195 = vmatpush1.msra.mxu0 0.0
    %196 = vmatprep.subr.mxu0 0.0
    %197 = vmatpush1.msra.mxu0 0.0
    %198 = vmatprep.subr.mxu0 0.0
    %199 = vmatpush1.msra.mxu0 0.0
    %200 = vmatprep.subr.mxu0 0.0
    %201 = vmatpush1.msra.mxu0 0.0
    %202 = vmatprep.subr.mxu0 0.0
    %203 = vmatpush1.msra.mxu0 0.0
    %204 = vmatprep.subr.mxu0 0.0
    %205 = vmatpush1.msra.mxu0 0.0
    %206 = vmatprep.subr.mxu0 0.0
    %207 = vmatpush1.msra.mxu0 0.0
    %208 = vmatprep.subr.mxu0 0.0
    %209 = vmatpush1.msra.mxu0 0.0
    %210 = vmatprep.subr.mxu0 0.0
    %211 = vmatpush1.msra.mxu0 0.0
    %212 = vmatprep.subr.mxu0 0.0
    %213 = vmatpush1.msra.mxu0 0.0
    %214 = vmatprep.subr.mxu0 0.0
    %215 = vmatpush1.msra.mxu0 0.0
    %216 = vmatprep.subr.mxu0 0.0
    %217 = vmatpush1.msra.mxu0 %v81
    %218 = vmatprep.subr.mxu0 0.0
    %219 = vmatpush1.msra.mxu0 %v60
    %220 = vmatprep.subr.mxu0 0.0
    %221 = vmatpush1.msra.mxu0 %v59
    %222 = vmatprep.subr.mxu0 0.0
    %223 = vmatpush1.msra.mxu0 %v58
    %224 = vmatprep.subr.mxu0 0.0
    %225 = vmatpush1.msra.mxu0 %v57
    %226 = vmatprep.subr.mxu0 0.0
    %227 = vmatpush2.msra.mxu0 0.0
    %228 = vmatprep.subr.mxu0 0.0
    %229 = vmatpush2.msra.mxu0 0.0
    %230 = vmatprep.subr.mxu0 0.0
    %231 = vmatpush2.msra.mxu0 0.0
    %232 = vmatprep.subr.mxu0 0.0
    %233 = vmatpush2.msra.mxu0 0.0
    %234 = vmatprep.subr.mxu0 0.0
    %235 = vmatpush2.msra.mxu0 0.0
    %236 = vmatprep.subr.mxu0 0.0
    %237 = vmatpush2.msra.mxu0 0.0
    %238 = vmatprep.subr.mxu0 0.0
    %239 = vmatpush2.msra.mxu0 0.0
    %240 = vmatprep.subr.mxu0 0.0
    %241 = vmatpush2.msra.mxu0 0.0
    %242 = vmatprep.subr.mxu0 0.0
    %243 = vmatpush2.msra.mxu0 0.0
    %244 = vmatprep.subr.mxu0 0.0
    %245 = vmatpush2.msra.mxu0 0.0
    %246 = vmatprep.subr.mxu0 0.0
    %247 = vmatpush2.msra.mxu0 0.0
    %248 = vmatprep.subr.mxu0 0.0
    %249 = vmatpush2.msra.mxu0 0.0
    %250 = vmatprep.subr.mxu0 0.0
    %251 = vmatpush2.msra.mxu0 0.0
    %252 = vmatprep.subr.mxu0 0.0
    %253 = vmatpush2.msra.mxu0 0.0
    %254 = vmatprep.subr.mxu0 0.0
    %255 = vmatpush2.msra.mxu0 0.0
    %256 = vmatprep.subr.mxu0 0.0
    %257 = vmatpush2.msra.mxu0 0.0
    %258 = vmatprep.mubr.f32.mxu0 0.0
    %259 = vmatmul.mubr.f32.gmra.mxu0 %v183
    %v260 = vpop.f32.mrf.mxu0
    %v261 = vadd.f32 0.0, %v260
    %v262 = vpop.f32.mrf.mxu0
    %263 = vmatprep.mubr.f32.mxu0 0.0
    %264 = vmatmul.mubr.f32.gmra.mxu0 %v186
    %v265 = vpop.f32.mrf.mxu0
    %v266 = vadd.f32 0.0, %v265
    %v267 = vpop.f32.mrf.mxu0
    %268 = vmatprep.mubr.f32.mxu0 0.0
    %269 = vmatmul.mubr.f32.gmra.mxu0 %v189
    %v270 = vpop.f32.mrf.mxu0
    %v271 = vadd.f32 0.0, %v270
    %v272 = vpop.f32.mrf.mxu0
    %273 = vmatprep.mubr.f32.mxu0 0.0
    %274 = vmatmul.mubr.f32.gmra.mxu0 %v192
    %v275 = vpop.f32.mrf.mxu0
    %v276 = vadd.f32 0.0, %v275
    %v277 = vpop.f32.mrf.mxu0
    %278 = vdwg.mxu0
    %s279 = scalar_lea.vmem %s2, 72
    %v280 = vld [vmem:[%s279] sm:$0xff]
    %v281 = vld [vmem:[%s279 + $0x8] sm:$0xff]
    %v282 = vld [vmem:[%s279 + $0x10] sm:$0xff]
    %v283 = vld [vmem:[%s279 + $0x18] sm:$0xff]
    %v284 = vld [vmem:[%s279 + $0x20] sm:$0xff]
    %v285 = vld [vmem:[%s279 + $0x28] sm:$0xff]
    %v286 = vld [vmem:[%s279 + $0x30] sm:$0xff]
    %v287 = vld [vmem:[%s279 + $0x38] sm:$0xff]
    %v288 = vld [vmem:[%s279 + $0x40] sm:$0xff]
    %vm289 = vcmask 588800
    %v291 = vsel %vm289, %v261, 0
    %v294 = vsel %vm289, %v266, 0
    %v297 = vsel %vm289, %v271, 0
    %v300 = vsel %vm289, %v276, 0
    %302 = vmatprep.subr.mxu0 0.0
    %303 = vmatpush1.msra.mxu0 0.0
    %304 = vmatprep.subr.mxu0 0.0
    %305 = vmatpush1.msra.mxu0 0.0
    %306 = vmatprep.subr.mxu0 0.0
    %307 = vmatpush1.msra.mxu0 0.0
    %308 = vmatprep.subr.mxu0 0.0
    %309 = vmatpush1.msra.mxu0 0.0
    %310 = vmatprep.subr.mxu0 0.0
    %311 = vmatpush1.msra.mxu0 0.0
    %312 = vmatprep.subr.mxu0 0.0
    %313 = vmatpush1.msra.mxu0 0.0
    %314 = vmatprep.subr.mxu0 0.0
    %315 = vmatpush1.msra.mxu0 0.0
    %316 = vmatprep.subr.mxu0 0.0
    %317 = vmatpush1.msra.mxu0 %v288
    %318 = vmatprep.subr.mxu0 0.0
    %319 = vmatpush1.msra.mxu0 %v287
    %320 = vmatprep.subr.mxu0 0.0
    %321 = vmatpush1.msra.mxu0 %v286
    %322 = vmatprep.subr.mxu0 0.0
    %323 = vmatpush1.msra.mxu0 %v285
    %324 = vmatprep.subr.mxu0 0.0
    %325 = vmatpush1.msra.mxu0 %v284
    %326 = vmatprep.subr.mxu0 0.0
    %327 = vmatpush1.msra.mxu0 %v283
    %328 = vmatprep.subr.mxu0 0.0
    %329 = vmatpush1.msra.mxu0 %v282
    %330 = vmatprep.subr.mxu0 0.0
    %331 = vmatpush1.msra.mxu0 %v281
    %332 = vmatprep.subr.mxu0 0.0
    %333 = vmatpush1.msra.mxu0 %v280
    %334 = vmatprep.subr.mxu0 0.0
    %335 = vmatpush2.msra.mxu0 0.0
    %336 = vmatprep.subr.mxu0 0.0
    %337 = vmatpush2.msra.mxu0 0.0
    %338 = vmatprep.subr.mxu0 0.0
    %339 = vmatpush2.msra.mxu0 0.0
    %340 = vmatprep.subr.mxu0 0.0
    %341 = vmatpush2.msra.mxu0 0.0
    %342 = vmatprep.subr.mxu0 0.0
    %343 = vmatpush2.msra.mxu0 0.0
    %344 = vmatprep.subr.mxu0 0.0
    %345 = vmatpush2.msra.mxu0 0.0
    %346 = vmatprep.subr.mxu0 0.0
    %347 = vmatpush2.msra.mxu0 0.0
    %348 = vmatprep.subr.mxu0 0.0
    %349 = vmatpush2.msra.mxu0 0.0
    %350 = vmatprep.subr.mxu0 0.0
    %351 = vmatpush2.msra.mxu0 0.0
    %352 = vmatprep.subr.mxu0 0.0
    %353 = vmatpush2.msra.mxu0 0.0
    %354 = vmatprep.subr.mxu0 0.0
    %355 = vmatpush2.msra.mxu0 0.0
    %356 = vmatprep.subr.mxu0 0.0
    %357 = vmatpush2.msra.mxu0 0.0
    %358 = vmatprep.subr.mxu0 0.0
    %359 = vmatpush2.msra.mxu0 0.0
    %360 = vmatprep.subr.mxu0 0.0
    %361 = vmatpush2.msra.mxu0 0.0
    %362 = vmatprep.subr.mxu0 0.0
    %363 = vmatpush2.msra.mxu0 0.0
    %364 = vmatprep.subr.mxu0 0.0
    %365 = vmatpush2.msra.mxu0 0.0
    %366 = vmatprep.mubr.f32.mxu0 0.0
    %367 = vmatmul.mubr.f32.gmra.mxu0 %v291
    %v368 = vpop.f32.mrf.mxu0
    %v369 = vadd.f32 0.0, %v368
    %v370 = vpop.f32.mrf.mxu0
    %371 = vmatprep.mubr.f32.mxu0 0.0
    %372 = vmatmul.mubr.f32.gmra.mxu0 %v294
    %v373 = vpop.f32.mrf.mxu0
    %v374 = vadd.f32 0.0, %v373
    %v375 = vpop.f32.mrf.mxu0
    %376 = vmatprep.mubr.f32.mxu0 0.0
    %377 = vmatmul.mubr.f32.gmra.mxu0 %v297
    %v378 = vpop.f32.mrf.mxu0
    %v379 = vadd.f32 0.0, %v378
    %v380 = vpop.f32.mrf.mxu0
    %381 = vmatprep.mubr.f32.mxu0 0.0
    %382 = vmatmul.mubr.f32.gmra.mxu0 %v300
    %v383 = vpop.f32.mrf.mxu0
    %v384 = vadd.f32 0.0, %v383
    %v385 = vpop.f32.mrf.mxu0
    %386 = vdwg.mxu0
    %v388 = vsel %vm289, %v150, 0
    %v391 = vsel %vm289, %v155, 0
    %v394 = vsel %vm289, %v160, 0
    %v397 = vsel %vm289, %v165, 0
    %399 = vmatprep.subr.mxu0 0.0
    %400 = vmatpush1.msra.mxu0 0.0
    %401 = vmatprep.subr.mxu0 0.0
    %402 = vmatpush1.msra.mxu0 0.0
    %403 = vmatprep.subr.mxu0 0.0
    %404 = vmatpush1.msra.mxu0 0.0
    %405 = vmatprep.subr.mxu0 0.0
    %406 = vmatpush1.msra.mxu0 0.0
    %407 = vmatprep.subr.mxu0 0.0
    %408 = vmatpush1.msra.mxu0 0.0
    %409 = vmatprep.subr.mxu0 0.0
    %410 = vmatpush1.msra.mxu0 0.0
    %411 = vmatprep.subr.mxu0 0.0
    %412 = vmatpush1.msra.mxu0 0.0
    %413 = vmatprep.subr.mxu0 0.0
    %414 = vmatpush1.msra.mxu0 %v176
    %415 = vmatprep.subr.mxu0 0.0
    %416 = vmatpush1.msra.mxu0 %v175
    %417 = vmatprep.subr.mxu0 0.0
    %418 = vmatpush1.msra.mxu0 %v174
    %419 = vmatprep.subr.mxu0 0.0
    %420 = vmatpush1.msra.mxu0 %v173
    %421 = vmatprep.subr.mxu0 0.0
    %422 = vmatpush1.msra.mxu0 %v172
    %423 = vmatprep.subr.mxu0 0.0
    %424 = vmatpush1.msra.mxu0 %v171
    %425 = vmatprep.subr.mxu0 0.0
    %426 = vmatpush1.msra.mxu0 %v170
    %427 = vmatprep.subr.mxu0 0.0
    %428 = vmatpush1.msra.mxu0 %v169
    %429 = vmatprep.subr.mxu0 0.0
    %430 = vmatpush1.msra.mxu0 %v168
    %431 = vmatprep.subr.mxu0 0.0
    %432 = vmatpush2.msra.mxu0 0.0
    %433 = vmatprep.subr.mxu0 0.0
    %434 = vmatpush2.msra.mxu0 0.0
    %435 = vmatprep.subr.mxu0 0.0
    %436 = vmatpush2.msra.mxu0 0.0
    %437 = vmatprep.subr.mxu0 0.0
    %438 = vmatpush2.msra.mxu0 0.0
    %439 = vmatprep.subr.mxu0 0.0
    %440 = vmatpush2.msra.mxu0 0.0
    %441 = vmatprep.subr.mxu0 0.0
    %442 = vmatpush2.msra.mxu0 0.0
    %443 = vmatprep.subr.mxu0 0.0
    %444 = vmatpush2.msra.mxu0 0.0
    %445 = vmatprep.subr.mxu0 0.0
    %446 = vmatpush2.msra.mxu0 0.0
    %447 = vmatprep.subr.mxu0 0.0
    %448 = vmatpush2.msra.mxu0 0.0
    %449 = vmatprep.subr.mxu0 0.0
    %450 = vmatpush2.msra.mxu0 0.0
    %451 = vmatprep.subr.mxu0 0.0
    %452 = vmatpush2.msra.mxu0 0.0
    %453 = vmatprep.subr.mxu0 0.0
    %454 = vmatpush2.msra.mxu0 0.0
    %455 = vmatprep.subr.mxu0 0.0
    %456 = vmatpush2.msra.mxu0 0.0
    %457 = vmatprep.subr.mxu0 0.0
    %458 = vmatpush2.msra.mxu0 0.0
    %459 = vmatprep.subr.mxu0 0.0
    %460 = vmatpush2.msra.mxu0 0.0
    %461 = vmatprep.subr.mxu0 0.0
    %462 = vmatpush2.msra.mxu0 0.0
    %463 = vmatprep.mubr.f32.mxu0 0.0
    %464 = vmatmul.mubr.f32.gmra.mxu0 %v388
    %v465 = vpop.f32.mrf.mxu0
    %v466 = vadd.f32 %v369, %v465
    %v467 = vpop.f32.mrf.mxu0
    %468 = vmatprep.mubr.f32.mxu0 0.0
    %469 = vmatmul.mubr.f32.gmra.mxu0 %v391
    %v470 = vpop.f32.mrf.mxu0
    %v471 = vadd.f32 %v374, %v470
    %v472 = vpop.f32.mrf.mxu0
    %473 = vmatprep.mubr.f32.mxu0 0.0
    %474 = vmatmul.mubr.f32.gmra.mxu0 %v394
    %v475 = vpop.f32.mrf.mxu0
    %v476 = vadd.f32 %v379, %v475
    %v477 = vpop.f32.mrf.mxu0
    %478 = vmatprep.mubr.f32.mxu0 0.0
    %479 = vmatmul.mubr.f32.gmra.mxu0 %v397
    %v480 = vpop.f32.mrf.mxu0
    %v481 = vadd.f32 %v384, %v480
    %v482 = vpop.f32.mrf.mxu0
    %483 = vdwg.mxu0
    %s484 = scalar_lea.vmem %s1, 64
    %v485 = vld [vmem:[%s484] sm:$0xff]
    %v486 = vld [vmem:[%s484 + $0x8] sm:$0xff]
    %v487 = vld [vmem:[%s484 + $0x10] sm:$0xff]
    %v488 = vld [vmem:[%s484 + $0x18] sm:$0xff]
    %v490 = vsel %vm66, %v485, 0
    %v493 = vsel %vm66, %v486, 0
    %v496 = vsel %vm66, %v487, 0
    %v499 = vsel %vm66, %v488, 0
    %501 = vmatprep.subr.mxu0 0.0
    %502 = vmatpush1.msra.mxu0 0.0
    %503 = vmatprep.subr.mxu0 0.0
    %504 = vmatpush1.msra.mxu0 0.0
    %505 = vmatprep.subr.mxu0 0.0
    %506 = vmatpush1.msra.mxu0 0.0
    %507 = vmatprep.subr.mxu0 0.0
    %508 = vmatpush1.msra.mxu0 0.0
    %509 = vmatprep.subr.mxu0 0.0
    %510 = vmatpush1.msra.mxu0 0.0
    %511 = vmatprep.subr.mxu0 0.0
    %512 = vmatpush1.msra.mxu0 0.0
    %513 = vmatprep.subr.mxu0 0.0
    %514 = vmatpush1.msra.mxu0 0.0
    %515 = vmatprep.subr.mxu0 0.0
    %516 = vmatpush1.msra.mxu0 0.0
    %517 = vmatprep.subr.mxu0 0.0
    %518 = vmatpush1.msra.mxu0 0.0
    %519 = vmatprep.subr.mxu0 0.0
    %520 = vmatpush1.msra.mxu0 0.0
    %521 = vmatprep.subr.mxu0 0.0
    %522 = vmatpush1.msra.mxu0 0.0
    %523 = vmatprep.subr.mxu0 0.0
    %524 = vmatpush1.msra.mxu0 %v81
    %525 = vmatprep.subr.mxu0 0.0
    %526 = vmatpush1.msra.mxu0 %v60
    %527 = vmatprep.subr.mxu0 0.0
    %528 = vmatpush1.msra.mxu0 %v59
    %529 = vmatprep.subr.mxu0 0.0
    %530 = vmatpush1.msra.mxu0 %v58
    %531 = vmatprep.subr.mxu0 0.0
    %532 = vmatpush1.msra.mxu0 %v57
    %533 = vmatprep.subr.mxu0 0.0
    %534 = vmatpush2.msra.mxu0 0.0
    %535 = vmatprep.subr.mxu0 0.0
    %536 = vmatpush2.msra.mxu0 0.0
    %537 = vmatprep.subr.mxu0 0.0
    %538 = vmatpush2.msra.mxu0 0.0
    %539 = vmatprep.subr.mxu0 0.0
    %540 = vmatpush2.msra.mxu0 0.0
    %541 = vmatprep.subr.mxu0 0.0
    %542 = vmatpush2.msra.mxu0 0.0
    %543 = vmatprep.subr.mxu0 0.0
    %544 = vmatpush2.msra.mxu0 0.0
    %545 = vmatprep.subr.mxu0 0.0
    %546 = vmatpush2.msra.mxu0 0.0
    %547 = vmatprep.subr.mxu0 0.0
    %548 = vmatpush2.msra.mxu0 0.0
    %549 = vmatprep.subr.mxu0 0.0
    %550 = vmatpush2.msra.mxu0 0.0
    %551 = vmatprep.subr.mxu0 0.0
    %552 = vmatpush2.msra.mxu0 0.0
    %553 = vmatprep.subr.mxu0 0.0
    %554 = vmatpush2.msra.mxu0 0.0
    %555 = vmatprep.subr.mxu0 0.0
    %556 = vmatpush2.msra.mxu0 0.0
    %557 = vmatprep.subr.mxu0 0.0
    %558 = vmatpush2.msra.mxu0 0.0
    %559 = vmatprep.subr.mxu0 0.0
    %560 = vmatpush2.msra.mxu0 0.0
    %561 = vmatprep.subr.mxu0 0.0
    %562 = vmatpush2.msra.mxu0 0.0
    %563 = vmatprep.subr.mxu0 0.0
    %564 = vmatpush2.msra.mxu0 0.0
    %565 = vmatprep.mubr.f32.mxu0 0.0
    %566 = vmatmul.mubr.f32.gmra.mxu0 %v490
    %v567 = vpop.f32.mrf.mxu0
    %v568 = vadd.f32 0.0, %v567
    %v569 = vpop.f32.mrf.mxu0
    %570 = vmatprep.mubr.f32.mxu0 0.0
    %571 = vmatmul.mubr.f32.gmra.mxu0 %v493
    %v572 = vpop.f32.mrf.mxu0
    %v573 = vadd.f32 0.0, %v572
    %v574 = vpop.f32.mrf.mxu0
    %575 = vmatprep.mubr.f32.mxu0 0.0
    %576 = vmatmul.mubr.f32.gmra.mxu0 %v496
    %v577 = vpop.f32.mrf.mxu0
    %v578 = vadd.f32 0.0, %v577
    %v579 = vpop.f32.mrf.mxu0
    %580 = vmatprep.mubr.f32.mxu0 0.0
    %581 = vmatmul.mubr.f32.gmra.mxu0 %v499
    %v582 = vpop.f32.mrf.mxu0
    %v583 = vadd.f32 0.0, %v582
    %v584 = vpop.f32.mrf.mxu0
    %585 = vdwg.mxu0
    %s586 = scalar_lea.vmem %s2, 144
    %v587 = vld [vmem:[%s586] sm:$0xff]
    %v588 = vld [vmem:[%s586 + $0x8] sm:$0xff]
    %v589 = vld [vmem:[%s586 + $0x10] sm:$0xff]
    %v590 = vld [vmem:[%s586 + $0x18] sm:$0xff]
    %v591 = vld [vmem:[%s586 + $0x20] sm:$0xff]
    %v592 = vld [vmem:[%s586 + $0x28] sm:$0xff]
    %v593 = vld [vmem:[%s586 + $0x30] sm:$0xff]
    %v594 = vld [vmem:[%s586 + $0x38] sm:$0xff]
    %v595 = vld [vmem:[%s586 + $0x40] sm:$0xff]
    %v597 = vsel %vm289, %v568, 0
    %v600 = vsel %vm289, %v573, 0
    %v603 = vsel %vm289, %v578, 0
    %v606 = vsel %vm289, %v583, 0
    %608 = vmatprep.subr.mxu0 0.0
    %609 = vmatpush1.msra.mxu0 0.0
    %610 = vmatprep.subr.mxu0 0.0
    %611 = vmatpush1.msra.mxu0 0.0
    %612 = vmatprep.subr.mxu0 0.0
    %613 = vmatpush1.msra.mxu0 0.0
    %614 = vmatprep.subr.mxu0 0.0
    %615 = vmatpush1.msra.mxu0 0.0
    %616 = vmatprep.subr.mxu0 0.0
    %617 = vmatpush1.msra.mxu0 0.0
    %618 = vmatprep.subr.mxu0 0.0
    %619 = vmatpush1.msra.mxu0 0.0
    %620 = vmatprep.subr.mxu0 0.0
    %621 = vmatpush1.msra.mxu0 0.0
    %622 = vmatprep.subr.mxu0 0.0
    %623 = vmatpush1.msra.mxu0 %v595
    %624 = vmatprep.subr.mxu0 0.0
    %625 = vmatpush1.msra.mxu0 %v594
    %626 = vmatprep.subr.mxu0 0.0
    %627 = vmatpush1.msra.mxu0 %v593
    %628 = vmatprep.subr.mxu0 0.0
    %629 = vmatpush1.msra.mxu0 %v592
    %630 = vmatprep.subr.mxu0 0.0
    %631 = vmatpush1.msra.mxu0 %v591
    %632 = vmatprep.subr.mxu0 0.0
    %633 = vmatpush1.msra.mxu0 %v590
    %634 = vmatprep.subr.mxu0 0.0
    %635 = vmatpush1.msra.mxu0 %v589
    %636 = vmatprep.subr.mxu0 0.0
    %637 = vmatpush1.msra.mxu0 %v588
    %638 = vmatprep.subr.mxu0 0.0
    %639 = vmatpush1.msra.mxu0 %v587
    %640 = vmatprep.subr.mxu0 0.0
    %641 = vmatpush2.msra.mxu0 0.0
    %642 = vmatprep.subr.mxu0 0.0
    %643 = vmatpush2.msra.mxu0 0.0
    %644 = vmatprep.subr.mxu0 0.0
    %645 = vmatpush2.msra.mxu0 0.0
    %646 = vmatprep.subr.mxu0 0.0
    %647 = vmatpush2.msra.mxu0 0.0
    %648 = vmatprep.subr.mxu0 0.0
    %649 = vmatpush2.msra.mxu0 0.0
    %650 = vmatprep.subr.mxu0 0.0
    %651 = vmatpush2.msra.mxu0 0.0
    %652 = vmatprep.subr.mxu0 0.0
    %653 = vmatpush2.msra.mxu0 0.0
    %654 = vmatprep.subr.mxu0 0.0
    %655 = vmatpush2.msra.mxu0 0.0
    %656 = vmatprep.subr.mxu0 0.0
    %657 = vmatpush2.msra.mxu0 0.0
    %658 = vmatprep.subr.mxu0 0.0
    %659 = vmatpush2.msra.mxu0 0.0
    %660 = vmatprep.subr.mxu0 0.0
    %661 = vmatpush2.msra.mxu0 0.0
    %662 = vmatprep.subr.mxu0 0.0
    %663 = vmatpush2.msra.mxu0 0.0
    %664 = vmatprep.subr.mxu0 0.0
    %665 = vmatpush2.msra.mxu0 0.0
    %666 = vmatprep.subr.mxu0 0.0
    %667 = vmatpush2.msra.mxu0 0.0
    %668 = vmatprep.subr.mxu0 0.0
    %669 = vmatpush2.msra.mxu0 0.0
    %670 = vmatprep.subr.mxu0 0.0
    %671 = vmatpush2.msra.mxu0 0.0
    %672 = vmatprep.mubr.f32.mxu0 0.0
    %673 = vmatmul.mubr.f32.gmra.mxu0 %v597
    %v674 = vpop.f32.mrf.mxu0
    %v675 = vadd.f32 0.0, %v674
    %v676 = vpop.f32.mrf.mxu0
    %677 = vmatprep.mubr.f32.mxu0 0.0
    %678 = vmatmul.mubr.f32.gmra.mxu0 %v600
    %v679 = vpop.f32.mrf.mxu0
    %v680 = vadd.f32 0.0, %v679
    %v681 = vpop.f32.mrf.mxu0
    %682 = vmatprep.mubr.f32.mxu0 0.0
    %683 = vmatmul.mubr.f32.gmra.mxu0 %v603
    %v684 = vpop.f32.mrf.mxu0
    %v685 = vadd.f32 0.0, %v684
    %v686 = vpop.f32.mrf.mxu0
    %687 = vmatprep.mubr.f32.mxu0 0.0
    %688 = vmatmul.mubr.f32.gmra.mxu0 %v606
    %v689 = vpop.f32.mrf.mxu0
    %v690 = vadd.f32 0.0, %v689
    %v691 = vpop.f32.mrf.mxu0
    %692 = vdwg.mxu0
    %v693 = vadd.f32 %v466, %v675
    %v694 = vadd.f32 %v471, %v680
    %v695 = vadd.f32 %v476, %v685
    %v696 = vadd.f32 %v481, %v690
    %v697 = vld [vmem:[%s3] sm:$0x1]
    %v699 = vlaneseq
    %v700 = vshrl.u32 %v699, 7
    %v701 = vsub.s32 0, %v700
    %v702 = vrot.slane %v697, %v701
    %v704 = vadd.f32 %v693, %v702
    %v705 = vadd.f32 %v694, %v702
    %v706 = vadd.f32 %v695, %v702
    %v707 = vadd.f32 %v696, %v702
    %v708 = vadd.f32 %v704, %v705
    %v709 = vadd.f32 %v708, %v706
    %v710 = vadd.f32 %v709, %v707
    %v711 = vrot.slane %v710, 4
    %v712 = vadd.f32 %v710, %v711
    %v713 = vrot.slane %v712, 2
    %v714 = vadd.f32 %v712, %v713
    %v715 = vrot.slane %v714, 1
    %v716 = vadd.f32 %v714, %v715
    %v717 = vmul.f32 %v704, %v704
    %v718 = vmul.f32 %v705, %v705
    %v719 = vmul.f32 %v706, %v706
    %v720 = vmul.f32 %v707, %v707
    %v721 = vadd.f32 %v717, %v718
    %v722 = vadd.f32 %v721, %v719
    %v723 = vadd.f32 %v722, %v720
    %v724 = vrot.slane %v723, 4
    %v725 = vadd.f32 %v723, %v724
    %v726 = vrot.slane %v725, 2
    %v727 = vadd.f32 %v725, %v726
    %v728 = vrot.slane %v727, 1
    %v729 = vadd.f32 %v727, %v728
    %v730 = vld [vmem:[%s6] sm:$0xff]
    %v731 = vld [vmem:[%s6 + $0x8] sm:$0xff]
    %v732 = vld [vmem:[%s6 + $0x10] sm:$0xff]
    %v733 = vld [vmem:[%s6 + $0x18] sm:$0xff]
    %v734 = vld [vmem:[%s6 + $0x20] sm:$0xff]
    %v735 = vld [vmem:[%s6 + $0x28] sm:$0xff]
    %v736 = vld [vmem:[%s6 + $0x30] sm:$0xff]
    %v737 = vld [vmem:[%s6 + $0x38] sm:$0xff]
    %v738 = vld [vmem:[%s6 + $0x40] sm:$0xff]
    %v739 = vld [vmem:[%s6 + $0x48] sm:$0xff]
    %v740 = vld [vmem:[%s6 + $0x50] sm:$0xff]
    %v741 = vld [vmem:[%s6 + $0x58] sm:$0xff]
    %v742 = vld [vmem:[%s6 + $0x60] sm:$0xff]
    %v743 = vld [vmem:[%s6 + $0x68] sm:$0xff]
    %v744 = vld [vmem:[%s6 + $0x70] sm:$0xff]
    %v745 = vld [vmem:[%s6 + $0x78] sm:$0xff]
    %746 = vmatprep.subr.mxu0 0.0
    %747 = vmatpush1.msra.mxu0 %v745
    %748 = vmatprep.subr.mxu0 0.0
    %749 = vmatpush1.msra.mxu0 %v744
    %750 = vmatprep.subr.mxu0 0.0
    %751 = vmatpush1.msra.mxu0 %v743
    %752 = vmatprep.subr.mxu0 0.0
    %753 = vmatpush1.msra.mxu0 %v742
    %754 = vmatprep.subr.mxu0 0.0
    %755 = vmatpush1.msra.mxu0 %v741
    %756 = vmatprep.subr.mxu0 0.0
    %757 = vmatpush1.msra.mxu0 %v740
    %758 = vmatprep.subr.mxu0 0.0
    %759 = vmatpush1.msra.mxu0 %v739
    %760 = vmatprep.subr.mxu0 0.0
    %761 = vmatpush1.msra.mxu0 %v738
    %762 = vmatprep.subr.mxu0 0.0
    %763 = vmatpush1.msra.mxu0 %v737
    %764 = vmatprep.subr.mxu0 0.0
    %765 = vmatpush1.msra.mxu0 %v736
    %766 = vmatprep.subr.mxu0 0.0
    %767 = vmatpush1.msra.mxu0 %v735
    %768 = vmatprep.subr.mxu0 0.0
    %769 = vmatpush1.msra.mxu0 %v734
    %770 = vmatprep.subr.mxu0 0.0
    %771 = vmatpush1.msra.mxu0 %v733
    %772 = vmatprep.subr.mxu0 0.0
    %773 = vmatpush1.msra.mxu0 %v732
    %774 = vmatprep.subr.mxu0 0.0
    %775 = vmatpush1.msra.mxu0 %v731
    %776 = vmatprep.subr.mxu0 0.0
    %777 = vmatpush1.msra.mxu0 %v730
    %778 = vmatprep.subr.mxu0 0.0
    %779 = vmatpush2.msra.mxu0 0.0
    %780 = vmatprep.subr.mxu0 0.0
    %781 = vmatpush2.msra.mxu0 0.0
    %782 = vmatprep.subr.mxu0 0.0
    %783 = vmatpush2.msra.mxu0 0.0
    %784 = vmatprep.subr.mxu0 0.0
    %785 = vmatpush2.msra.mxu0 0.0
    %786 = vmatprep.subr.mxu0 0.0
    %787 = vmatpush2.msra.mxu0 0.0
    %788 = vmatprep.subr.mxu0 0.0
    %789 = vmatpush2.msra.mxu0 0.0
    %790 = vmatprep.subr.mxu0 0.0
    %791 = vmatpush2.msra.mxu0 0.0
    %792 = vmatprep.subr.mxu0 0.0
    %793 = vmatpush2.msra.mxu0 0.0
    %794 = vmatprep.subr.mxu0 0.0
    %795 = vmatpush2.msra.mxu0 0.0
    %796 = vmatprep.subr.mxu0 0.0
    %797 = vmatpush2.msra.mxu0 0.0
    %798 = vmatprep.subr.mxu0 0.0
    %799 = vmatpush2.msra.mxu0 0.0
    %800 = vmatprep.subr.mxu0 0.0
    %801 = vmatpush2.msra.mxu0 0.0
    %802 = vmatprep.subr.mxu0 0.0
    %803 = vmatpush2.msra.mxu0 0.0
    %804 = vmatprep.subr.mxu0 0.0
    %805 = vmatpush2.msra.mxu0 0.0
    %806 = vmatprep.subr.mxu0 0.0
    %807 = vmatpush2.msra.mxu0 0.0
    %808 = vmatprep.subr.mxu0 0.0
    %809 = vmatpush2.msra.mxu0 0.0
    %810 = vmatprep.mubr.f32.mxu0 0.0
    %811 = vmatmul.mubr.f32.gmra.mxu0 %v716
    %v812 = vpop.f32.mrf.mxu0
    %v813 = vadd.f32 0.0, %v812
    %v814 = vpop.f32.mrf.mxu0
    %815 = vdwg.mxu0
    %v816 = vmul.f32 %v813, 0.001953125
    %817 = vmatprep.subr.mxu0 0.0
    %818 = vmatpush1.msra.mxu0 %v745
    %819 = vmatprep.subr.mxu0 0.0
    %820 = vmatpush1.msra.mxu0 %v744
    %821 = vmatprep.subr.mxu0 0.0
    %822 = vmatpush1.msra.mxu0 %v743
    %823 = vmatprep.subr.mxu0 0.0
    %824 = vmatpush1.msra.mxu0 %v742
    %825 = vmatprep.subr.mxu0 0.0
    %826 = vmatpush1.msra.mxu0 %v741
    %827 = vmatprep.subr.mxu0 0.0
    %828 = vmatpush1.msra.mxu0 %v740
    %829 = vmatprep.subr.mxu0 0.0
    %830 = vmatpush1.msra.mxu0 %v739
    %831 = vmatprep.subr.mxu0 0.0
    %832 = vmatpush1.msra.mxu0 %v738
    %833 = vmatprep.subr.mxu0 0.0
    %834 = vmatpush1.msra.mxu0 %v737
    %835 = vmatprep.subr.mxu0 0.0
    %836 = vmatpush1.msra.mxu0 %v736
    %837 = vmatprep.subr.mxu0 0.0
    %838 = vmatpush1.msra.mxu0 %v735
    %839 = vmatprep.subr.mxu0 0.0
    %840 = vmatpush1.msra.mxu0 %v734
    %841 = vmatprep.subr.mxu0 0.0
    %842 = vmatpush1.msra.mxu0 %v733
    %843 = vmatprep.subr.mxu0 0.0
    %844 = vmatpush1.msra.mxu0 %v732
    %845 = vmatprep.subr.mxu0 0.0
    %846 = vmatpush1.msra.mxu0 %v731
    %847 = vmatprep.subr.mxu0 0.0
    %848 = vmatpush1.msra.mxu0 %v730
    %849 = vmatprep.subr.mxu0 0.0
    %850 = vmatpush2.msra.mxu0 0.0
    %851 = vmatprep.subr.mxu0 0.0
    %852 = vmatpush2.msra.mxu0 0.0
    %853 = vmatprep.subr.mxu0 0.0
    %854 = vmatpush2.msra.mxu0 0.0
    %855 = vmatprep.subr.mxu0 0.0
    %856 = vmatpush2.msra.mxu0 0.0
    %857 = vmatprep.subr.mxu0 0.0
    %858 = vmatpush2.msra.mxu0 0.0
    %859 = vmatprep.subr.mxu0 0.0
    %860 = vmatpush2.msra.mxu0 0.0
    %861 = vmatprep.subr.mxu0 0.0
    %862 = vmatpush2.msra.mxu0 0.0
    %863 = vmatprep.subr.mxu0 0.0
    %864 = vmatpush2.msra.mxu0 0.0
    %865 = vmatprep.subr.mxu0 0.0
    %866 = vmatpush2.msra.mxu0 0.0
    %867 = vmatprep.subr.mxu0 0.0
    %868 = vmatpush2.msra.mxu0 0.0
    %869 = vmatprep.subr.mxu0 0.0
    %870 = vmatpush2.msra.mxu0 0.0
    %871 = vmatprep.subr.mxu0 0.0
    %872 = vmatpush2.msra.mxu0 0.0
    %873 = vmatprep.subr.mxu0 0.0
    %874 = vmatpush2.msra.mxu0 0.0
    %875 = vmatprep.subr.mxu0 0.0
    %876 = vmatpush2.msra.mxu0 0.0
    %877 = vmatprep.subr.mxu0 0.0
    %878 = vmatpush2.msra.mxu0 0.0
    %879 = vmatprep.subr.mxu0 0.0
    %880 = vmatpush2.msra.mxu0 0.0
    %881 = vmatprep.mubr.f32.mxu0 0.0
    %882 = vmatmul.mubr.f32.gmra.mxu0 %v729
    %v883 = vpop.f32.mrf.mxu0
    %v884 = vadd.f32 0.0, %v883
    %v885 = vpop.f32.mrf.mxu0
    %886 = vdwg.mxu0
    %v887 = vmul.f32 %v884, 0.001953125
    %v888 = vmul.f32 %v816, %v816
    %v889 = vsub.f32 %v887, %v888
    %v890 = vlaneseq
    %v891 = vshrl.u32 %v890, 7
    %v892 = vsub.s32 0, %v891
    %v893 = vrot.slane %v816, %v892
    %v894 = vsub.f32 %v704, %v893
    %v895 = vsub.f32 %v705, %v893
    %v896 = vsub.f32 %v706, %v893
    %v897 = vsub.f32 %v707, %v893
    %v898 = vadd.f32 %v889, 1e-05
    %v899 = vrsqrt.pop %v898
    %v900 = vld [vmem:[%s4] sm:$0x1]
    %v901 = vmul.f32 %v899, %v900
    %v902 = vlaneseq
    %v903 = vshrl.u32 %v902, 7
    %v904 = vsub.s32 0, %v903
    %v905 = vrot.slane %v901, %v904
    %v906 = vmul.f32 %v894, %v905
    %v907 = vmul.f32 %v895, %v905
    %v908 = vmul.f32 %v896, %v905
    %v909 = vmul.f32 %v897, %v905
    %v910 = vld [vmem:[%s5] sm:$0x1]
    %v912 = vlaneseq
    %v913 = vshrl.u32 %v912, 7
    %v914 = vsub.s32 0, %v913
    %v915 = vrot.slane %v910, %v914
    %v917 = vadd.f32 %v906, %v915
    %v918 = vadd.f32 %v907, %v915
    %v919 = vadd.f32 %v908, %v915
    %v920 = vadd.f32 %v909, %v915
    %v921 = vmax.f32 %v917, 0.0
    %v922 = vmax.f32 %v918, 0.0
    %v923 = vmax.f32 %v919, 0.0
    %v924 = vmax.f32 %v920, 0.0
    %v925 = vld [vmem:[%s7] sm:$0xff]
    %v926 = vld [vmem:[%s7 + $0x8] sm:$0xff]
    %v927 = vld [vmem:[%s7 + $0x10] sm:$0xff]
    %v928 = vld [vmem:[%s7 + $0x18] sm:$0xff]
    %v929 = vld [vmem:[%s7 + $0x20] sm:$0xff]
    %v930 = vld [vmem:[%s7 + $0x28] sm:$0xff]
    %v931 = vld [vmem:[%s7 + $0x30] sm:$0xff]
    %v932 = vld [vmem:[%s7 + $0x38] sm:$0xff]
    %v933 = vld [vmem:[%s7 + $0x40] sm:$0xff]
    %v934 = vld [vmem:[%s7 + $0x48] sm:$0xff]
    %v935 = vld [vmem:[%s7 + $0x50] sm:$0xff]
    %v936 = vld [vmem:[%s7 + $0x58] sm:$0xff]
    %v937 = vld [vmem:[%s7 + $0x60] sm:$0xff]
    %v938 = vld [vmem:[%s7 + $0x68] sm:$0xff]
    %v939 = vld [vmem:[%s7 + $0x70] sm:$0xff]
    %v940 = vld [vmem:[%s7 + $0x78] sm:$0xff]
    %941 = vmatprep.subr.mxu0 0.0
    %942 = vmatpush1.msra.mxu0 %v940
    %943 = vmatprep.subr.mxu0 0.0
    %944 = vmatpush1.msra.mxu0 %v939
    %945 = vmatprep.subr.mxu0 0.0
    %946 = vmatpush1.msra.mxu0 %v938
    %947 = vmatprep.subr.mxu0 0.0
    %948 = vmatpush1.msra.mxu0 %v937
    %949 = vmatprep.subr.mxu0 0.0
    %950 = vmatpush1.msra.mxu0 %v936
    %951 = vmatprep.subr.mxu0 0.0
    %952 = vmatpush1.msra.mxu0 %v935
    %953 = vmatprep.subr.mxu0 0.0
    %954 = vmatpush1.msra.mxu0 %v934
    %955 = vmatprep.subr.mxu0 0.0
    %956 = vmatpush1.msra.mxu0 %v933
    %957 = vmatprep.subr.mxu0 0.0
    %958 = vmatpush1.msra.mxu0 %v932
    %959 = vmatprep.subr.mxu0 0.0
    %960 = vmatpush1.msra.mxu0 %v931
    %961 = vmatprep.subr.mxu0 0.0
    %962 = vmatpush1.msra.mxu0 %v930
    %963 = vmatprep.subr.mxu0 0.0
    %964 = vmatpush1.msra.mxu0 %v929
    %965 = vmatprep.subr.mxu0 0.0
    %966 = vmatpush1.msra.mxu0 %v928
    %967 = vmatprep.subr.mxu0 0.0
    %968 = vmatpush1.msra.mxu0 %v927
    %969 = vmatprep.subr.mxu0 0.0
    %970 = vmatpush1.msra.mxu0 %v926
    %971 = vmatprep.subr.mxu0 0.0
    %972 = vmatpush1.msra.mxu0 %v925
    %973 = vmatprep.subr.mxu0 0.0
    %974 = vmatpush2.msra.mxu0 0.0
    %975 = vmatprep.subr.mxu0 0.0
    %976 = vmatpush2.msra.mxu0 0.0
    %977 = vmatprep.subr.mxu0 0.0
    %978 = vmatpush2.msra.mxu0 0.0
    %979 = vmatprep.subr.mxu0 0.0
    %980 = vmatpush2.msra.mxu0 0.0
    %981 = vmatprep.subr.mxu0 0.0
    %982 = vmatpush2.msra.mxu0 0.0
    %983 = vmatprep.subr.mxu0 0.0
    %984 = vmatpush2.msra.mxu0 0.0
    %985 = vmatprep.subr.mxu0 0.0
    %986 = vmatpush2.msra.mxu0 0.0
    %987 = vmatprep.subr.mxu0 0.0
    %988 = vmatpush2.msra.mxu0 0.0
    %989 = vmatprep.subr.mxu0 0.0
    %990 = vmatpush2.msra.mxu0 0.0
    %991 = vmatprep.subr.mxu0 0.0
    %992 = vmatpush2.msra.mxu0 0.0
    %993 = vmatprep.subr.mxu0 0.0
    %994 = vmatpush2.msra.mxu0 0.0
    %995 = vmatprep.subr.mxu0 0.0
    %996 = vmatpush2.msra.mxu0 0.0
    %997 = vmatprep.subr.mxu0 0.0
    %998 = vmatpush2.msra.mxu0 0.0
    %999 = vmatprep.subr.mxu0 0.0
    %1000 = vmatpush2.msra.mxu0 0.0
    %1001 = vmatprep.subr.mxu0 0.0
    %1002 = vmatpush2.msra.mxu0 0.0
    %1003 = vmatprep.subr.mxu0 0.0
    %1004 = vmatpush2.msra.mxu0 0.0
    %1005 = vmatprep.mubr.f32.mxu0 0.0
    %1006 = vmatmul.mubr.f32.gmra.mxu0 %v921
    %v1007 = vpop.f32.mrf.mxu0
    %v1008 = vadd.f32 0.0, %v1007
    %v1009 = vpop.f32.mrf.mxu0
    %1010 = vmatprep.mubr.f32.mxu0 0.0
    %1011 = vmatmul.mubr.f32.gmra.mxu0 %v922
    %v1012 = vpop.f32.mrf.mxu0
    %v1013 = vadd.f32 0.0, %v1012
    %v1014 = vpop.f32.mrf.mxu0
    %1015 = vmatprep.mubr.f32.mxu0 0.0
    %1016 = vmatmul.mubr.f32.gmra.mxu0 %v923
    %v1017 = vpop.f32.mrf.mxu0
    %v1018 = vadd.f32 0.0, %v1017
    %v1019 = vpop.f32.mrf.mxu0
    %1020 = vmatprep.mubr.f32.mxu0 0.0
    %1021 = vmatmul.mubr.f32.gmra.mxu0 %v924
    %v1022 = vpop.f32.mrf.mxu0
    %v1023 = vadd.f32 0.0, %v1022
    %v1024 = vpop.f32.mrf.mxu0
    %1025 = vdwg.mxu0
    %v1026 = vmax.f32 %v921, %v1008
    %v1027 = vmax.f32 %v922, %v1013
    %v1028 = vmax.f32 %v923, %v1018
    %v1029 = vmax.f32 %v924, %v1023
    %v1030 = vld [vmem:[%s8] sm:$0xff]
    %v1031 = vld [vmem:[%s8 + $0x8] sm:$0xff]
    %v1032 = vld [vmem:[%s8 + $0x10] sm:$0xff]
    %v1033 = vld [vmem:[%s8 + $0x18] sm:$0xff]
    %vm1034 = vcmask 261120
    %v1036 = vsel %vm1034, %v1030, 0
    %v1039 = vsel %vm1034, %v1031, 0
    %v1042 = vsel %vm1034, %v1032, 0
    %v1045 = vsel %vm1034, %v1033, 0
    %1047 = vmatprep.subr.mxu0 0.0
    %1048 = vmatpush1.msra.mxu0 0.0
    %1049 = vmatprep.subr.mxu0 0.0
    %1050 = vmatpush1.msra.mxu0 0.0
    %1051 = vmatprep.subr.mxu0 0.0
    %1052 = vmatpush1.msra.mxu0 0.0
    %1053 = vmatprep.subr.mxu0 0.0
    %1054 = vmatpush1.msra.mxu0 0.0
    %1055 = vmatprep.subr.mxu0 0.0
    %1056 = vmatpush1.msra.mxu0 0.0
    %1057 = vmatprep.subr.mxu0 0.0
    %1058 = vmatpush1.msra.mxu0 0.0
    %1059 = vmatprep.subr.mxu0 0.0
    %1060 = vmatpush1.msra.mxu0 0.0
    %1061 = vmatprep.subr.mxu0 0.0
    %1062 = vmatpush1.msra.mxu0 0.0
    %1063 = vmatprep.subr.mxu0 0.0
    %1064 = vmatpush1.msra.mxu0 0.0
    %1065 = vmatprep.subr.mxu0 0.0
    %1066 = vmatpush1.msra.mxu0 0.0
    %1067 = vmatprep.subr.mxu0 0.0
    %1068 = vmatpush1.msra.mxu0 0.0
    %1069 = vmatprep.subr.mxu0 0.0
    %1070 = vmatpush1.msra.mxu0 0.0
    %1071 = vmatprep.subr.mxu0 0.0
    %1072 = vmatpush1.msra.mxu0 %v1029
    %1073 = vmatprep.subr.mxu0 0.0
    %1074 = vmatpush1.msra.mxu0 %v1028
    %1075 = vmatprep.subr.mxu0 0.0
    %1076 = vmatpush1.msra.mxu0 %v1027
    %1077 = vmatprep.subr.mxu0 0.0
    %1078 = vmatpush1.msra.mxu0 %v1026
    %1079 = vmatprep.subr.mxu0 0.0
    %1080 = vmatpush2.msra.mxu0 0.0
    %1081 = vmatprep.subr.mxu0 0.0
    %1082 = vmatpush2.msra.mxu0 0.0
    %1083 = vmatprep.subr.mxu0 0.0
    %1084 = vmatpush2.msra.mxu0 0.0
    %1085 = vmatprep.subr.mxu0 0.0
    %1086 = vmatpush2.msra.mxu0 0.0
    %1087 = vmatprep.subr.mxu0 0.0
    %1088 = vmatpush2.msra.mxu0 0.0
    %1089 = vmatprep.subr.mxu0 0.0
    %1090 = vmatpush2.msra.mxu0 0.0
    %1091 = vmatprep.subr.mxu0 0.0
    %1092 = vmatpush2.msra.mxu0 0.0
    %1093 = vmatprep.subr.mxu0 0.0
    %1094 = vmatpush2.msra.mxu0 0.0
    %1095 = vmatprep.subr.mxu0 0.0
    %1096 = vmatpush2.msra.mxu0 0.0
    %1097 = vmatprep.subr.mxu0 0.0
    %1098 = vmatpush2.msra.mxu0 0.0
    %1099 = vmatprep.subr.mxu0 0.0
    %1100 = vmatpush2.msra.mxu0 0.0
    %1101 = vmatprep.subr.mxu0 0.0
    %1102 = vmatpush2.msra.mxu0 0.0
    %1103 = vmatprep.subr.mxu0 0.0
    %1104 = vmatpush2.msra.mxu0 0.0
    %1105 = vmatprep.subr.mxu0 0.0
    %1106 = vmatpush2.msra.mxu0 0.0
    %1107 = vmatprep.subr.mxu0 0.0
    %1108 = vmatpush2.msra.mxu0 0.0
    %1109 = vmatprep.subr.mxu0 0.0
    %1110 = vmatpush2.msra.mxu0 0.0
    %1111 = vmatprep.mubr.f32.mxu0 0.0
    %1112 = vmatmul.mubr.f32.gmra.mxu0 %v1036
    %v1113 = vpop.f32.mrf.mxu0
    %v1114 = vadd.f32 0.0, %v1113
    %v1115 = vpop.f32.mrf.mxu0
    %1116 = vmatprep.mubr.f32.mxu0 0.0
    %1117 = vmatmul.mubr.f32.gmra.mxu0 %v1039
    %v1118 = vpop.f32.mrf.mxu0
    %v1119 = vadd.f32 0.0, %v1118
    %v1120 = vpop.f32.mrf.mxu0
    %1121 = vmatprep.mubr.f32.mxu0 0.0
    %1122 = vmatmul.mubr.f32.gmra.mxu0 %v1042
    %v1123 = vpop.f32.mrf.mxu0
    %v1124 = vadd.f32 0.0, %v1123
    %v1125 = vpop.f32.mrf.mxu0
    %1126 = vmatprep.mubr.f32.mxu0 0.0
    %1127 = vmatmul.mubr.f32.gmra.mxu0 %v1045
    %v1128 = vpop.f32.mrf.mxu0
    %v1129 = vadd.f32 0.0, %v1128
    %v1130 = vpop.f32.mrf.mxu0
    %1131 = vdwg.mxu0
    %v1132 = vmax.f32 %v1026, %v1114
    %v1133 = vmax.f32 %v1027, %v1119
    %v1134 = vmax.f32 %v1028, %v1124
    %v1135 = vmax.f32 %v1029, %v1129
    %v1136 = vld [vmem:[%s9] sm:$0xff]
    %v1137 = vld [vmem:[%s9 + $0x8] sm:$0xff]
    %v1139 = vsel %vm1034, %v1136, 0
    %v1142 = vsel %vm1034, %v1137, 0
    %1144 = vmatprep.subr.mxu0 0.0
    %1145 = vmatpush1.msra.mxu0 0.0
    %1146 = vmatprep.subr.mxu0 0.0
    %1147 = vmatpush1.msra.mxu0 0.0
    %1148 = vmatprep.subr.mxu0 0.0
    %1149 = vmatpush1.msra.mxu0 0.0
    %1150 = vmatprep.subr.mxu0 0.0
    %1151 = vmatpush1.msra.mxu0 0.0
    %1152 = vmatprep.subr.mxu0 0.0
    %1153 = vmatpush1.msra.mxu0 0.0
    %1154 = vmatprep.subr.mxu0 0.0
    %1155 = vmatpush1.msra.mxu0 0.0
    %1156 = vmatprep.subr.mxu0 0.0
    %1157 = vmatpush1.msra.mxu0 0.0
    %1158 = vmatprep.subr.mxu0 0.0
    %1159 = vmatpush1.msra.mxu0 0.0
    %1160 = vmatprep.subr.mxu0 0.0
    %1161 = vmatpush1.msra.mxu0 0.0
    %1162 = vmatprep.subr.mxu0 0.0
    %1163 = vmatpush1.msra.mxu0 0.0
    %1164 = vmatprep.subr.mxu0 0.0
    %1165 = vmatpush1.msra.mxu0 0.0
    %1166 = vmatprep.subr.mxu0 0.0
    %1167 = vmatpush1.msra.mxu0 0.0
    %1168 = vmatprep.subr.mxu0 0.0
    %1169 = vmatpush1.msra.mxu0 %v1135
    %1170 = vmatprep.subr.mxu0 0.0
    %1171 = vmatpush1.msra.mxu0 %v1134
    %1172 = vmatprep.subr.mxu0 0.0
    %1173 = vmatpush1.msra.mxu0 %v1133
    %1174 = vmatprep.subr.mxu0 0.0
    %1175 = vmatpush1.msra.mxu0 %v1132
    %1176 = vmatprep.subr.mxu0 0.0
    %1177 = vmatpush2.msra.mxu0 0.0
    %1178 = vmatprep.subr.mxu0 0.0
    %1179 = vmatpush2.msra.mxu0 0.0
    %1180 = vmatprep.subr.mxu0 0.0
    %1181 = vmatpush2.msra.mxu0 0.0
    %1182 = vmatprep.subr.mxu0 0.0
    %1183 = vmatpush2.msra.mxu0 0.0
    %1184 = vmatprep.subr.mxu0 0.0
    %1185 = vmatpush2.msra.mxu0 0.0
    %1186 = vmatprep.subr.mxu0 0.0
    %1187 = vmatpush2.msra.mxu0 0.0
    %1188 = vmatprep.subr.mxu0 0.0
    %1189 = vmatpush2.msra.mxu0 0.0
    %1190 = vmatprep.subr.mxu0 0.0
    %1191 = vmatpush2.msra.mxu0 0.0
    %1192 = vmatprep.subr.mxu0 0.0
    %1193 = vmatpush2.msra.mxu0 0.0
    %1194 = vmatprep.subr.mxu0 0.0
    %1195 = vmatpush2.msra.mxu0 0.0
    %1196 = vmatprep.subr.mxu0 0.0
    %1197 = vmatpush2.msra.mxu0 0.0
    %1198 = vmatprep.subr.mxu0 0.0
    %1199 = vmatpush2.msra.mxu0 0.0
    %1200 = vmatprep.subr.mxu0 0.0
    %1201 = vmatpush2.msra.mxu0 0.0
    %1202 = vmatprep.subr.mxu0 0.0
    %1203 = vmatpush2.msra.mxu0 0.0
    %1204 = vmatprep.subr.mxu0 0.0
    %1205 = vmatpush2.msra.mxu0 0.0
    %1206 = vmatprep.subr.mxu0 0.0
    %1207 = vmatpush2.msra.mxu0 0.0
    %1208 = vmatprep.mubr.f32.mxu0 0.0
    %1209 = vmatmul.mubr.f32.gmra.mxu0 %v1139
    %v1210 = vpop.f32.mrf.mxu0
    %v1211 = vadd.f32 0.0, %v1210
    %v1212 = vpop.f32.mrf.mxu0
    %1213 = vmatprep.mubr.f32.mxu0 0.0
    %1214 = vmatmul.mubr.f32.gmra.mxu0 %v1142
    %v1215 = vpop.f32.mrf.mxu0
    %v1216 = vadd.f32 0.0, %v1215
    %v1217 = vpop.f32.mrf.mxu0
    %1218 = vdwg.mxu0
    %v1219 = vld [vmem:[%s10] sm:$0xff]
    %v1220 = vld [vmem:[%s10 + $0x8] sm:$0xff]
    %v1221 = vld [vmem:[%s10 + $0x10] sm:$0xff]
    %v1222 = vld [vmem:[%s10 + $0x18] sm:$0xff]
    %v1223 = vld [vmem:[%s10 + $0x20] sm:$0xff]
    %v1224 = vld [vmem:[%s10 + $0x28] sm:$0xff]
    %v1225 = vld [vmem:[%s10 + $0x30] sm:$0xff]
    %v1226 = vld [vmem:[%s10 + $0x38] sm:$0xff]
    %v1227 = vld [vmem:[%s10 + $0x40] sm:$0xff]
    %v1228 = vld [vmem:[%s10 + $0x48] sm:$0xff]
    %v1229 = vld [vmem:[%s10 + $0x50] sm:$0xff]
    %v1230 = vld [vmem:[%s10 + $0x58] sm:$0xff]
    %v1231 = vld [vmem:[%s10 + $0x60] sm:$0xff]
    %v1232 = vld [vmem:[%s10 + $0x68] sm:$0xff]
    %v1233 = vld [vmem:[%s10 + $0x70] sm:$0xff]
    %v1234 = vld [vmem:[%s10 + $0x78] sm:$0xff]
    %s1235 = scalar_lea.vmem %s9, 16
    %v1236 = vld [vmem:[%s1235] sm:$0xff]
    %v1237 = vld [vmem:[%s1235 + $0x8] sm:$0xff]
    %v1239 = vsel %vm1034, %v1236, 0
    %v1242 = vsel %vm1034, %v1237, 0
    %1244 = vmatprep.subr.mxu0 0.0
    %1245 = vmatpush1.msra.mxu0 0.0
    %1246 = vmatprep.subr.mxu0 0.0
    %1247 = vmatpush1.msra.mxu0 0.0
    %1248 = vmatprep.subr.mxu0 0.0
    %1249 = vmatpush1.msra.mxu0 0.0
    %1250 = vmatprep.subr.mxu0 0.0
    %1251 = vmatpush1.msra.mxu0 0.0
    %1252 = vmatprep.subr.mxu0 0.0
    %1253 = vmatpush1.msra.mxu0 0.0
    %1254 = vmatprep.subr.mxu0 0.0
    %1255 = vmatpush1.msra.mxu0 0.0
    %1256 = vmatprep.subr.mxu0 0.0
    %1257 = vmatpush1.msra.mxu0 0.0
    %1258 = vmatprep.subr.mxu0 0.0
    %1259 = vmatpush1.msra.mxu0 0.0
    %1260 = vmatprep.subr.mxu0 0.0
    %1261 = vmatpush1.msra.mxu0 0.0
    %1262 = vmatprep.subr.mxu0 0.0
    %1263 = vmatpush1.msra.mxu0 0.0
    %1264 = vmatprep.subr.mxu0 0.0
    %1265 = vmatpush1.msra.mxu0 0.0
    %1266 = vmatprep.subr.mxu0 0.0
    %1267 = vmatpush1.msra.mxu0 0.0
    %1268 = vmatprep.subr.mxu0 0.0
    %1269 = vmatpush1.msra.mxu0 %v1135
    %1270 = vmatprep.subr.mxu0 0.0
    %1271 = vmatpush1.msra.mxu0 %v1134
    %1272 = vmatprep.subr.mxu0 0.0
    %1273 = vmatpush1.msra.mxu0 %v1133
    %1274 = vmatprep.subr.mxu0 0.0
    %1275 = vmatpush1.msra.mxu0 %v1132
    %1276 = vmatprep.subr.mxu0 0.0
    %1277 = vmatpush2.msra.mxu0 0.0
    %1278 = vmatprep.subr.mxu0 0.0
    %1279 = vmatpush2.msra.mxu0 0.0
    %1280 = vmatprep.subr.mxu0 0.0
    %1281 = vmatpush2.msra.mxu0 0.0
    %1282 = vmatprep.subr.mxu0 0.0
    %1283 = vmatpush2.msra.mxu0 0.0
    %1284 = vmatprep.subr.mxu0 0.0
    %1285 = vmatpush2.msra.mxu0 0.0
    %1286 = vmatprep.subr.mxu0 0.0
    %1287 = vmatpush2.msra.mxu0 0.0
    %1288 = vmatprep.subr.mxu0 0.0
    %1289 = vmatpush2.msra.mxu0 0.0
    %1290 = vmatprep.subr.mxu0 0.0
    %1291 = vmatpush2.msra.mxu0 0.0
    %1292 = vmatprep.subr.mxu0 0.0
    %1293 = vmatpush2.msra.mxu0 0.0
    %1294 = vmatprep.subr.mxu0 0.0
    %1295 = vmatpush2.msra.mxu0 0.0
    %1296 = vmatprep.subr.mxu0 0.0
    %1297 = vmatpush2.msra.mxu0 0.0
    %1298 = vmatprep.subr.mxu0 0.0
    %1299 = vmatpush2.msra.mxu0 0.0
    %1300 = vmatprep.subr.mxu0 0.0
    %1301 = vmatpush2.msra.mxu0 0.0
    %1302 = vmatprep.subr.mxu0 0.0
    %1303 = vmatpush2.msra.mxu0 0.0
    %1304 = vmatprep.subr.mxu0 0.0
    %1305 = vmatpush2.msra.mxu0 0.0
    %1306 = vmatprep.subr.mxu0 0.0
    %1307 = vmatpush2.msra.mxu0 0.0
    %1308 = vmatprep.mubr.f32.mxu0 0.0
    %1309 = vmatmul.mubr.f32.gmra.mxu0 %v1239
    %v1310 = vpop.f32.mrf.mxu0
    %v1311 = vadd.f32 0.0, %v1310
    %v1312 = vpop.f32.mrf.mxu0
    %1313 = vmatprep.mubr.f32.mxu0 0.0
    %1314 = vmatmul.mubr.f32.gmra.mxu0 %v1242
    %v1315 = vpop.f32.mrf.mxu0
    %v1316 = vadd.f32 0.0, %v1315
    %v1317 = vpop.f32.mrf.mxu0
    %1318 = vdwg.mxu0
    %s1319 = scalar_lea.vmem %s10, 128
    %v1320 = vld [vmem:[%s1319] sm:$0xff]
    %v1321 = vld [vmem:[%s1319 + $0x8] sm:$0xff]
    %v1322 = vld [vmem:[%s1319 + $0x10] sm:$0xff]
    %v1323 = vld [vmem:[%s1319 + $0x18] sm:$0xff]
    %v1324 = vld [vmem:[%s1319 + $0x20] sm:$0xff]
    %v1325 = vld [vmem:[%s1319 + $0x28] sm:$0xff]
    %v1326 = vld [vmem:[%s1319 + $0x30] sm:$0xff]
    %v1327 = vld [vmem:[%s1319 + $0x38] sm:$0xff]
    %v1328 = vld [vmem:[%s1319 + $0x40] sm:$0xff]
    %v1329 = vld [vmem:[%s1319 + $0x48] sm:$0xff]
    %v1330 = vld [vmem:[%s1319 + $0x50] sm:$0xff]
    %v1331 = vld [vmem:[%s1319 + $0x58] sm:$0xff]
    %v1332 = vld [vmem:[%s1319 + $0x60] sm:$0xff]
    %v1333 = vld [vmem:[%s1319 + $0x68] sm:$0xff]
    %v1334 = vld [vmem:[%s1319 + $0x70] sm:$0xff]
    %v1335 = vld [vmem:[%s1319 + $0x78] sm:$0xff]
    %1336 = vmatprep.subr.mxu0 0.0
    %1337 = vmatpush1.msra.mxu0 %v1335
    %1338 = vmatprep.subr.mxu0 0.0
    %1339 = vmatpush1.msra.mxu0 %v1334
    %1340 = vmatprep.subr.mxu0 0.0
    %1341 = vmatpush1.msra.mxu0 %v1333
    %1342 = vmatprep.subr.mxu0 0.0
    %1343 = vmatpush1.msra.mxu0 %v1332
    %1344 = vmatprep.subr.mxu0 0.0
    %1345 = vmatpush1.msra.mxu0 %v1331
    %1346 = vmatprep.subr.mxu0 0.0
    %1347 = vmatpush1.msra.mxu0 %v1330
    %1348 = vmatprep.subr.mxu0 0.0
    %1349 = vmatpush1.msra.mxu0 %v1329
    %1350 = vmatprep.subr.mxu0 0.0
    %1351 = vmatpush1.msra.mxu0 %v1328
    %1352 = vmatprep.subr.mxu0 0.0
    %1353 = vmatpush1.msra.mxu0 %v1327
    %1354 = vmatprep.subr.mxu0 0.0
    %1355 = vmatpush1.msra.mxu0 %v1326
    %1356 = vmatprep.subr.mxu0 0.0
    %1357 = vmatpush1.msra.mxu0 %v1325
    %1358 = vmatprep.subr.mxu0 0.0
    %1359 = vmatpush1.msra.mxu0 %v1324
    %1360 = vmatprep.subr.mxu0 0.0
    %1361 = vmatpush1.msra.mxu0 %v1323
    %1362 = vmatprep.subr.mxu0 0.0
    %1363 = vmatpush1.msra.mxu0 %v1322
    %1364 = vmatprep.subr.mxu0 0.0
    %1365 = vmatpush1.msra.mxu0 %v1321
    %1366 = vmatprep.subr.mxu0 0.0
    %1367 = vmatpush1.msra.mxu0 %v1320
    %1368 = vmatprep.subr.mxu0 0.0
    %1369 = vmatpush2.msra.mxu0 0.0
    %1370 = vmatprep.subr.mxu0 0.0
    %1371 = vmatpush2.msra.mxu0 0.0
    %1372 = vmatprep.subr.mxu0 0.0
    %1373 = vmatpush2.msra.mxu0 0.0
    %1374 = vmatprep.subr.mxu0 0.0
    %1375 = vmatpush2.msra.mxu0 0.0
    %1376 = vmatprep.subr.mxu0 0.0
    %1377 = vmatpush2.msra.mxu0 0.0
    %1378 = vmatprep.subr.mxu0 0.0
    %1379 = vmatpush2.msra.mxu0 0.0
    %1380 = vmatprep.subr.mxu0 0.0
    %1381 = vmatpush2.msra.mxu0 0.0
    %1382 = vmatprep.subr.mxu0 0.0
    %1383 = vmatpush2.msra.mxu0 0.0
    %1384 = vmatprep.subr.mxu0 0.0
    %1385 = vmatpush2.msra.mxu0 0.0
    %1386 = vmatprep.subr.mxu0 0.0
    %1387 = vmatpush2.msra.mxu0 0.0
    %1388 = vmatprep.subr.mxu0 0.0
    %1389 = vmatpush2.msra.mxu0 0.0
    %1390 = vmatprep.subr.mxu0 0.0
    %1391 = vmatpush2.msra.mxu0 0.0
    %1392 = vmatprep.subr.mxu0 0.0
    %1393 = vmatpush2.msra.mxu0 0.0
    %1394 = vmatprep.subr.mxu0 0.0
    %1395 = vmatpush2.msra.mxu0 0.0
    %1396 = vmatprep.subr.mxu0 0.0
    %1397 = vmatpush2.msra.mxu0 0.0
    %1398 = vmatprep.subr.mxu0 0.0
    %1399 = vmatpush2.msra.mxu0 0.0
    %1400 = vmatprep.mubr.f32.mxu0 0.0
    %1401 = vmatmul.mubr.f32.gmra.mxu0 %v1311
    %v1402 = vpop.f32.mrf.mxu0
    %v1403 = vadd.f32 0.0, %v1402
    %v1404 = vpop.f32.mrf.mxu0
    %1405 = vmatprep.mubr.f32.mxu0 0.0
    %1406 = vmatmul.mubr.f32.gmra.mxu0 %v1316
    %v1407 = vpop.f32.mrf.mxu0
    %v1408 = vadd.f32 0.0, %v1407
    %v1409 = vpop.f32.mrf.mxu0
    %1410 = vdwg.mxu0
    %1411 = vmatprep.subr.mxu0 0.0
    %1412 = vmatpush1.msra.mxu0 %v1234
    %1413 = vmatprep.subr.mxu0 0.0
    %1414 = vmatpush1.msra.mxu0 %v1233
    %1415 = vmatprep.subr.mxu0 0.0
    %1416 = vmatpush1.msra.mxu0 %v1232
    %1417 = vmatprep.subr.mxu0 0.0
    %1418 = vmatpush1.msra.mxu0 %v1231
    %1419 = vmatprep.subr.mxu0 0.0
    %1420 = vmatpush1.msra.mxu0 %v1230
    %1421 = vmatprep.subr.mxu0 0.0
    %1422 = vmatpush1.msra.mxu0 %v1229
    %1423 = vmatprep.subr.mxu0 0.0
    %1424 = vmatpush1.msra.mxu0 %v1228
    %1425 = vmatprep.subr.mxu0 0.0
    %1426 = vmatpush1.msra.mxu0 %v1227
    %1427 = vmatprep.subr.mxu0 0.0
    %1428 = vmatpush1.msra.mxu0 %v1226
    %1429 = vmatprep.subr.mxu0 0.0
    %1430 = vmatpush1.msra.mxu0 %v1225
    %1431 = vmatprep.subr.mxu0 0.0
    %1432 = vmatpush1.msra.mxu0 %v1224
    %1433 = vmatprep.subr.mxu0 0.0
    %1434 = vmatpush1.msra.mxu0 %v1223
    %1435 = vmatprep.subr.mxu0 0.0
    %1436 = vmatpush1.msra.mxu0 %v1222
    %1437 = vmatprep.subr.mxu0 0.0
    %1438 = vmatpush1.msra.mxu0 %v1221
    %1439 = vmatprep.subr.mxu0 0.0
    %1440 = vmatpush1.msra.mxu0 %v1220
    %1441 = vmatprep.subr.mxu0 0.0
    %1442 = vmatpush1.msra.mxu0 %v1219
    %1443 = vmatprep.subr.mxu0 0.0
    %1444 = vmatpush2.msra.mxu0 0.0
    %1445 = vmatprep.subr.mxu0 0.0
    %1446 = vmatpush2.msra.mxu0 0.0
    %1447 = vmatprep.subr.mxu0 0.0
    %1448 = vmatpush2.msra.mxu0 0.0
    %1449 = vmatprep.subr.mxu0 0.0
    %1450 = vmatpush2.msra.mxu0 0.0
    %1451 = vmatprep.subr.mxu0 0.0
    %1452 = vmatpush2.msra.mxu0 0.0
    %1453 = vmatprep.subr.mxu0 0.0
    %1454 = vmatpush2.msra.mxu0 0.0
    %1455 = vmatprep.subr.mxu0 0.0
    %1456 = vmatpush2.msra.mxu0 0.0
    %1457 = vmatprep.subr.mxu0 0.0
    %1458 = vmatpush2.msra.mxu0 0.0
    %1459 = vmatprep.subr.mxu0 0.0
    %1460 = vmatpush2.msra.mxu0 0.0
    %1461 = vmatprep.subr.mxu0 0.0
    %1462 = vmatpush2.msra.mxu0 0.0
    %1463 = vmatprep.subr.mxu0 0.0
    %1464 = vmatpush2.msra.mxu0 0.0
    %1465 = vmatprep.subr.mxu0 0.0
    %1466 = vmatpush2.msra.mxu0 0.0
    %1467 = vmatprep.subr.mxu0 0.0
    %1468 = vmatpush2.msra.mxu0 0.0
    %1469 = vmatprep.subr.mxu0 0.0
    %1470 = vmatpush2.msra.mxu0 0.0
    %1471 = vmatprep.subr.mxu0 0.0
    %1472 = vmatpush2.msra.mxu0 0.0
    %1473 = vmatprep.subr.mxu0 0.0
    %1474 = vmatpush2.msra.mxu0 0.0
    %1475 = vmatprep.mubr.f32.mxu0 0.0
    %1476 = vmatmul.mubr.f32.gmra.mxu0 %v1211
    %v1477 = vpop.f32.mrf.mxu0
    %v1478 = vadd.f32 %v1403, %v1477
    %v1479 = vpop.f32.mrf.mxu0
    %1480 = vmatprep.mubr.f32.mxu0 0.0
    %1481 = vmatmul.mubr.f32.gmra.mxu0 %v1216
    %v1482 = vpop.f32.mrf.mxu0
    %v1483 = vadd.f32 %v1408, %v1482
    %v1484 = vpop.f32.mrf.mxu0
    %1485 = vdwg.mxu0
    %s1486 = scalar_lea.vmem %s9, 32
    %v1487 = vld [vmem:[%s1486] sm:$0xff]
    %v1488 = vld [vmem:[%s1486 + $0x8] sm:$0xff]
    %v1490 = vsel %vm1034, %v1487, 0
    %v1493 = vsel %vm1034, %v1488, 0
    %1495 = vmatprep.subr.mxu0 0.0
    %1496 = vmatpush1.msra.mxu0 0.0
    %1497 = vmatprep.subr.mxu0 0.0
    %1498 = vmatpush1.msra.mxu0 0.0
    %1499 = vmatprep.subr.mxu0 0.0
    %1500 = vmatpush1.msra.mxu0 0.0
    %1501 = vmatprep.subr.mxu0 0.0
    %1502 = vmatpush1.msra.mxu0 0.0
    %1503 = vmatprep.subr.mxu0 0.0
    %1504 = vmatpush1.msra.mxu0 0.0
    %1505 = vmatprep.subr.mxu0 0.0
    %1506 = vmatpush1.msra.mxu0 0.0
    %1507 = vmatprep.subr.mxu0 0.0
    %1508 = vmatpush1.msra.mxu0 0.0
    %1509 = vmatprep.subr.mxu0 0.0
    %1510 = vmatpush1.msra.mxu0 0.0
    %1511 = vmatprep.subr.mxu0 0.0
    %1512 = vmatpush1.msra.mxu0 0.0
    %1513 = vmatprep.subr.mxu0 0.0
    %1514 = vmatpush1.msra.mxu0 0.0
    %1515 = vmatprep.subr.mxu0 0.0
    %1516 = vmatpush1.msra.mxu0 0.0
    %1517 = vmatprep.subr.mxu0 0.0
    %1518 = vmatpush1.msra.mxu0 0.0
    %1519 = vmatprep.subr.mxu0 0.0
    %1520 = vmatpush1.msra.mxu0 %v1135
    %1521 = vmatprep.subr.mxu0 0.0
    %1522 = vmatpush1.msra.mxu0 %v1134
    %1523 = vmatprep.subr.mxu0 0.0
    %1524 = vmatpush1.msra.mxu0 %v1133
    %1525 = vmatprep.subr.mxu0 0.0
    %1526 = vmatpush1.msra.mxu0 %v1132
    %1527 = vmatprep.subr.mxu0 0.0
    %1528 = vmatpush2.msra.mxu0 0.0
    %1529 = vmatprep.subr.mxu0 0.0
    %1530 = vmatpush2.msra.mxu0 0.0
    %1531 = vmatprep.subr.mxu0 0.0
    %1532 = vmatpush2.msra.mxu0 0.0
    %1533 = vmatprep.subr.mxu0 0.0
    %1534 = vmatpush2.msra.mxu0 0.0
    %1535 = vmatprep.subr.mxu0 0.0
    %1536 = vmatpush2.msra.mxu0 0.0
    %1537 = vmatprep.subr.mxu0 0.0
    %1538 = vmatpush2.msra.mxu0 0.0
    %1539 = vmatprep.subr.mxu0 0.0
    %1540 = vmatpush2.msra.mxu0 0.0
    %1541 = vmatprep.subr.mxu0 0.0
    %1542 = vmatpush2.msra.mxu0 0.0
    %1543 = vmatprep.subr.mxu0 0.0
    %1544 = vmatpush2.msra.mxu0 0.0
    %1545 = vmatprep.subr.mxu0 0.0
    %1546 = vmatpush2.msra.mxu0 0.0
    %1547 = vmatprep.subr.mxu0 0.0
    %1548 = vmatpush2.msra.mxu0 0.0
    %1549 = vmatprep.subr.mxu0 0.0
    %1550 = vmatpush2.msra.mxu0 0.0
    %1551 = vmatprep.subr.mxu0 0.0
    %1552 = vmatpush2.msra.mxu0 0.0
    %1553 = vmatprep.subr.mxu0 0.0
    %1554 = vmatpush2.msra.mxu0 0.0
    %1555 = vmatprep.subr.mxu0 0.0
    %1556 = vmatpush2.msra.mxu0 0.0
    %1557 = vmatprep.subr.mxu0 0.0
    %1558 = vmatpush2.msra.mxu0 0.0
    %1559 = vmatprep.mubr.f32.mxu0 0.0
    %1560 = vmatmul.mubr.f32.gmra.mxu0 %v1490
    %v1561 = vpop.f32.mrf.mxu0
    %v1562 = vadd.f32 0.0, %v1561
    %v1563 = vpop.f32.mrf.mxu0
    %1564 = vmatprep.mubr.f32.mxu0 0.0
    %1565 = vmatmul.mubr.f32.gmra.mxu0 %v1493
    %v1566 = vpop.f32.mrf.mxu0
    %v1567 = vadd.f32 0.0, %v1566
    %v1568 = vpop.f32.mrf.mxu0
    %1569 = vdwg.mxu0
    %s1570 = scalar_lea.vmem %s10, 256
    %v1571 = vld [vmem:[%s1570] sm:$0xff]
    %v1572 = vld [vmem:[%s1570 + $0x8] sm:$0xff]
    %v1573 = vld [vmem:[%s1570 + $0x10] sm:$0xff]
    %v1574 = vld [vmem:[%s1570 + $0x18] sm:$0xff]
    %v1575 = vld [vmem:[%s1570 + $0x20] sm:$0xff]
    %v1576 = vld [vmem:[%s1570 + $0x28] sm:$0xff]
    %v1577 = vld [vmem:[%s1570 + $0x30] sm:$0xff]
    %v1578 = vld [vmem:[%s1570 + $0x38] sm:$0xff]
    %v1579 = vld [vmem:[%s1570 + $0x40] sm:$0xff]
    %v1580 = vld [vmem:[%s1570 + $0x48] sm:$0xff]
    %v1581 = vld [vmem:[%s1570 + $0x50] sm:$0xff]
    %v1582 = vld [vmem:[%s1570 + $0x58] sm:$0xff]
    %v1583 = vld [vmem:[%s1570 + $0x60] sm:$0xff]
    %v1584 = vld [vmem:[%s1570 + $0x68] sm:$0xff]
    %v1585 = vld [vmem:[%s1570 + $0x70] sm:$0xff]
    %v1586 = vld [vmem:[%s1570 + $0x78] sm:$0xff]
    %1587 = vmatprep.subr.mxu0 0.0
    %1588 = vmatpush1.msra.mxu0 %v1586
    %1589 = vmatprep.subr.mxu0 0.0
    %1590 = vmatpush1.msra.mxu0 %v1585
    %1591 = vmatprep.subr.mxu0 0.0
    %1592 = vmatpush1.msra.mxu0 %v1584
    %1593 = vmatprep.subr.mxu0 0.0
    %1594 = vmatpush1.msra.mxu0 %v1583
    %1595 = vmatprep.subr.mxu0 0.0
    %1596 = vmatpush1.msra.mxu0 %v1582
    %1597 = vmatprep.subr.mxu0 0.0
    %1598 = vmatpush1.msra.mxu0 %v1581
    %1599 = vmatprep.subr.mxu0 0.0
    %1600 = vmatpush1.msra.mxu0 %v1580
    %1601 = vmatprep.subr.mxu0 0.0
    %1602 = vmatpush1.msra.mxu0 %v1579
    %1603 = vmatprep.subr.mxu0 0.0
    %1604 = vmatpush1.msra.mxu0 %v1578
    %1605 = vmatprep.subr.mxu0 0.0
    %1606 = vmatpush1.msra.mxu0 %v1577
    %1607 = vmatprep.subr.mxu0 0.0
    %1608 = vmatpush1.msra.mxu0 %v1576
    %1609 = vmatprep.subr.mxu0 0.0
    %1610 = vmatpush1.msra.mxu0 %v1575
    %1611 = vmatprep.subr.mxu0 0.0
    %1612 = vmatpush1.msra.mxu0 %v1574
    %1613 = vmatprep.subr.mxu0 0.0
    %1614 = vmatpush1.msra.mxu0 %v1573
    %1615 = vmatprep.subr.mxu0 0.0
    %1616 = vmatpush1.msra.mxu0 %v1572
    %1617 = vmatprep.subr.mxu0 0.0
    %1618 = vmatpush1.msra.mxu0 %v1571
    %1619 = vmatprep.subr.mxu0 0.0
    %1620 = vmatpush2.msra.mxu0 0.0
    %1621 = vmatprep.subr.mxu0 0.0
    %1622 = vmatpush2.msra.mxu0 0.0
    %1623 = vmatprep.subr.mxu0 0.0
    %1624 = vmatpush2.msra.mxu0 0.0
    %1625 = vmatprep.subr.mxu0 0.0
    %1626 = vmatpush2.msra.mxu0 0.0
    %1627 = vmatprep.subr.mxu0 0.0
    %1628 = vmatpush2.msra.mxu0 0.0
    %1629 = vmatprep.subr.mxu0 0.0
    %1630 = vmatpush2.msra.mxu0 0.0
    %1631 = vmatprep.subr.mxu0 0.0
    %1632 = vmatpush2.msra.mxu0 0.0
    %1633 = vmatprep.subr.mxu0 0.0
    %1634 = vmatpush2.msra.mxu0 0.0
    %1635 = vmatprep.subr.mxu0 0.0
    %1636 = vmatpush2.msra.mxu0 0.0
    %1637 = vmatprep.subr.mxu0 0.0
    %1638 = vmatpush2.msra.mxu0 0.0
    %1639 = vmatprep.subr.mxu0 0.0
    %1640 = vmatpush2.msra.mxu0 0.0
    %1641 = vmatprep.subr.mxu0 0.0
    %1642 = vmatpush2.msra.mxu0 0.0
    %1643 = vmatprep.subr.mxu0 0.0
    %1644 = vmatpush2.msra.mxu0 0.0
    %1645 = vmatprep.subr.mxu0 0.0
    %1646 = vmatpush2.msra.mxu0 0.0
    %1647 = vmatprep.subr.mxu0 0.0
    %1648 = vmatpush2.msra.mxu0 0.0
    %1649 = vmatprep.subr.mxu0 0.0
    %1650 = vmatpush2.msra.mxu0 0.0
    %1651 = vmatprep.mubr.f32.mxu0 0.0
    %1652 = vmatmul.mubr.f32.gmra.mxu0 %v1562
    %v1653 = vpop.f32.mrf.mxu0
    %v1654 = vadd.f32 0.0, %v1653
    %v1655 = vpop.f32.mrf.mxu0
    %1656 = vmatprep.mubr.f32.mxu0 0.0
    %1657 = vmatmul.mubr.f32.gmra.mxu0 %v1567
    %v1658 = vpop.f32.mrf.mxu0
    %v1659 = vadd.f32 0.0, %v1658
    %v1660 = vpop.f32.mrf.mxu0
    %1661 = vdwg.mxu0
    %v1662 = vadd.f32 %v1478, %v1654
    %v1663 = vadd.f32 %v1483, %v1659
    %v1664 = vld [vmem:[%s11] sm:$0x1]
    %v1666 = vlaneseq
    %v1667 = vshrl.u32 %v1666, 7
    %v1668 = vsub.s32 0, %v1667
    %v1669 = vrot.slane %v1664, %v1668
    %v1671 = vadd.f32 %v1662, %v1669
    %v1672 = vadd.f32 %v1663, %v1669
    %vm1673 = vcmp.gt.f32.partialorder %v1671, 0.0
    %vm1674 = vcmp.gt.f32.partialorder %v1672, 0.0
    %v1675 = vmul.f32 %v1671, 0.1
    %v1676 = vmul.f32 %v1672, 0.1
    %v1677 = vsel %vm1673, %v1671, %v1675
    %v1678 = vsel %vm1674, %v1672, %v1676
    %v1679 = vld [vmem:[%s12] sm:$0x3]
    %vm1680 = vcmask 130048
    %v1682 = vsel %vm1680, %v1679, 0
    %1684 = vmatprep.subr.mxu0 0.0
    %1685 = vmatpush1.msra.mxu0 0.0
    %1686 = vmatprep.subr.mxu0 0.0
    %1687 = vmatpush1.msra.mxu0 0.0
    %1688 = vmatprep.subr.mxu0 0.0
    %1689 = vmatpush1.msra.mxu0 0.0
    %1690 = vmatprep.subr.mxu0 0.0
    %1691 = vmatpush1.msra.mxu0 0.0
    %1692 = vmatprep.subr.mxu0 0.0
    %1693 = vmatpush1.msra.mxu0 0.0
    %1694 = vmatprep.subr.mxu0 0.0
    %1695 = vmatpush1.msra.mxu0 0.0
    %1696 = vmatprep.subr.mxu0 0.0
    %1697 = vmatpush1.msra.mxu0 0.0
    %1698 = vmatprep.subr.mxu0 0.0
    %1699 = vmatpush1.msra.mxu0 0.0
    %1700 = vmatprep.subr.mxu0 0.0
    %1701 = vmatpush1.msra.mxu0 0.0
    %1702 = vmatprep.subr.mxu0 0.0
    %1703 = vmatpush1.msra.mxu0 0.0
    %1704 = vmatprep.subr.mxu0 0.0
    %1705 = vmatpush1.msra.mxu0 0.0
    %1706 = vmatprep.subr.mxu0 0.0
    %1707 = vmatpush1.msra.mxu0 0.0
    %1708 = vmatprep.subr.mxu0 0.0
    %1709 = vmatpush1.msra.mxu0 0.0
    %1710 = vmatprep.subr.mxu0 0.0
    %1711 = vmatpush1.msra.mxu0 0.0
    %1712 = vmatprep.subr.mxu0 0.0
    %1713 = vmatpush1.msra.mxu0 %v1678
    %1714 = vmatprep.subr.mxu0 0.0
    %1715 = vmatpush1.msra.mxu0 %v1677
    %1716 = vmatprep.subr.mxu0 0.0
    %1717 = vmatpush2.msra.mxu0 0.0
    %1718 = vmatprep.subr.mxu0 0.0
    %1719 = vmatpush2.msra.mxu0 0.0
    %1720 = vmatprep.subr.mxu0 0.0
    %1721 = vmatpush2.msra.mxu0 0.0
    %1722 = vmatprep.subr.mxu0 0.0
    %1723 = vmatpush2.msra.mxu0 0.0
    %1724 = vmatprep.subr.mxu0 0.0
    %1725 = vmatpush2.msra.mxu0 0.0
    %1726 = vmatprep.subr.mxu0 0.0
    %1727 = vmatpush2.msra.mxu0 0.0
    %1728 = vmatprep.subr.mxu0 0.0
    %1729 = vmatpush2.msra.mxu0 0.0
    %1730 = vmatprep.subr.mxu0 0.0
    %1731 = vmatpush2.msra.mxu0 0.0
    %1732 = vmatprep.subr.mxu0 0.0
    %1733 = vmatpush2.msra.mxu0 0.0
    %1734 = vmatprep.subr.mxu0 0.0
    %1735 = vmatpush2.msra.mxu0 0.0
    %1736 = vmatprep.subr.mxu0 0.0
    %1737 = vmatpush2.msra.mxu0 0.0
    %1738 = vmatprep.subr.mxu0 0.0
    %1739 = vmatpush2.msra.mxu0 0.0
    %1740 = vmatprep.subr.mxu0 0.0
    %1741 = vmatpush2.msra.mxu0 0.0
    %1742 = vmatprep.subr.mxu0 0.0
    %1743 = vmatpush2.msra.mxu0 0.0
    %1744 = vmatprep.subr.mxu0 0.0
    %1745 = vmatpush2.msra.mxu0 0.0
    %1746 = vmatprep.subr.mxu0 0.0
    %1747 = vmatpush2.msra.mxu0 0.0
    %1748 = vmatprep.mubr.f32.mxu0 0.0
    %1749 = vmatmul.mubr.f32.gmra.mxu0 %v1682
    %v1750 = vpop.f32.mrf.mxu0
    %v1751 = vadd.f32 0.0, %v1750
    %v1752 = vpop.f32.mrf.mxu0
    %1753 = vdwg.mxu0
    %v1754 = vld [vmem:[%s13] sm:$0xff]
    %v1755 = vld [vmem:[%s13 + $0x8] sm:$0xff]
    %v1756 = vld [vmem:[%s13 + $0x10] sm:$0xff]
    %v1757 = vld [vmem:[%s13 + $0x18] sm:$0xff]
    %v1758 = vld [vmem:[%s13 + $0x20] sm:$0xff]
    %v1759 = vld [vmem:[%s13 + $0x28] sm:$0xff]
    %v1760 = vld [vmem:[%s13 + $0x30] sm:$0xff]
    %v1761 = vld [vmem:[%s13 + $0x38] sm:$0xff]
    %v1762 = vld [vmem:[%s13 + $0x40] sm:$0xff]
    %v1763 = vld [vmem:[%s13 + $0x48] sm:$0xff]
    %v1764 = vld [vmem:[%s13 + $0x50] sm:$0xff]
    %v1765 = vld [vmem:[%s13 + $0x58] sm:$0xff]
    %v1766 = vld [vmem:[%s13 + $0x60] sm:$0xff]
    %v1767 = vld [vmem:[%s13 + $0x68] sm:$0xff]
    %v1768 = vld [vmem:[%s13 + $0x70] sm:$0xff]
    %v1769 = vld [vmem:[%s13 + $0x78] sm:$0xff]
    %s1770 = scalar_lea.vmem %s12, 2
    %v1771 = vld [vmem:[%s1770] sm:$0x3]
    %v1773 = vsel %vm1680, %v1771, 0
    %1775 = vmatprep.subr.mxu0 0.0
    %1776 = vmatpush1.msra.mxu0 0.0
    %1777 = vmatprep.subr.mxu0 0.0
    %1778 = vmatpush1.msra.mxu0 0.0
    %1779 = vmatprep.subr.mxu0 0.0
    %1780 = vmatpush1.msra.mxu0 0.0
    %1781 = vmatprep.subr.mxu0 0.0
    %1782 = vmatpush1.msra.mxu0 0.0
    %1783 = vmatprep.subr.mxu0 0.0
    %1784 = vmatpush1.msra.mxu0 0.0
    %1785 = vmatprep.subr.mxu0 0.0
    %1786 = vmatpush1.msra.mxu0 0.0
    %1787 = vmatprep.subr.mxu0 0.0
    %1788 = vmatpush1.msra.mxu0 0.0
    %1789 = vmatprep.subr.mxu0 0.0
    %1790 = vmatpush1.msra.mxu0 0.0
    %1791 = vmatprep.subr.mxu0 0.0
    %1792 = vmatpush1.msra.mxu0 0.0
    %1793 = vmatprep.subr.mxu0 0.0
    %1794 = vmatpush1.msra.mxu0 0.0
    %1795 = vmatprep.subr.mxu0 0.0
    %1796 = vmatpush1.msra.mxu0 0.0
    %1797 = vmatprep.subr.mxu0 0.0
    %1798 = vmatpush1.msra.mxu0 0.0
    %1799 = vmatprep.subr.mxu0 0.0
    %1800 = vmatpush1.msra.mxu0 0.0
    %1801 = vmatprep.subr.mxu0 0.0
    %1802 = vmatpush1.msra.mxu0 0.0
    %1803 = vmatprep.subr.mxu0 0.0
    %1804 = vmatpush1.msra.mxu0 %v1678
    %1805 = vmatprep.subr.mxu0 0.0
    %1806 = vmatpush1.msra.mxu0 %v1677
    %1807 = vmatprep.subr.mxu0 0.0
    %1808 = vmatpush2.msra.mxu0 0.0
    %1809 = vmatprep.subr.mxu0 0.0
    %1810 = vmatpush2.msra.mxu0 0.0
    %1811 = vmatprep.subr.mxu0 0.0
    %1812 = vmatpush2.msra.mxu0 0.0
    %1813 = vmatprep.subr.mxu0 0.0
    %1814 = vmatpush2.msra.mxu0 0.0
    %1815 = vmatprep.subr.mxu0 0.0
    %1816 = vmatpush2.msra.mxu0 0.0
    %1817 = vmatprep.subr.mxu0 0.0
    %1818 = vmatpush2.msra.mxu0 0.0
    %1819 = vmatprep.subr.mxu0 0.0
    %1820 = vmatpush2.msra.mxu0 0.0
    %1821 = vmatprep.subr.mxu0 0.0
    %1822 = vmatpush2.msra.mxu0 0.0
    %1823 = vmatprep.subr.mxu0 0.0
    %1824 = vmatpush2.msra.mxu0 0.0
    %1825 = vmatprep.subr.mxu0 0.0
    %1826 = vmatpush2.msra.mxu0 0.0
    %1827 = vmatprep.subr.mxu0 0.0
    %1828 = vmatpush2.msra.mxu0 0.0
    %1829 = vmatprep.subr.mxu0 0.0
    %1830 = vmatpush2.msra.mxu0 0.0
    %1831 = vmatprep.subr.mxu0 0.0
    %1832 = vmatpush2.msra.mxu0 0.0
    %1833 = vmatprep.subr.mxu0 0.0
    %1834 = vmatpush2.msra.mxu0 0.0
    %1835 = vmatprep.subr.mxu0 0.0
    %1836 = vmatpush2.msra.mxu0 0.0
    %1837 = vmatprep.subr.mxu0 0.0
    %1838 = vmatpush2.msra.mxu0 0.0
    %1839 = vmatprep.mubr.f32.mxu0 0.0
    %1840 = vmatmul.mubr.f32.gmra.mxu0 %v1773
    %v1841 = vpop.f32.mrf.mxu0
    %v1842 = vadd.f32 0.0, %v1841
    %v1843 = vpop.f32.mrf.mxu0
    %1844 = vdwg.mxu0
    %s1845 = scalar_lea.vmem %s13, 128
    %v1846 = vld [vmem:[%s1845] sm:$0xff]
    %v1847 = vld [vmem:[%s1845 + $0x8] sm:$0xff]
    %v1848 = vld [vmem:[%s1845 + $0x10] sm:$0xff]
    %v1849 = vld [vmem:[%s1845 + $0x18] sm:$0xff]
    %v1850 = vld [vmem:[%s1845 + $0x20] sm:$0xff]
    %v1851 = vld [vmem:[%s1845 + $0x28] sm:$0xff]
    %v1852 = vld [vmem:[%s1845 + $0x30] sm:$0xff]
    %v1853 = vld [vmem:[%s1845 + $0x38] sm:$0xff]
    %v1854 = vld [vmem:[%s1845 + $0x40] sm:$0xff]
    %v1855 = vld [vmem:[%s1845 + $0x48] sm:$0xff]
    %v1856 = vld [vmem:[%s1845 + $0x50] sm:$0xff]
    %v1857 = vld [vmem:[%s1845 + $0x58] sm:$0xff]
    %v1858 = vld [vmem:[%s1845 + $0x60] sm:$0xff]
    %v1859 = vld [vmem:[%s1845 + $0x68] sm:$0xff]
    %v1860 = vld [vmem:[%s1845 + $0x70] sm:$0xff]
    %v1861 = vld [vmem:[%s1845 + $0x78] sm:$0xff]
    %1862 = vmatprep.subr.mxu0 0.0
    %1863 = vmatpush1.msra.mxu0 %v1861
    %1864 = vmatprep.subr.mxu0 0.0
    %1865 = vmatpush1.msra.mxu0 %v1860
    %1866 = vmatprep.subr.mxu0 0.0
    %1867 = vmatpush1.msra.mxu0 %v1859
    %1868 = vmatprep.subr.mxu0 0.0
    %1869 = vmatpush1.msra.mxu0 %v1858
    %1870 = vmatprep.subr.mxu0 0.0
    %1871 = vmatpush1.msra.mxu0 %v1857
    %1872 = vmatprep.subr.mxu0 0.0
    %1873 = vmatpush1.msra.mxu0 %v1856
    %1874 = vmatprep.subr.mxu0 0.0
    %1875 = vmatpush1.msra.mxu0 %v1855
    %1876 = vmatprep.subr.mxu0 0.0
    %1877 = vmatpush1.msra.mxu0 %v1854
    %1878 = vmatprep.subr.mxu0 0.0
    %1879 = vmatpush1.msra.mxu0 %v1853
    %1880 = vmatprep.subr.mxu0 0.0
    %1881 = vmatpush1.msra.mxu0 %v1852
    %1882 = vmatprep.subr.mxu0 0.0
    %1883 = vmatpush1.msra.mxu0 %v1851
    %1884 = vmatprep.subr.mxu0 0.0
    %1885 = vmatpush1.msra.mxu0 %v1850
    %1886 = vmatprep.subr.mxu0 0.0
    %1887 = vmatpush1.msra.mxu0 %v1849
    %1888 = vmatprep.subr.mxu0 0.0
    %1889 = vmatpush1.msra.mxu0 %v1848
    %1890 = vmatprep.subr.mxu0 0.0
    %1891 = vmatpush1.msra.mxu0 %v1847
    %1892 = vmatprep.subr.mxu0 0.0
    %1893 = vmatpush1.msra.mxu0 %v1846
    %1894 = vmatprep.subr.mxu0 0.0
    %1895 = vmatpush2.msra.mxu0 0.0
    %1896 = vmatprep.subr.mxu0 0.0
    %1897 = vmatpush2.msra.mxu0 0.0
    %1898 = vmatprep.subr.mxu0 0.0
    %1899 = vmatpush2.msra.mxu0 0.0
    %1900 = vmatprep.subr.mxu0 0.0
    %1901 = vmatpush2.msra.mxu0 0.0
    %1902 = vmatprep.subr.mxu0 0.0
    %1903 = vmatpush2.msra.mxu0 0.0
    %1904 = vmatprep.subr.mxu0 0.0
    %1905 = vmatpush2.msra.mxu0 0.0
    %1906 = vmatprep.subr.mxu0 0.0
    %1907 = vmatpush2.msra.mxu0 0.0
    %1908 = vmatprep.subr.mxu0 0.0
    %1909 = vmatpush2.msra.mxu0 0.0
    %1910 = vmatprep.subr.mxu0 0.0
    %1911 = vmatpush2.msra.mxu0 0.0
    %1912 = vmatprep.subr.mxu0 0.0
    %1913 = vmatpush2.msra.mxu0 0.0
    %1914 = vmatprep.subr.mxu0 0.0
    %1915 = vmatpush2.msra.mxu0 0.0
    %1916 = vmatprep.subr.mxu0 0.0
    %1917 = vmatpush2.msra.mxu0 0.0
    %1918 = vmatprep.subr.mxu0 0.0
    %1919 = vmatpush2.msra.mxu0 0.0
    %1920 = vmatprep.subr.mxu0 0.0
    %1921 = vmatpush2.msra.mxu0 0.0
    %1922 = vmatprep.subr.mxu0 0.0
    %1923 = vmatpush2.msra.mxu0 0.0
    %1924 = vmatprep.subr.mxu0 0.0
    %1925 = vmatpush2.msra.mxu0 0.0
    %1926 = vmatprep.mubr.f32.mxu0 0.0
    %1927 = vmatmul.mubr.f32.gmra.mxu0 %v1842
    %v1928 = vpop.f32.mrf.mxu0
    %v1929 = vadd.f32 0.0, %v1928
    %v1930 = vpop.f32.mrf.mxu0
    %1931 = vdwg.mxu0
    %1932 = vmatprep.subr.mxu0 0.0
    %1933 = vmatpush1.msra.mxu0 %v1769
    %1934 = vmatprep.subr.mxu0 0.0
    %1935 = vmatpush1.msra.mxu0 %v1768
    %1936 = vmatprep.subr.mxu0 0.0
    %1937 = vmatpush1.msra.mxu0 %v1767
    %1938 = vmatprep.subr.mxu0 0.0
    %1939 = vmatpush1.msra.mxu0 %v1766
    %1940 = vmatprep.subr.mxu0 0.0
    %1941 = vmatpush1.msra.mxu0 %v1765
    %1942 = vmatprep.subr.mxu0 0.0
    %1943 = vmatpush1.msra.mxu0 %v1764
    %1944 = vmatprep.subr.mxu0 0.0
    %1945 = vmatpush1.msra.mxu0 %v1763
    %1946 = vmatprep.subr.mxu0 0.0
    %1947 = vmatpush1.msra.mxu0 %v1762
    %1948 = vmatprep.subr.mxu0 0.0
    %1949 = vmatpush1.msra.mxu0 %v1761
    %1950 = vmatprep.subr.mxu0 0.0
    %1951 = vmatpush1.msra.mxu0 %v1760
    %1952 = vmatprep.subr.mxu0 0.0
    %1953 = vmatpush1.msra.mxu0 %v1759
    %1954 = vmatprep.subr.mxu0 0.0
    %1955 = vmatpush1.msra.mxu0 %v1758
    %1956 = vmatprep.subr.mxu0 0.0
    %1957 = vmatpush1.msra.mxu0 %v1757
    %1958 = vmatprep.subr.mxu0 0.0
    %1959 = vmatpush1.msra.mxu0 %v1756
    %1960 = vmatprep.subr.mxu0 0.0
    %1961 = vmatpush1.msra.mxu0 %v1755
    %1962 = vmatprep.subr.mxu0 0.0
    %1963 = vmatpush1.msra.mxu0 %v1754
    %1964 = vmatprep.subr.mxu0 0.0
    %1965 = vmatpush2.msra.mxu0 0.0
    %1966 = vmatprep.subr.mxu0 0.0
    %1967 = vmatpush2.msra.mxu0 0.0
    %1968 = vmatprep.subr.mxu0 0.0
    %1969 = vmatpush2.msra.mxu0 0.0
    %1970 = vmatprep.subr.mxu0 0.0
    %1971 = vmatpush2.msra.mxu0 0.0
    %1972 = vmatprep.subr.mxu0 0.0
    %1973 = vmatpush2.msra.mxu0 0.0
    %1974 = vmatprep.subr.mxu0 0.0
    %1975 = vmatpush2.msra.mxu0 0.0
    %1976 = vmatprep.subr.mxu0 0.0
    %1977 = vmatpush2.msra.mxu0 0.0
    %1978 = vmatprep.subr.mxu0 0.0
    %1979 = vmatpush2.msra.mxu0 0.0
    %1980 = vmatprep.subr.mxu0 0.0
    %1981 = vmatpush2.msra.mxu0 0.0
    %1982 = vmatprep.subr.mxu0 0.0
    %1983 = vmatpush2.msra.mxu0 0.0
    %1984 = vmatprep.subr.mxu0 0.0
    %1985 = vmatpush2.msra.mxu0 0.0
    %1986 = vmatprep.subr.mxu0 0.0
    %1987 = vmatpush2.msra.mxu0 0.0
    %1988 = vmatprep.subr.mxu0 0.0
    %1989 = vmatpush2.msra.mxu0 0.0
    %1990 = vmatprep.subr.mxu0 0.0
    %1991 = vmatpush2.msra.mxu0 0.0
    %1992 = vmatprep.subr.mxu0 0.0
    %1993 = vmatpush2.msra.mxu0 0.0
    %1994 = vmatprep.subr.mxu0 0.0
    %1995 = vmatpush2.msra.mxu0 0.0
    %1996 = vmatprep.mubr.f32.mxu0 0.0
    %1997 = vmatmul.mubr.f32.gmra.mxu0 %v1751
    %v1998 = vpop.f32.mrf.mxu0
    %v1999 = vadd.f32 %v1929, %v1998
    %v2000 = vpop.f32.mrf.mxu0
    %2001 = vdwg.mxu0
    %s2002 = scalar_lea.vmem %s12, 4
    %v2003 = vld [vmem:[%s2002] sm:$0x3]
    %v2005 = vsel %vm1680, %v2003, 0
    %2007 = vmatprep.subr.mxu0 0.0
    %2008 = vmatpush1.msra.mxu0 0.0
    %2009 = vmatprep.subr.mxu0 0.0
    %2010 = vmatpush1.msra.mxu0 0.0
    %2011 = vmatprep.subr.mxu0 0.0
    %2012 = vmatpush1.msra.mxu0 0.0
    %2013 = vmatprep.subr.mxu0 0.0
    %2014 = vmatpush1.msra.mxu0 0.0
    %2015 = vmatprep.subr.mxu0 0.0
    %2016 = vmatpush1.msra.mxu0 0.0
    %2017 = vmatprep.subr.mxu0 0.0
    %2018 = vmatpush1.msra.mxu0 0.0
    %2019 = vmatprep.subr.mxu0 0.0
    %2020 = vmatpush1.msra.mxu0 0.0
    %2021 = vmatprep.subr.mxu0 0.0
    %2022 = vmatpush1.msra.mxu0 0.0
    %2023 = vmatprep.subr.mxu0 0.0
    %2024 = vmatpush1.msra.mxu0 0.0
    %2025 = vmatprep.subr.mxu0 0.0
    %2026 = vmatpush1.msra.mxu0 0.0
    %2027 = vmatprep.subr.mxu0 0.0
    %2028 = vmatpush1.msra.mxu0 0.0
    %2029 = vmatprep.subr.mxu0 0.0
    %2030 = vmatpush1.msra.mxu0 0.0
    %2031 = vmatprep.subr.mxu0 0.0
    %2032 = vmatpush1.msra.mxu0 0.0
    %2033 = vmatprep.subr.mxu0 0.0
    %2034 = vmatpush1.msra.mxu0 0.0
    %2035 = vmatprep.subr.mxu0 0.0
    %2036 = vmatpush1.msra.mxu0 %v1678
    %2037 = vmatprep.subr.mxu0 0.0
    %2038 = vmatpush1.msra.mxu0 %v1677
    %2039 = vmatprep.subr.mxu0 0.0
    %2040 = vmatpush2.msra.mxu0 0.0
    %2041 = vmatprep.subr.mxu0 0.0
    %2042 = vmatpush2.msra.mxu0 0.0
    %2043 = vmatprep.subr.mxu0 0.0
    %2044 = vmatpush2.msra.mxu0 0.0
    %2045 = vmatprep.subr.mxu0 0.0
    %2046 = vmatpush2.msra.mxu0 0.0
    %2047 = vmatprep.subr.mxu0 0.0
    %2048 = vmatpush2.msra.mxu0 0.0
    %2049 = vmatprep.subr.mxu0 0.0
    %2050 = vmatpush2.msra.mxu0 0.0
    %2051 = vmatprep.subr.mxu0 0.0
    %2052 = vmatpush2.msra.mxu0 0.0
    %2053 = vmatprep.subr.mxu0 0.0
    %2054 = vmatpush2.msra.mxu0 0.0
    %2055 = vmatprep.subr.mxu0 0.0
    %2056 = vmatpush2.msra.mxu0 0.0
    %2057 = vmatprep.subr.mxu0 0.0
    %2058 = vmatpush2.msra.mxu0 0.0
    %2059 = vmatprep.subr.mxu0 0.0
    %2060 = vmatpush2.msra.mxu0 0.0
    %2061 = vmatprep.subr.mxu0 0.0
    %2062 = vmatpush2.msra.mxu0 0.0
    %2063 = vmatprep.subr.mxu0 0.0
    %2064 = vmatpush2.msra.mxu0 0.0
    %2065 = vmatprep.subr.mxu0 0.0
    %2066 = vmatpush2.msra.mxu0 0.0
    %2067 = vmatprep.subr.mxu0 0.0
    %2068 = vmatpush2.msra.mxu0 0.0
    %2069 = vmatprep.subr.mxu0 0.0
    %2070 = vmatpush2.msra.mxu0 0.0
    %2071 = vmatprep.mubr.f32.mxu0 0.0
    %2072 = vmatmul.mubr.f32.gmra.mxu0 %v2005
    %v2073 = vpop.f32.mrf.mxu0
    %v2074 = vadd.f32 0.0, %v2073
    %v2075 = vpop.f32.mrf.mxu0
    %2076 = vdwg.mxu0
    %s2077 = scalar_lea.vmem %s13, 256
    %v2078 = vld [vmem:[%s2077] sm:$0xff]
    %v2079 = vld [vmem:[%s2077 + $0x8] sm:$0xff]
    %v2080 = vld [vmem:[%s2077 + $0x10] sm:$0xff]
    %v2081 = vld [vmem:[%s2077 + $0x18] sm:$0xff]
    %v2082 = vld [vmem:[%s2077 + $0x20] sm:$0xff]
    %v2083 = vld [vmem:[%s2077 + $0x28] sm:$0xff]
    %v2084 = vld [vmem:[%s2077 + $0x30] sm:$0xff]
    %v2085 = vld [vmem:[%s2077 + $0x38] sm:$0xff]
    %v2086 = vld [vmem:[%s2077 + $0x40] sm:$0xff]
    %v2087 = vld [vmem:[%s2077 + $0x48] sm:$0xff]
    %v2088 = vld [vmem:[%s2077 + $0x50] sm:$0xff]
    %v2089 = vld [vmem:[%s2077 + $0x58] sm:$0xff]
    %v2090 = vld [vmem:[%s2077 + $0x60] sm:$0xff]
    %v2091 = vld [vmem:[%s2077 + $0x68] sm:$0xff]
    %v2092 = vld [vmem:[%s2077 + $0x70] sm:$0xff]
    %v2093 = vld [vmem:[%s2077 + $0x78] sm:$0xff]
    %2094 = vmatprep.subr.mxu0 0.0
    %2095 = vmatpush1.msra.mxu0 %v2093
    %2096 = vmatprep.subr.mxu0 0.0
    %2097 = vmatpush1.msra.mxu0 %v2092
    %2098 = vmatprep.subr.mxu0 0.0
    %2099 = vmatpush1.msra.mxu0 %v2091
    %2100 = vmatprep.subr.mxu0 0.0
    %2101 = vmatpush1.msra.mxu0 %v2090
    %2102 = vmatprep.subr.mxu0 0.0
    %2103 = vmatpush1.msra.mxu0 %v2089
    %2104 = vmatprep.subr.mxu0 0.0
    %2105 = vmatpush1.msra.mxu0 %v2088
    %2106 = vmatprep.subr.mxu0 0.0
    %2107 = vmatpush1.msra.mxu0 %v2087
    %2108 = vmatprep.subr.mxu0 0.0
    %2109 = vmatpush1.msra.mxu0 %v2086
    %2110 = vmatprep.subr.mxu0 0.0
    %2111 = vmatpush1.msra.mxu0 %v2085
    %2112 = vmatprep.subr.mxu0 0.0
    %2113 = vmatpush1.msra.mxu0 %v2084
    %2114 = vmatprep.subr.mxu0 0.0
    %2115 = vmatpush1.msra.mxu0 %v2083
    %2116 = vmatprep.subr.mxu0 0.0
    %2117 = vmatpush1.msra.mxu0 %v2082
    %2118 = vmatprep.subr.mxu0 0.0
    %2119 = vmatpush1.msra.mxu0 %v2081
    %2120 = vmatprep.subr.mxu0 0.0
    %2121 = vmatpush1.msra.mxu0 %v2080
    %2122 = vmatprep.subr.mxu0 0.0
    %2123 = vmatpush1.msra.mxu0 %v2079
    %2124 = vmatprep.subr.mxu0 0.0
    %2125 = vmatpush1.msra.mxu0 %v2078
    %2126 = vmatprep.subr.mxu0 0.0
    %2127 = vmatpush2.msra.mxu0 0.0
    %2128 = vmatprep.subr.mxu0 0.0
    %2129 = vmatpush2.msra.mxu0 0.0
    %2130 = vmatprep.subr.mxu0 0.0
    %2131 = vmatpush2.msra.mxu0 0.0
    %2132 = vmatprep.subr.mxu0 0.0
    %2133 = vmatpush2.msra.mxu0 0.0
    %2134 = vmatprep.subr.mxu0 0.0
    %2135 = vmatpush2.msra.mxu0 0.0
    %2136 = vmatprep.subr.mxu0 0.0
    %2137 = vmatpush2.msra.mxu0 0.0
    %2138 = vmatprep.subr.mxu0 0.0
    %2139 = vmatpush2.msra.mxu0 0.0
    %2140 = vmatprep.subr.mxu0 0.0
    %2141 = vmatpush2.msra.mxu0 0.0
    %2142 = vmatprep.subr.mxu0 0.0
    %2143 = vmatpush2.msra.mxu0 0.0
    %2144 = vmatprep.subr.mxu0 0.0
    %2145 = vmatpush2.msra.mxu0 0.0
    %2146 = vmatprep.subr.mxu0 0.0
    %2147 = vmatpush2.msra.mxu0 0.0
    %2148 = vmatprep.subr.mxu0 0.0
    %2149 = vmatpush2.msra.mxu0 0.0
    %2150 = vmatprep.subr.mxu0 0.0
    %2151 = vmatpush2.msra.mxu0 0.0
    %2152 = vmatprep.subr.mxu0 0.0
    %2153 = vmatpush2.msra.mxu0 0.0
    %2154 = vmatprep.subr.mxu0 0.0
    %2155 = vmatpush2.msra.mxu0 0.0
    %2156 = vmatprep.subr.mxu0 0.0
    %2157 = vmatpush2.msra.mxu0 0.0
    %2158 = vmatprep.mubr.f32.mxu0 0.0
    %2159 = vmatmul.mubr.f32.gmra.mxu0 %v2074
    %v2160 = vpop.f32.mrf.mxu0
    %v2161 = vadd.f32 0.0, %v2160
    %v2162 = vpop.f32.mrf.mxu0
    %2163 = vdwg.mxu0
    %v2164 = vadd.f32 %v1999, %v2161
    %s2165 = scalar_lea.vmem %s12, 6
    %v2166 = vld [vmem:[%s2165] sm:$0x3]
    %v2168 = vsel %vm1680, %v2166, 0
    %2170 = vmatprep.subr.mxu0 0.0
    %2171 = vmatpush1.msra.mxu0 0.0
    %2172 = vmatprep.subr.mxu0 0.0
    %2173 = vmatpush1.msra.mxu0 0.0
    %2174 = vmatprep.subr.mxu0 0.0
    %2175 = vmatpush1.msra.mxu0 0.0
    %2176 = vmatprep.subr.mxu0 0.0
    %2177 = vmatpush1.msra.mxu0 0.0
    %2178 = vmatprep.subr.mxu0 0.0
    %2179 = vmatpush1.msra.mxu0 0.0
    %2180 = vmatprep.subr.mxu0 0.0
    %2181 = vmatpush1.msra.mxu0 0.0
    %2182 = vmatprep.subr.mxu0 0.0
    %2183 = vmatpush1.msra.mxu0 0.0
    %2184 = vmatprep.subr.mxu0 0.0
    %2185 = vmatpush1.msra.mxu0 0.0
    %2186 = vmatprep.subr.mxu0 0.0
    %2187 = vmatpush1.msra.mxu0 0.0
    %2188 = vmatprep.subr.mxu0 0.0
    %2189 = vmatpush1.msra.mxu0 0.0
    %2190 = vmatprep.subr.mxu0 0.0
    %2191 = vmatpush1.msra.mxu0 0.0
    %2192 = vmatprep.subr.mxu0 0.0
    %2193 = vmatpush1.msra.mxu0 0.0
    %2194 = vmatprep.subr.mxu0 0.0
    %2195 = vmatpush1.msra.mxu0 0.0
    %2196 = vmatprep.subr.mxu0 0.0
    %2197 = vmatpush1.msra.mxu0 0.0
    %2198 = vmatprep.subr.mxu0 0.0
    %2199 = vmatpush1.msra.mxu0 %v1678
    %2200 = vmatprep.subr.mxu0 0.0
    %2201 = vmatpush1.msra.mxu0 %v1677
    %2202 = vmatprep.subr.mxu0 0.0
    %2203 = vmatpush2.msra.mxu0 0.0
    %2204 = vmatprep.subr.mxu0 0.0
    %2205 = vmatpush2.msra.mxu0 0.0
    %2206 = vmatprep.subr.mxu0 0.0
    %2207 = vmatpush2.msra.mxu0 0.0
    %2208 = vmatprep.subr.mxu0 0.0
    %2209 = vmatpush2.msra.mxu0 0.0
    %2210 = vmatprep.subr.mxu0 0.0
    %2211 = vmatpush2.msra.mxu0 0.0
    %2212 = vmatprep.subr.mxu0 0.0
    %2213 = vmatpush2.msra.mxu0 0.0
    %2214 = vmatprep.subr.mxu0 0.0
    %2215 = vmatpush2.msra.mxu0 0.0
    %2216 = vmatprep.subr.mxu0 0.0
    %2217 = vmatpush2.msra.mxu0 0.0
    %2218 = vmatprep.subr.mxu0 0.0
    %2219 = vmatpush2.msra.mxu0 0.0
    %2220 = vmatprep.subr.mxu0 0.0
    %2221 = vmatpush2.msra.mxu0 0.0
    %2222 = vmatprep.subr.mxu0 0.0
    %2223 = vmatpush2.msra.mxu0 0.0
    %2224 = vmatprep.subr.mxu0 0.0
    %2225 = vmatpush2.msra.mxu0 0.0
    %2226 = vmatprep.subr.mxu0 0.0
    %2227 = vmatpush2.msra.mxu0 0.0
    %2228 = vmatprep.subr.mxu0 0.0
    %2229 = vmatpush2.msra.mxu0 0.0
    %2230 = vmatprep.subr.mxu0 0.0
    %2231 = vmatpush2.msra.mxu0 0.0
    %2232 = vmatprep.subr.mxu0 0.0
    %2233 = vmatpush2.msra.mxu0 0.0
    %2234 = vmatprep.mubr.f32.mxu0 0.0
    %2235 = vmatmul.mubr.f32.gmra.mxu0 %v2168
    %v2236 = vpop.f32.mrf.mxu0
    %v2237 = vadd.f32 0.0, %v2236
    %v2238 = vpop.f32.mrf.mxu0
    %2239 = vdwg.mxu0
    %s2240 = scalar_lea.vmem %s13, 384
    %v2241 = vld [vmem:[%s2240] sm:$0xff]
    %v2242 = vld [vmem:[%s2240 + $0x8] sm:$0xff]
    %v2243 = vld [vmem:[%s2240 + $0x10] sm:$0xff]
    %v2244 = vld [vmem:[%s2240 + $0x18] sm:$0xff]
    %v2245 = vld [vmem:[%s2240 + $0x20] sm:$0xff]
    %v2246 = vld [vmem:[%s2240 + $0x28] sm:$0xff]
    %v2247 = vld [vmem:[%s2240 + $0x30] sm:$0xff]
    %v2248 = vld [vmem:[%s2240 + $0x38] sm:$0xff]
    %v2249 = vld [vmem:[%s2240 + $0x40] sm:$0xff]
    %v2250 = vld [vmem:[%s2240 + $0x48] sm:$0xff]
    %v2251 = vld [vmem:[%s2240 + $0x50] sm:$0xff]
    %v2252 = vld [vmem:[%s2240 + $0x58] sm:$0xff]
    %v2253 = vld [vmem:[%s2240 + $0x60] sm:$0xff]
    %v2254 = vld [vmem:[%s2240 + $0x68] sm:$0xff]
    %v2255 = vld [vmem:[%s2240 + $0x70] sm:$0xff]
    %v2256 = vld [vmem:[%s2240 + $0x78] sm:$0xff]
    %2257 = vmatprep.subr.mxu0 0.0
    %2258 = vmatpush1.msra.mxu0 %v2256
    %2259 = vmatprep.subr.mxu0 0.0
    %2260 = vmatpush1.msra.mxu0 %v2255
    %2261 = vmatprep.subr.mxu0 0.0
    %2262 = vmatpush1.msra.mxu0 %v2254
    %2263 = vmatprep.subr.mxu0 0.0
    %2264 = vmatpush1.msra.mxu0 %v2253
    %2265 = vmatprep.subr.mxu0 0.0
    %2266 = vmatpush1.msra.mxu0 %v2252
    %2267 = vmatprep.subr.mxu0 0.0
    %2268 = vmatpush1.msra.mxu0 %v2251
    %2269 = vmatprep.subr.mxu0 0.0
    %2270 = vmatpush1.msra.mxu0 %v2250
    %2271 = vmatprep.subr.mxu0 0.0
    %2272 = vmatpush1.msra.mxu0 %v2249
    %2273 = vmatprep.subr.mxu0 0.0
    %2274 = vmatpush1.msra.mxu0 %v2248
    %2275 = vmatprep.subr.mxu0 0.0
    %2276 = vmatpush1.msra.mxu0 %v2247
    %2277 = vmatprep.subr.mxu0 0.0
    %2278 = vmatpush1.msra.mxu0 %v2246
    %2279 = vmatprep.subr.mxu0 0.0
    %2280 = vmatpush1.msra.mxu0 %v2245
    %2281 = vmatprep.subr.mxu0 0.0
    %2282 = vmatpush1.msra.mxu0 %v2244
    %2283 = vmatprep.subr.mxu0 0.0
    %2284 = vmatpush1.msra.mxu0 %v2243
    %2285 = vmatprep.subr.mxu0 0.0
    %2286 = vmatpush1.msra.mxu0 %v2242
    %2287 = vmatprep.subr.mxu0 0.0
    %2288 = vmatpush1.msra.mxu0 %v2241
    %2289 = vmatprep.subr.mxu0 0.0
    %2290 = vmatpush2.msra.mxu0 0.0
    %2291 = vmatprep.subr.mxu0 0.0
    %2292 = vmatpush2.msra.mxu0 0.0
    %2293 = vmatprep.subr.mxu0 0.0
    %2294 = vmatpush2.msra.mxu0 0.0
    %2295 = vmatprep.subr.mxu0 0.0
    %2296 = vmatpush2.msra.mxu0 0.0
    %2297 = vmatprep.subr.mxu0 0.0
    %2298 = vmatpush2.msra.mxu0 0.0
    %2299 = vmatprep.subr.mxu0 0.0
    %2300 = vmatpush2.msra.mxu0 0.0
    %2301 = vmatprep.subr.mxu0 0.0
    %2302 = vmatpush2.msra.mxu0 0.0
    %2303 = vmatprep.subr.mxu0 0.0
    %2304 = vmatpush2.msra.mxu0 0.0
    %2305 = vmatprep.subr.mxu0 0.0
    %2306 = vmatpush2.msra.mxu0 0.0
    %2307 = vmatprep.subr.mxu0 0.0
    %2308 = vmatpush2.msra.mxu0 0.0
    %2309 = vmatprep.subr.mxu0 0.0
    %2310 = vmatpush2.msra.mxu0 0.0
    %2311 = vmatprep.subr.mxu0 0.0
    %2312 = vmatpush2.msra.mxu0 0.0
    %2313 = vmatprep.subr.mxu0 0.0
    %2314 = vmatpush2.msra.mxu0 0.0
    %2315 = vmatprep.subr.mxu0 0.0
    %2316 = vmatpush2.msra.mxu0 0.0
    %2317 = vmatprep.subr.mxu0 0.0
    %2318 = vmatpush2.msra.mxu0 0.0
    %2319 = vmatprep.subr.mxu0 0.0
    %2320 = vmatpush2.msra.mxu0 0.0
    %2321 = vmatprep.mubr.f32.mxu0 0.0
    %2322 = vmatmul.mubr.f32.gmra.mxu0 %v2237
    %v2323 = vpop.f32.mrf.mxu0
    %v2324 = vadd.f32 0.0, %v2323
    %v2325 = vpop.f32.mrf.mxu0
    %2326 = vdwg.mxu0
    %v2327 = vadd.f32 %v2164, %v2324
    %s2328 = scalar_lea.vmem %s12, 8
    %v2329 = vld [vmem:[%s2328] sm:$0x3]
    %v2331 = vsel %vm1680, %v2329, 0
    %2333 = vmatprep.subr.mxu0 0.0
    %2334 = vmatpush1.msra.mxu0 0.0
    %2335 = vmatprep.subr.mxu0 0.0
    %2336 = vmatpush1.msra.mxu0 0.0
    %2337 = vmatprep.subr.mxu0 0.0
    %2338 = vmatpush1.msra.mxu0 0.0
    %2339 = vmatprep.subr.mxu0 0.0
    %2340 = vmatpush1.msra.mxu0 0.0
    %2341 = vmatprep.subr.mxu0 0.0
    %2342 = vmatpush1.msra.mxu0 0.0
    %2343 = vmatprep.subr.mxu0 0.0
    %2344 = vmatpush1.msra.mxu0 0.0
    %2345 = vmatprep.subr.mxu0 0.0
    %2346 = vmatpush1.msra.mxu0 0.0
    %2347 = vmatprep.subr.mxu0 0.0
    %2348 = vmatpush1.msra.mxu0 0.0
    %2349 = vmatprep.subr.mxu0 0.0
    %2350 = vmatpush1.msra.mxu0 0.0
    %2351 = vmatprep.subr.mxu0 0.0
    %2352 = vmatpush1.msra.mxu0 0.0
    %2353 = vmatprep.subr.mxu0 0.0
    %2354 = vmatpush1.msra.mxu0 0.0
    %2355 = vmatprep.subr.mxu0 0.0
    %2356 = vmatpush1.msra.mxu0 0.0
    %2357 = vmatprep.subr.mxu0 0.0
    %2358 = vmatpush1.msra.mxu0 0.0
    %2359 = vmatprep.subr.mxu0 0.0
    %2360 = vmatpush1.msra.mxu0 0.0
    %2361 = vmatprep.subr.mxu0 0.0
    %2362 = vmatpush1.msra.mxu0 %v1678
    %2363 = vmatprep.subr.mxu0 0.0
    %2364 = vmatpush1.msra.mxu0 %v1677
    %2365 = vmatprep.subr.mxu0 0.0
    %2366 = vmatpush2.msra.mxu0 0.0
    %2367 = vmatprep.subr.mxu0 0.0
    %2368 = vmatpush2.msra.mxu0 0.0
    %2369 = vmatprep.subr.mxu0 0.0
    %2370 = vmatpush2.msra.mxu0 0.0
    %2371 = vmatprep.subr.mxu0 0.0
    %2372 = vmatpush2.msra.mxu0 0.0
    %2373 = vmatprep.subr.mxu0 0.0
    %2374 = vmatpush2.msra.mxu0 0.0
    %2375 = vmatprep.subr.mxu0 0.0
    %2376 = vmatpush2.msra.mxu0 0.0
    %2377 = vmatprep.subr.mxu0 0.0
    %2378 = vmatpush2.msra.mxu0 0.0
    %2379 = vmatprep.subr.mxu0 0.0
    %2380 = vmatpush2.msra.mxu0 0.0
    %2381 = vmatprep.subr.mxu0 0.0
    %2382 = vmatpush2.msra.mxu0 0.0
    %2383 = vmatprep.subr.mxu0 0.0
    %2384 = vmatpush2.msra.mxu0 0.0
    %2385 = vmatprep.subr.mxu0 0.0
    %2386 = vmatpush2.msra.mxu0 0.0
    %2387 = vmatprep.subr.mxu0 0.0
    %2388 = vmatpush2.msra.mxu0 0.0
    %2389 = vmatprep.subr.mxu0 0.0
    %2390 = vmatpush2.msra.mxu0 0.0
    %2391 = vmatprep.subr.mxu0 0.0
    %2392 = vmatpush2.msra.mxu0 0.0
    %2393 = vmatprep.subr.mxu0 0.0
    %2394 = vmatpush2.msra.mxu0 0.0
    %2395 = vmatprep.subr.mxu0 0.0
    %2396 = vmatpush2.msra.mxu0 0.0
    %2397 = vmatprep.mubr.f32.mxu0 0.0
    %2398 = vmatmul.mubr.f32.gmra.mxu0 %v2331
    %v2399 = vpop.f32.mrf.mxu0
    %v2400 = vadd.f32 0.0, %v2399
    %v2401 = vpop.f32.mrf.mxu0
    %2402 = vdwg.mxu0
    %s2403 = scalar_lea.vmem %s13, 512
    %v2404 = vld [vmem:[%s2403] sm:$0xff]
    %v2405 = vld [vmem:[%s2403 + $0x8] sm:$0xff]
    %v2406 = vld [vmem:[%s2403 + $0x10] sm:$0xff]
    %v2407 = vld [vmem:[%s2403 + $0x18] sm:$0xff]
    %v2408 = vld [vmem:[%s2403 + $0x20] sm:$0xff]
    %v2409 = vld [vmem:[%s2403 + $0x28] sm:$0xff]
    %v2410 = vld [vmem:[%s2403 + $0x30] sm:$0xff]
    %v2411 = vld [vmem:[%s2403 + $0x38] sm:$0xff]
    %v2412 = vld [vmem:[%s2403 + $0x40] sm:$0xff]
    %v2413 = vld [vmem:[%s2403 + $0x48] sm:$0xff]
    %v2414 = vld [vmem:[%s2403 + $0x50] sm:$0xff]
    %v2415 = vld [vmem:[%s2403 + $0x58] sm:$0xff]
    %v2416 = vld [vmem:[%s2403 + $0x60] sm:$0xff]
    %v2417 = vld [vmem:[%s2403 + $0x68] sm:$0xff]
    %v2418 = vld [vmem:[%s2403 + $0x70] sm:$0xff]
    %v2419 = vld [vmem:[%s2403 + $0x78] sm:$0xff]
    %2420 = vmatprep.subr.mxu0 0.0
    %2421 = vmatpush1.msra.mxu0 %v2419
    %2422 = vmatprep.subr.mxu0 0.0
    %2423 = vmatpush1.msra.mxu0 %v2418
    %2424 = vmatprep.subr.mxu0 0.0
    %2425 = vmatpush1.msra.mxu0 %v2417
    %2426 = vmatprep.subr.mxu0 0.0
    %2427 = vmatpush1.msra.mxu0 %v2416
    %2428 = vmatprep.subr.mxu0 0.0
    %2429 = vmatpush1.msra.mxu0 %v2415
    %2430 = vmatprep.subr.mxu0 0.0
    %2431 = vmatpush1.msra.mxu0 %v2414
    %2432 = vmatprep.subr.mxu0 0.0
    %2433 = vmatpush1.msra.mxu0 %v2413
    %2434 = vmatprep.subr.mxu0 0.0
    %2435 = vmatpush1.msra.mxu0 %v2412
    %2436 = vmatprep.subr.mxu0 0.0
    %2437 = vmatpush1.msra.mxu0 %v2411
    %2438 = vmatprep.subr.mxu0 0.0
    %2439 = vmatpush1.msra.mxu0 %v2410
    %2440 = vmatprep.subr.mxu0 0.0
    %2441 = vmatpush1.msra.mxu0 %v2409
    %2442 = vmatprep.subr.mxu0 0.0
    %2443 = vmatpush1.msra.mxu0 %v2408
    %2444 = vmatprep.subr.mxu0 0.0
    %2445 = vmatpush1.msra.mxu0 %v2407
    %2446 = vmatprep.subr.mxu0 0.0
    %2447 = vmatpush1.msra.mxu0 %v2406
    %2448 = vmatprep.subr.mxu0 0.0
    %2449 = vmatpush1.msra.mxu0 %v2405
    %2450 = vmatprep.subr.mxu0 0.0
    %2451 = vmatpush1.msra.mxu0 %v2404
    %2452 = vmatprep.subr.mxu0 0.0
    %2453 = vmatpush2.msra.mxu0 0.0
    %2454 = vmatprep.subr.mxu0 0.0
    %2455 = vmatpush2.msra.mxu0 0.0
    %2456 = vmatprep.subr.mxu0 0.0
    %2457 = vmatpush2.msra.mxu0 0.0
    %2458 = vmatprep.subr.mxu0 0.0
    %2459 = vmatpush2.msra.mxu0 0.0
    %2460 = vmatprep.subr.mxu0 0.0
    %2461 = vmatpush2.msra.mxu0 0.0
    %2462 = vmatprep.subr.mxu0 0.0
    %2463 = vmatpush2.msra.mxu0 0.0
    %2464 = vmatprep.subr.mxu0 0.0
    %2465 = vmatpush2.msra.mxu0 0.0
    %2466 = vmatprep.subr.mxu0 0.0
    %2467 = vmatpush2.msra.mxu0 0.0
    %2468 = vmatprep.subr.mxu0 0.0
    %2469 = vmatpush2.msra.mxu0 0.0
    %2470 = vmatprep.subr.mxu0 0.0
    %2471 = vmatpush2.msra.mxu0 0.0
    %2472 = vmatprep.subr.mxu0 0.0
    %2473 = vmatpush2.msra.mxu0 0.0
    %2474 = vmatprep.subr.mxu0 0.0
    %2475 = vmatpush2.msra.mxu0 0.0
    %2476 = vmatprep.subr.mxu0 0.0
    %2477 = vmatpush2.msra.mxu0 0.0
    %2478 = vmatprep.subr.mxu0 0.0
    %2479 = vmatpush2.msra.mxu0 0.0
    %2480 = vmatprep.subr.mxu0 0.0
    %2481 = vmatpush2.msra.mxu0 0.0
    %2482 = vmatprep.subr.mxu0 0.0
    %2483 = vmatpush2.msra.mxu0 0.0
    %2484 = vmatprep.mubr.f32.mxu0 0.0
    %2485 = vmatmul.mubr.f32.gmra.mxu0 %v2400
    %v2486 = vpop.f32.mrf.mxu0
    %v2487 = vadd.f32 0.0, %v2486
    %v2488 = vpop.f32.mrf.mxu0
    %2489 = vdwg.mxu0
    %v2490 = vadd.f32 %v2327, %v2487
    %s2491 = scalar_lea.vmem %s12, 10
    %v2492 = vld [vmem:[%s2491] sm:$0x3]
    %v2494 = vsel %vm1680, %v2492, 0
    %2496 = vmatprep.subr.mxu0 0.0
    %2497 = vmatpush1.msra.mxu0 0.0
    %2498 = vmatprep.subr.mxu0 0.0
    %2499 = vmatpush1.msra.mxu0 0.0
    %2500 = vmatprep.subr.mxu0 0.0
    %2501 = vmatpush1.msra.mxu0 0.0
    %2502 = vmatprep.subr.mxu0 0.0
    %2503 = vmatpush1.msra.mxu0 0.0
    %2504 = vmatprep.subr.mxu0 0.0
    %2505 = vmatpush1.msra.mxu0 0.0
    %2506 = vmatprep.subr.mxu0 0.0
    %2507 = vmatpush1.msra.mxu0 0.0
    %2508 = vmatprep.subr.mxu0 0.0
    %2509 = vmatpush1.msra.mxu0 0.0
    %2510 = vmatprep.subr.mxu0 0.0
    %2511 = vmatpush1.msra.mxu0 0.0
    %2512 = vmatprep.subr.mxu0 0.0
    %2513 = vmatpush1.msra.mxu0 0.0
    %2514 = vmatprep.subr.mxu0 0.0
    %2515 = vmatpush1.msra.mxu0 0.0
    %2516 = vmatprep.subr.mxu0 0.0
    %2517 = vmatpush1.msra.mxu0 0.0
    %2518 = vmatprep.subr.mxu0 0.0
    %2519 = vmatpush1.msra.mxu0 0.0
    %2520 = vmatprep.subr.mxu0 0.0
    %2521 = vmatpush1.msra.mxu0 0.0
    %2522 = vmatprep.subr.mxu0 0.0
    %2523 = vmatpush1.msra.mxu0 0.0
    %2524 = vmatprep.subr.mxu0 0.0
    %2525 = vmatpush1.msra.mxu0 %v1678
    %2526 = vmatprep.subr.mxu0 0.0
    %2527 = vmatpush1.msra.mxu0 %v1677
    %2528 = vmatprep.subr.mxu0 0.0
    %2529 = vmatpush2.msra.mxu0 0.0
    %2530 = vmatprep.subr.mxu0 0.0
    %2531 = vmatpush2.msra.mxu0 0.0
    %2532 = vmatprep.subr.mxu0 0.0
    %2533 = vmatpush2.msra.mxu0 0.0
    %2534 = vmatprep.subr.mxu0 0.0
    %2535 = vmatpush2.msra.mxu0 0.0
    %2536 = vmatprep.subr.mxu0 0.0
    %2537 = vmatpush2.msra.mxu0 0.0
    %2538 = vmatprep.subr.mxu0 0.0
    %2539 = vmatpush2.msra.mxu0 0.0
    %2540 = vmatprep.subr.mxu0 0.0
    %2541 = vmatpush2.msra.mxu0 0.0
    %2542 = vmatprep.subr.mxu0 0.0
    %2543 = vmatpush2.msra.mxu0 0.0
    %2544 = vmatprep.subr.mxu0 0.0
    %2545 = vmatpush2.msra.mxu0 0.0
    %2546 = vmatprep.subr.mxu0 0.0
    %2547 = vmatpush2.msra.mxu0 0.0
    %2548 = vmatprep.subr.mxu0 0.0
    %2549 = vmatpush2.msra.mxu0 0.0
    %2550 = vmatprep.subr.mxu0 0.0
    %2551 = vmatpush2.msra.mxu0 0.0
    %2552 = vmatprep.subr.mxu0 0.0
    %2553 = vmatpush2.msra.mxu0 0.0
    %2554 = vmatprep.subr.mxu0 0.0
    %2555 = vmatpush2.msra.mxu0 0.0
    %2556 = vmatprep.subr.mxu0 0.0
    %2557 = vmatpush2.msra.mxu0 0.0
    %2558 = vmatprep.subr.mxu0 0.0
    %2559 = vmatpush2.msra.mxu0 0.0
    %2560 = vmatprep.mubr.f32.mxu0 0.0
    %2561 = vmatmul.mubr.f32.gmra.mxu0 %v2494
    %v2562 = vpop.f32.mrf.mxu0
    %v2563 = vadd.f32 0.0, %v2562
    %v2564 = vpop.f32.mrf.mxu0
    %2565 = vdwg.mxu0
    %s2566 = scalar_lea.vmem %s13, 640
    %v2567 = vld [vmem:[%s2566] sm:$0xff]
    %v2568 = vld [vmem:[%s2566 + $0x8] sm:$0xff]
    %v2569 = vld [vmem:[%s2566 + $0x10] sm:$0xff]
    %v2570 = vld [vmem:[%s2566 + $0x18] sm:$0xff]
    %v2571 = vld [vmem:[%s2566 + $0x20] sm:$0xff]
    %v2572 = vld [vmem:[%s2566 + $0x28] sm:$0xff]
    %v2573 = vld [vmem:[%s2566 + $0x30] sm:$0xff]
    %v2574 = vld [vmem:[%s2566 + $0x38] sm:$0xff]
    %v2575 = vld [vmem:[%s2566 + $0x40] sm:$0xff]
    %v2576 = vld [vmem:[%s2566 + $0x48] sm:$0xff]
    %v2577 = vld [vmem:[%s2566 + $0x50] sm:$0xff]
    %v2578 = vld [vmem:[%s2566 + $0x58] sm:$0xff]
    %v2579 = vld [vmem:[%s2566 + $0x60] sm:$0xff]
    %v2580 = vld [vmem:[%s2566 + $0x68] sm:$0xff]
    %v2581 = vld [vmem:[%s2566 + $0x70] sm:$0xff]
    %v2582 = vld [vmem:[%s2566 + $0x78] sm:$0xff]
    %2583 = vmatprep.subr.mxu0 0.0
    %2584 = vmatpush1.msra.mxu0 %v2582
    %2585 = vmatprep.subr.mxu0 0.0
    %2586 = vmatpush1.msra.mxu0 %v2581
    %2587 = vmatprep.subr.mxu0 0.0
    %2588 = vmatpush1.msra.mxu0 %v2580
    %2589 = vmatprep.subr.mxu0 0.0
    %2590 = vmatpush1.msra.mxu0 %v2579
    %2591 = vmatprep.subr.mxu0 0.0
    %2592 = vmatpush1.msra.mxu0 %v2578
    %2593 = vmatprep.subr.mxu0 0.0
    %2594 = vmatpush1.msra.mxu0 %v2577
    %2595 = vmatprep.subr.mxu0 0.0
    %2596 = vmatpush1.msra.mxu0 %v2576
    %2597 = vmatprep.subr.mxu0 0.0
    %2598 = vmatpush1.msra.mxu0 %v2575
    %2599 = vmatprep.subr.mxu0 0.0
    %2600 = vmatpush1.msra.mxu0 %v2574
    %2601 = vmatprep.subr.mxu0 0.0
    %2602 = vmatpush1.msra.mxu0 %v2573
    %2603 = vmatprep.subr.mxu0 0.0
    %2604 = vmatpush1.msra.mxu0 %v2572
    %2605 = vmatprep.subr.mxu0 0.0
    %2606 = vmatpush1.msra.mxu0 %v2571
    %2607 = vmatprep.subr.mxu0 0.0
    %2608 = vmatpush1.msra.mxu0 %v2570
    %2609 = vmatprep.subr.mxu0 0.0
    %2610 = vmatpush1.msra.mxu0 %v2569
    %2611 = vmatprep.subr.mxu0 0.0
    %2612 = vmatpush1.msra.mxu0 %v2568
    %2613 = vmatprep.subr.mxu0 0.0
    %2614 = vmatpush1.msra.mxu0 %v2567
    %2615 = vmatprep.subr.mxu0 0.0
    %2616 = vmatpush2.msra.mxu0 0.0
    %2617 = vmatprep.subr.mxu0 0.0
    %2618 = vmatpush2.msra.mxu0 0.0
    %2619 = vmatprep.subr.mxu0 0.0
    %2620 = vmatpush2.msra.mxu0 0.0
    %2621 = vmatprep.subr.mxu0 0.0
    %2622 = vmatpush2.msra.mxu0 0.0
    %2623 = vmatprep.subr.mxu0 0.0
    %2624 = vmatpush2.msra.mxu0 0.0
    %2625 = vmatprep.subr.mxu0 0.0
    %2626 = vmatpush2.msra.mxu0 0.0
    %2627 = vmatprep.subr.mxu0 0.0
    %2628 = vmatpush2.msra.mxu0 0.0
    %2629 = vmatprep.subr.mxu0 0.0
    %2630 = vmatpush2.msra.mxu0 0.0
    %2631 = vmatprep.subr.mxu0 0.0
    %2632 = vmatpush2.msra.mxu0 0.0
    %2633 = vmatprep.subr.mxu0 0.0
    %2634 = vmatpush2.msra.mxu0 0.0
    %2635 = vmatprep.subr.mxu0 0.0
    %2636 = vmatpush2.msra.mxu0 0.0
    %2637 = vmatprep.subr.mxu0 0.0
    %2638 = vmatpush2.msra.mxu0 0.0
    %2639 = vmatprep.subr.mxu0 0.0
    %2640 = vmatpush2.msra.mxu0 0.0
    %2641 = vmatprep.subr.mxu0 0.0
    %2642 = vmatpush2.msra.mxu0 0.0
    %2643 = vmatprep.subr.mxu0 0.0
    %2644 = vmatpush2.msra.mxu0 0.0
    %2645 = vmatprep.subr.mxu0 0.0
    %2646 = vmatpush2.msra.mxu0 0.0
    %2647 = vmatprep.mubr.f32.mxu0 0.0
    %2648 = vmatmul.mubr.f32.gmra.mxu0 %v2563
    %v2649 = vpop.f32.mrf.mxu0
    %v2650 = vadd.f32 0.0, %v2649
    %v2651 = vpop.f32.mrf.mxu0
    %2652 = vdwg.mxu0
    %v2653 = vadd.f32 %v2490, %v2650
    %s2654 = scalar_lea.vmem %s12, 12
    %v2655 = vld [vmem:[%s2654] sm:$0x3]
    %v2657 = vsel %vm1680, %v2655, 0
    %2659 = vmatprep.subr.mxu0 0.0
    %2660 = vmatpush1.msra.mxu0 0.0
    %2661 = vmatprep.subr.mxu0 0.0
    %2662 = vmatpush1.msra.mxu0 0.0
    %2663 = vmatprep.subr.mxu0 0.0
    %2664 = vmatpush1.msra.mxu0 0.0
    %2665 = vmatprep.subr.mxu0 0.0
    %2666 = vmatpush1.msra.mxu0 0.0
    %2667 = vmatprep.subr.mxu0 0.0
    %2668 = vmatpush1.msra.mxu0 0.0
    %2669 = vmatprep.subr.mxu0 0.0
    %2670 = vmatpush1.msra.mxu0 0.0
    %2671 = vmatprep.subr.mxu0 0.0
    %2672 = vmatpush1.msra.mxu0 0.0
    %2673 = vmatprep.subr.mxu0 0.0
    %2674 = vmatpush1.msra.mxu0 0.0
    %2675 = vmatprep.subr.mxu0 0.0
    %2676 = vmatpush1.msra.mxu0 0.0
    %2677 = vmatprep.subr.mxu0 0.0
    %2678 = vmatpush1.msra.mxu0 0.0
    %2679 = vmatprep.subr.mxu0 0.0
    %2680 = vmatpush1.msra.mxu0 0.0
    %2681 = vmatprep.subr.mxu0 0.0
    %2682 = vmatpush1.msra.mxu0 0.0
    %2683 = vmatprep.subr.mxu0 0.0
    %2684 = vmatpush1.msra.mxu0 0.0
    %2685 = vmatprep.subr.mxu0 0.0
    %2686 = vmatpush1.msra.mxu0 0.0
    %2687 = vmatprep.subr.mxu0 0.0
    %2688 = vmatpush1.msra.mxu0 %v1678
    %2689 = vmatprep.subr.mxu0 0.0
    %2690 = vmatpush1.msra.mxu0 %v1677
    %2691 = vmatprep.subr.mxu0 0.0
    %2692 = vmatpush2.msra.mxu0 0.0
    %2693 = vmatprep.subr.mxu0 0.0
    %2694 = vmatpush2.msra.mxu0 0.0
    %2695 = vmatprep.subr.mxu0 0.0
    %2696 = vmatpush2.msra.mxu0 0.0
    %2697 = vmatprep.subr.mxu0 0.0
    %2698 = vmatpush2.msra.mxu0 0.0
    %2699 = vmatprep.subr.mxu0 0.0
    %2700 = vmatpush2.msra.mxu0 0.0
    %2701 = vmatprep.subr.mxu0 0.0
    %2702 = vmatpush2.msra.mxu0 0.0
    %2703 = vmatprep.subr.mxu0 0.0
    %2704 = vmatpush2.msra.mxu0 0.0
    %2705 = vmatprep.subr.mxu0 0.0
    %2706 = vmatpush2.msra.mxu0 0.0
    %2707 = vmatprep.subr.mxu0 0.0
    %2708 = vmatpush2.msra.mxu0 0.0
    %2709 = vmatprep.subr.mxu0 0.0
    %2710 = vmatpush2.msra.mxu0 0.0
    %2711 = vmatprep.subr.mxu0 0.0
    %2712 = vmatpush2.msra.mxu0 0.0
    %2713 = vmatprep.subr.mxu0 0.0
    %2714 = vmatpush2.msra.mxu0 0.0
    %2715 = vmatprep.subr.mxu0 0.0
    %2716 = vmatpush2.msra.mxu0 0.0
    %2717 = vmatprep.subr.mxu0 0.0
    %2718 = vmatpush2.msra.mxu0 0.0
    %2719 = vmatprep.subr.mxu0 0.0
    %2720 = vmatpush2.msra.mxu0 0.0
    %2721 = vmatprep.subr.mxu0 0.0
    %2722 = vmatpush2.msra.mxu0 0.0
    %2723 = vmatprep.mubr.f32.mxu0 0.0
    %2724 = vmatmul.mubr.f32.gmra.mxu0 %v2657
    %v2725 = vpop.f32.mrf.mxu0
    %v2726 = vadd.f32 0.0, %v2725
    %v2727 = vpop.f32.mrf.mxu0
    %2728 = vdwg.mxu0
    %s2729 = scalar_lea.vmem %s13, 768
    %v2730 = vld [vmem:[%s2729] sm:$0xff]
    %v2731 = vld [vmem:[%s2729 + $0x8] sm:$0xff]
    %v2732 = vld [vmem:[%s2729 + $0x10] sm:$0xff]
    %v2733 = vld [vmem:[%s2729 + $0x18] sm:$0xff]
    %v2734 = vld [vmem:[%s2729 + $0x20] sm:$0xff]
    %v2735 = vld [vmem:[%s2729 + $0x28] sm:$0xff]
    %v2736 = vld [vmem:[%s2729 + $0x30] sm:$0xff]
    %v2737 = vld [vmem:[%s2729 + $0x38] sm:$0xff]
    %v2738 = vld [vmem:[%s2729 + $0x40] sm:$0xff]
    %v2739 = vld [vmem:[%s2729 + $0x48] sm:$0xff]
    %v2740 = vld [vmem:[%s2729 + $0x50] sm:$0xff]
    %v2741 = vld [vmem:[%s2729 + $0x58] sm:$0xff]
    %v2742 = vld [vmem:[%s2729 + $0x60] sm:$0xff]
    %v2743 = vld [vmem:[%s2729 + $0x68] sm:$0xff]
    %v2744 = vld [vmem:[%s2729 + $0x70] sm:$0xff]
    %v2745 = vld [vmem:[%s2729 + $0x78] sm:$0xff]
    %2746 = vmatprep.subr.mxu0 0.0
    %2747 = vmatpush1.msra.mxu0 %v2745
    %2748 = vmatprep.subr.mxu0 0.0
    %2749 = vmatpush1.msra.mxu0 %v2744
    %2750 = vmatprep.subr.mxu0 0.0
    %2751 = vmatpush1.msra.mxu0 %v2743
    %2752 = vmatprep.subr.mxu0 0.0
    %2753 = vmatpush1.msra.mxu0 %v2742
    %2754 = vmatprep.subr.mxu0 0.0
    %2755 = vmatpush1.msra.mxu0 %v2741
    %2756 = vmatprep.subr.mxu0 0.0
    %2757 = vmatpush1.msra.mxu0 %v2740
    %2758 = vmatprep.subr.mxu0 0.0
    %2759 = vmatpush1.msra.mxu0 %v2739
    %2760 = vmatprep.subr.mxu0 0.0
    %2761 = vmatpush1.msra.mxu0 %v2738
    %2762 = vmatprep.subr.mxu0 0.0
    %2763 = vmatpush1.msra.mxu0 %v2737
    %2764 = vmatprep.subr.mxu0 0.0
    %2765 = vmatpush1.msra.mxu0 %v2736
    %2766 = vmatprep.subr.mxu0 0.0
    %2767 = vmatpush1.msra.mxu0 %v2735
    %2768 = vmatprep.subr.mxu0 0.0
    %2769 = vmatpush1.msra.mxu0 %v2734
    %2770 = vmatprep.subr.mxu0 0.0
    %2771 = vmatpush1.msra.mxu0 %v2733
    %2772 = vmatprep.subr.mxu0 0.0
    %2773 = vmatpush1.msra.mxu0 %v2732
    %2774 = vmatprep.subr.mxu0 0.0
    %2775 = vmatpush1.msra.mxu0 %v2731
    %2776 = vmatprep.subr.mxu0 0.0
    %2777 = vmatpush1.msra.mxu0 %v2730
    %2778 = vmatprep.subr.mxu0 0.0
    %2779 = vmatpush2.msra.mxu0 0.0
    %2780 = vmatprep.subr.mxu0 0.0
    %2781 = vmatpush2.msra.mxu0 0.0
    %2782 = vmatprep.subr.mxu0 0.0
    %2783 = vmatpush2.msra.mxu0 0.0
    %2784 = vmatprep.subr.mxu0 0.0
    %2785 = vmatpush2.msra.mxu0 0.0
    %2786 = vmatprep.subr.mxu0 0.0
    %2787 = vmatpush2.msra.mxu0 0.0
    %2788 = vmatprep.subr.mxu0 0.0
    %2789 = vmatpush2.msra.mxu0 0.0
    %2790 = vmatprep.subr.mxu0 0.0
    %2791 = vmatpush2.msra.mxu0 0.0
    %2792 = vmatprep.subr.mxu0 0.0
    %2793 = vmatpush2.msra.mxu0 0.0
    %2794 = vmatprep.subr.mxu0 0.0
    %2795 = vmatpush2.msra.mxu0 0.0
    %2796 = vmatprep.subr.mxu0 0.0
    %2797 = vmatpush2.msra.mxu0 0.0
    %2798 = vmatprep.subr.mxu0 0.0
    %2799 = vmatpush2.msra.mxu0 0.0
    %2800 = vmatprep.subr.mxu0 0.0
    %2801 = vmatpush2.msra.mxu0 0.0
    %2802 = vmatprep.subr.mxu0 0.0
    %2803 = vmatpush2.msra.mxu0 0.0
    %2804 = vmatprep.subr.mxu0 0.0
    %2805 = vmatpush2.msra.mxu0 0.0
    %2806 = vmatprep.subr.mxu0 0.0
    %2807 = vmatpush2.msra.mxu0 0.0
    %2808 = vmatprep.subr.mxu0 0.0
    %2809 = vmatpush2.msra.mxu0 0.0
    %2810 = vmatprep.mubr.f32.mxu0 0.0
    %2811 = vmatmul.mubr.f32.gmra.mxu0 %v2726
    %v2812 = vpop.f32.mrf.mxu0
    %v2813 = vadd.f32 0.0, %v2812
    %v2814 = vpop.f32.mrf.mxu0
    %2815 = vdwg.mxu0
    %v2816 = vadd.f32 %v2653, %v2813
    %s2817 = scalar_lea.vmem %s12, 14
    %v2818 = vld [vmem:[%s2817] sm:$0x3]
    %v2820 = vsel %vm1680, %v2818, 0
    %2822 = vmatprep.subr.mxu0 0.0
    %2823 = vmatpush1.msra.mxu0 0.0
    %2824 = vmatprep.subr.mxu0 0.0
    %2825 = vmatpush1.msra.mxu0 0.0
    %2826 = vmatprep.subr.mxu0 0.0
    %2827 = vmatpush1.msra.mxu0 0.0
    %2828 = vmatprep.subr.mxu0 0.0
    %2829 = vmatpush1.msra.mxu0 0.0
    %2830 = vmatprep.subr.mxu0 0.0
    %2831 = vmatpush1.msra.mxu0 0.0
    %2832 = vmatprep.subr.mxu0 0.0
    %2833 = vmatpush1.msra.mxu0 0.0
    %2834 = vmatprep.subr.mxu0 0.0
    %2835 = vmatpush1.msra.mxu0 0.0
    %2836 = vmatprep.subr.mxu0 0.0
    %2837 = vmatpush1.msra.mxu0 0.0
    %2838 = vmatprep.subr.mxu0 0.0
    %2839 = vmatpush1.msra.mxu0 0.0
    %2840 = vmatprep.subr.mxu0 0.0
    %2841 = vmatpush1.msra.mxu0 0.0
    %2842 = vmatprep.subr.mxu0 0.0
    %2843 = vmatpush1.msra.mxu0 0.0
    %2844 = vmatprep.subr.mxu0 0.0
    %2845 = vmatpush1.msra.mxu0 0.0
    %2846 = vmatprep.subr.mxu0 0.0
    %2847 = vmatpush1.msra.mxu0 0.0
    %2848 = vmatprep.subr.mxu0 0.0
    %2849 = vmatpush1.msra.mxu0 0.0
    %2850 = vmatprep.subr.mxu0 0.0
    %2851 = vmatpush1.msra.mxu0 %v1678
    %2852 = vmatprep.subr.mxu0 0.0
    %2853 = vmatpush1.msra.mxu0 %v1677
    %2854 = vmatprep.subr.mxu0 0.0
    %2855 = vmatpush2.msra.mxu0 0.0
    %2856 = vmatprep.subr.mxu0 0.0
    %2857 = vmatpush2.msra.mxu0 0.0
    %2858 = vmatprep.subr.mxu0 0.0
    %2859 = vmatpush2.msra.mxu0 0.0
    %2860 = vmatprep.subr.mxu0 0.0
    %2861 = vmatpush2.msra.mxu0 0.0
    %2862 = vmatprep.subr.mxu0 0.0
    %2863 = vmatpush2.msra.mxu0 0.0
    %2864 = vmatprep.subr.mxu0 0.0
    %2865 = vmatpush2.msra.mxu0 0.0
    %2866 = vmatprep.subr.mxu0 0.0
    %2867 = vmatpush2.msra.mxu0 0.0
    %2868 = vmatprep.subr.mxu0 0.0
    %2869 = vmatpush2.msra.mxu0 0.0
    %2870 = vmatprep.subr.mxu0 0.0
    %2871 = vmatpush2.msra.mxu0 0.0
    %2872 = vmatprep.subr.mxu0 0.0
    %2873 = vmatpush2.msra.mxu0 0.0
    %2874 = vmatprep.subr.mxu0 0.0
    %2875 = vmatpush2.msra.mxu0 0.0
    %2876 = vmatprep.subr.mxu0 0.0
    %2877 = vmatpush2.msra.mxu0 0.0
    %2878 = vmatprep.subr.mxu0 0.0
    %2879 = vmatpush2.msra.mxu0 0.0
    %2880 = vmatprep.subr.mxu0 0.0
    %2881 = vmatpush2.msra.mxu0 0.0
    %2882 = vmatprep.subr.mxu0 0.0
    %2883 = vmatpush2.msra.mxu0 0.0
    %2884 = vmatprep.subr.mxu0 0.0
    %2885 = vmatpush2.msra.mxu0 0.0
    %2886 = vmatprep.mubr.f32.mxu0 0.0
    %2887 = vmatmul.mubr.f32.gmra.mxu0 %v2820
    %v2888 = vpop.f32.mrf.mxu0
    %v2889 = vadd.f32 0.0, %v2888
    %v2890 = vpop.f32.mrf.mxu0
    %2891 = vdwg.mxu0
    %s2892 = scalar_lea.vmem %s13, 896
    %v2893 = vld [vmem:[%s2892] sm:$0xff]
    %v2894 = vld [vmem:[%s2892 + $0x8] sm:$0xff]
    %v2895 = vld [vmem:[%s2892 + $0x10] sm:$0xff]
    %v2896 = vld [vmem:[%s2892 + $0x18] sm:$0xff]
    %v2897 = vld [vmem:[%s2892 + $0x20] sm:$0xff]
    %v2898 = vld [vmem:[%s2892 + $0x28] sm:$0xff]
    %v2899 = vld [vmem:[%s2892 + $0x30] sm:$0xff]
    %v2900 = vld [vmem:[%s2892 + $0x38] sm:$0xff]
    %v2901 = vld [vmem:[%s2892 + $0x40] sm:$0xff]
    %v2902 = vld [vmem:[%s2892 + $0x48] sm:$0xff]
    %v2903 = vld [vmem:[%s2892 + $0x50] sm:$0xff]
    %v2904 = vld [vmem:[%s2892 + $0x58] sm:$0xff]
    %v2905 = vld [vmem:[%s2892 + $0x60] sm:$0xff]
    %v2906 = vld [vmem:[%s2892 + $0x68] sm:$0xff]
    %v2907 = vld [vmem:[%s2892 + $0x70] sm:$0xff]
    %v2908 = vld [vmem:[%s2892 + $0x78] sm:$0xff]
    %2909 = vmatprep.subr.mxu0 0.0
    %2910 = vmatpush1.msra.mxu0 %v2908
    %2911 = vmatprep.subr.mxu0 0.0
    %2912 = vmatpush1.msra.mxu0 %v2907
    %2913 = vmatprep.subr.mxu0 0.0
    %2914 = vmatpush1.msra.mxu0 %v2906
    %2915 = vmatprep.subr.mxu0 0.0
    %2916 = vmatpush1.msra.mxu0 %v2905
    %2917 = vmatprep.subr.mxu0 0.0
    %2918 = vmatpush1.msra.mxu0 %v2904
    %2919 = vmatprep.subr.mxu0 0.0
    %2920 = vmatpush1.msra.mxu0 %v2903
    %2921 = vmatprep.subr.mxu0 0.0
    %2922 = vmatpush1.msra.mxu0 %v2902
    %2923 = vmatprep.subr.mxu0 0.0
    %2924 = vmatpush1.msra.mxu0 %v2901
    %2925 = vmatprep.subr.mxu0 0.0
    %2926 = vmatpush1.msra.mxu0 %v2900
    %2927 = vmatprep.subr.mxu0 0.0
    %2928 = vmatpush1.msra.mxu0 %v2899
    %2929 = vmatprep.subr.mxu0 0.0
    %2930 = vmatpush1.msra.mxu0 %v2898
    %2931 = vmatprep.subr.mxu0 0.0
    %2932 = vmatpush1.msra.mxu0 %v2897
    %2933 = vmatprep.subr.mxu0 0.0
    %2934 = vmatpush1.msra.mxu0 %v2896
    %2935 = vmatprep.subr.mxu0 0.0
    %2936 = vmatpush1.msra.mxu0 %v2895
    %2937 = vmatprep.subr.mxu0 0.0
    %2938 = vmatpush1.msra.mxu0 %v2894
    %2939 = vmatprep.subr.mxu0 0.0
    %2940 = vmatpush1.msra.mxu0 %v2893
    %2941 = vmatprep.subr.mxu0 0.0
    %2942 = vmatpush2.msra.mxu0 0.0
    %2943 = vmatprep.subr.mxu0 0.0
    %2944 = vmatpush2.msra.mxu0 0.0
    %2945 = vmatprep.subr.mxu0 0.0
    %2946 = vmatpush2.msra.mxu0 0.0
    %2947 = vmatprep.subr.mxu0 0.0
    %2948 = vmatpush2.msra.mxu0 0.0
    %2949 = vmatprep.subr.mxu0 0.0
    %2950 = vmatpush2.msra.mxu0 0.0
    %2951 = vmatprep.subr.mxu0 0.0
    %2952 = vmatpush2.msra.mxu0 0.0
    %2953 = vmatprep.subr.mxu0 0.0
    %2954 = vmatpush2.msra.mxu0 0.0
    %2955 = vmatprep.subr.mxu0 0.0
    %2956 = vmatpush2.msra.mxu0 0.0
    %2957 = vmatprep.subr.mxu0 0.0
    %2958 = vmatpush2.msra.mxu0 0.0
    %2959 = vmatprep.subr.mxu0 0.0
    %2960 = vmatpush2.msra.mxu0 0.0
    %2961 = vmatprep.subr.mxu0 0.0
    %2962 = vmatpush2.msra.mxu0 0.0
    %2963 = vmatprep.subr.mxu0 0.0
    %2964 = vmatpush2.msra.mxu0 0.0
    %2965 = vmatprep.subr.mxu0 0.0
    %2966 = vmatpush2.msra.mxu0 0.0
    %2967 = vmatprep.subr.mxu0 0.0
    %2968 = vmatpush2.msra.mxu0 0.0
    %2969 = vmatprep.subr.mxu0 0.0
    %2970 = vmatpush2.msra.mxu0 0.0
    %2971 = vmatprep.subr.mxu0 0.0
    %2972 = vmatpush2.msra.mxu0 0.0
    %2973 = vmatprep.mubr.f32.mxu0 0.0
    %2974 = vmatmul.mubr.f32.gmra.mxu0 %v2889
    %v2975 = vpop.f32.mrf.mxu0
    %v2976 = vadd.f32 0.0, %v2975
    %v2977 = vpop.f32.mrf.mxu0
    %2978 = vdwg.mxu0
    %v2979 = vadd.f32 %v2816, %v2976
    %v2980 = vld [vmem:[%s14] sm:$0x1]
    %v2982 = vlaneseq
    %v2983 = vshrl.u32 %v2982, 7
    %v2984 = vsub.s32 0, %v2983
    %v2985 = vrot.slane %v2980, %v2984
    %v2987 = vadd.f32 %v2979, %v2985
    %v2988 = vmax.f32 %v2987, 0.0
    %v2989 = vld [vmem:[%s15] sm:$0xff]
    %v2990 = vld [vmem:[%s15 + $0x8] sm:$0xff]
    %v2991 = vld [vmem:[%s15 + $0x10] sm:$0xff]
    %v2992 = vld [vmem:[%s15 + $0x18] sm:$0xff]
    %v2993 = vld [vmem:[%s16] sm:$0x1]
    %v2995 = vlaneseq
    %v2996 = vshrl.u32 %v2995, 7
    %v2997 = vsub.s32 0, %v2996
    %v2998 = vrot.slane %v2993, %v2997
    %v3001 = vsel %vm1034, %v2988, 0
    %3003 = vmatprep.subr.mxu0 0.0
    %3004 = vmatpush1.msra.mxu0 0.0
    %3005 = vmatprep.subr.mxu0 0.0
    %3006 = vmatpush1.msra.mxu0 0.0
    %3007 = vmatprep.subr.mxu0 0.0
    %3008 = vmatpush1.msra.mxu0 0.0
    %3009 = vmatprep.subr.mxu0 0.0
    %3010 = vmatpush1.msra.mxu0 0.0
    %3011 = vmatprep.subr.mxu0 0.0
    %3012 = vmatpush1.msra.mxu0 0.0
    %3013 = vmatprep.subr.mxu0 0.0
    %3014 = vmatpush1.msra.mxu0 0.0
    %3015 = vmatprep.subr.mxu0 0.0
    %3016 = vmatpush1.msra.mxu0 0.0
    %3017 = vmatprep.subr.mxu0 0.0
    %3018 = vmatpush1.msra.mxu0 0.0
    %3019 = vmatprep.subr.mxu0 0.0
    %3020 = vmatpush1.msra.mxu0 0.0
    %3021 = vmatprep.subr.mxu0 0.0
    %3022 = vmatpush1.msra.mxu0 0.0
    %3023 = vmatprep.subr.mxu0 0.0
    %3024 = vmatpush1.msra.mxu0 0.0
    %3025 = vmatprep.subr.mxu0 0.0
    %3026 = vmatpush1.msra.mxu0 0.0
    %3027 = vmatprep.subr.mxu0 0.0
    %3028 = vmatpush1.msra.mxu0 %v2992
    %3029 = vmatprep.subr.mxu0 0.0
    %3030 = vmatpush1.msra.mxu0 %v2991
    %3031 = vmatprep.subr.mxu0 0.0
    %3032 = vmatpush1.msra.mxu0 %v2990
    %3033 = vmatprep.subr.mxu0 0.0
    %3034 = vmatpush1.msra.mxu0 %v2989
    %3035 = vmatprep.subr.mxu0 0.0
    %3036 = vmatpush2.msra.mxu0 0.0
    %3037 = vmatprep.subr.mxu0 0.0
    %3038 = vmatpush2.msra.mxu0 0.0
    %3039 = vmatprep.subr.mxu0 0.0
    %3040 = vmatpush2.msra.mxu0 0.0
    %3041 = vmatprep.subr.mxu0 0.0
    %3042 = vmatpush2.msra.mxu0 0.0
    %3043 = vmatprep.subr.mxu0 0.0
    %3044 = vmatpush2.msra.mxu0 0.0
    %3045 = vmatprep.subr.mxu0 0.0
    %3046 = vmatpush2.msra.mxu0 0.0
    %3047 = vmatprep.subr.mxu0 0.0
    %3048 = vmatpush2.msra.mxu0 0.0
    %3049 = vmatprep.subr.mxu0 0.0
    %3050 = vmatpush2.msra.mxu0 0.0
    %3051 = vmatprep.subr.mxu0 0.0
    %3052 = vmatpush2.msra.mxu0 0.0
    %3053 = vmatprep.subr.mxu0 0.0
    %3054 = vmatpush2.msra.mxu0 0.0
    %3055 = vmatprep.subr.mxu0 0.0
    %3056 = vmatpush2.msra.mxu0 0.0
    %3057 = vmatprep.subr.mxu0 0.0
    %3058 = vmatpush2.msra.mxu0 0.0
    %3059 = vmatprep.subr.mxu0 0.0
    %3060 = vmatpush2.msra.mxu0 0.0
    %3061 = vmatprep.subr.mxu0 0.0
    %3062 = vmatpush2.msra.mxu0 0.0
    %3063 = vmatprep.subr.mxu0 0.0
    %3064 = vmatpush2.msra.mxu0 0.0
    %3065 = vmatprep.subr.mxu0 0.0
    %3066 = vmatpush2.msra.mxu0 0.0
    %3067 = vmatprep.mubr.f32.mxu0 0.0
    %3068 = vmatmul.mubr.f32.gmra.mxu0 %v3001
    %v3069 = vpop.f32.mrf.mxu0
    %v3070 = vadd.f32 %v2998, %v3069
    %v3071 = vpop.f32.mrf.mxu0
    %3072 = vdwg.mxu0
    %vm3073 = vcmask 74752
    %3074 = vst.msk [vmem:[#allocation2] sm:$0x3] %vm3073, %v3070
    // Predicated region
    $region70: #{forward.1} parent=1 // pred_check
      _
    $region71: #{forward.1} parent=1 // pred_check_branch
      %3076 = sbr.rel (0) target = $region73
    $region72: #{forward.1} parent=1 // pred_region
      %s3078 = ssub.s32 32, 32
      %3079 = vsyncadd [#allocation3], %s3078
      %s3081 = sshll.u32 [#allocation2], 4
      %s3082 = int_to_ptr.vmem [resolvable:$true] %s3081
      %3084 = dma.vmem_to_hbm [thread:$0]  %s3082, 32, %s17, [#allocation3]
    $region73: #{forward.1} parent=1 // pred_fallthru
      _
    // Predicated region
    $region74: #{forward.1} parent=1 // pred_check
      _
    $region75: #{forward.1} parent=1 // pred_check_branch
      %3086 = sbr.rel (0) target = $region77
    $region76: #{forward.1} parent=1 // pred_region
      %3087 = dma.done [#allocation3], 32
    $region77: #{forward.1} parent=1 // pred_fallthru
      _
    %3088 = vsyncpa [#allocation3], 1

</llo_original>
